<compile_context>
chip_gen: v6e
topology: v6e:2x2x1
jax: 0.10.0
libtpu: 0.0.40
codegen_flags: <defaults>
</compile_context>

<pallas_src>
import functools

import jax
import jax.numpy as jnp
import numpy as np
from jax import lax
from jax.experimental import pallas as pl
from jax.experimental.pallas import tpu as pltpu


def _round_up(x, m):
    return (x + m - 1) // m * m


def _cdiv(a, b):
    return (a + b - 1) // b


# ----------------------------- Pallas kernel ------------------------------ #

def _postnet_fused_kernel(*refs, L, K, TT, H, T_true, P, act_dtype):
    """Fused L-layer conv1d(K)+BN(+tanh) stack for one (batch, T-tile) block.

    refs layout:
      [0]                x_hbm   (B, T_padded+2H, P[0])   raw HBM ref (pl.ANY)
      [1     .. L]       w_l     (K, P[l], P[l+1])        resident VMEM weights
      [1+L   .. 2L]      sh_l    (1, P[l+1])  f32         resident folded shifts
      [1+2L]             o_ref   (TT, P[L])   f32         output block
      [2+2L .. 5+2L]     xwin / buf_a / buf_b / dma_sem   scratch
    """
    x_hbm = refs[0]
    w_refs = refs[1:1 + L]
    sh_refs = refs[1 + L:1 + 2 * L]
    o_ref = refs[1 + 2 * L]
    xwin, buf_a, buf_b, dma_sem = refs[2 + 2 * L:6 + 2 * L]

    pad = (K - 1) // 2
    T_win = TT + 2 * H
    b = pl.program_id(0)
    t = pl.program_id(1)
    t_off = pl.multiple_of(t * TT, 8)

    # DMA this tile's haloed input window straight from HBM (no wrapper-side
    # overlapping-window materialization / extra HBM pass).
    cp = pltpu.make_async_copy(x_hbm.at[b, pl.ds(t_off, T_win), :], xwin, dma_sem)
    cp.start()
    cp.wait()

    # Scalar predicate: does any intermediate-layer row of this tile fall
    # outside the true sequence [0, T)?  Interior tiles skip masking entirely.
    needs_mask = jnp.logical_or(t_off + pad - H < 0,
                                t_off + TT + H - pad > T_true)

    # Row-index column, hoisted out of the layer loop (tiny: (rows, 1) int32).
    max_out = T_win - (K - 1)
    rows0 = lax.broadcasted_iota(jnp.int32, (max_out, 1), 0)

    def _cols(ref, p):  # channel slice (full-width ':' in the common case)
        return slice(None) if p == ref.shape[-1] else pl.ds(0, p)

    bufs = (buf_a, buf_b)
    src = xwin
    cur_len = T_win
    for l in range(L):                      # static unroll: L*K MXU matmuls
        out_len = cur_len - (K - 1)         # "valid" conv shrinks by K-1 rows
        p_in, p_out = P[l], P[l + 1]
        c_in = _cols(src, p_in)

        # f32 accumulator initialized with the folded conv-bias/BN shift.
        acc = jnp.broadcast_to(sh_refs[l][...], (out_len, p_out)).astype(jnp.float32)
        for k in range(K):
            acc = acc + jnp.dot(src[pl.ds(k, out_len), c_in], w_refs[l][k],
                                preferred_element_type=jnp.float32)

        if l < L - 1:
            y = jnp.tanh(acc.astype(act_dtype))   # bf16 EUP/VPU on v6e/v7x
            dst = bufs[l % 2]                     # ping-pong (never src == dst)
            c_out = _cols(dst, p_out)
            dst[pl.ds(0, out_len), c_out] = y

            # Only boundary tiles re-store with rows outside [0, T) zeroed:
            # this reproduces the per-layer zero padding at the sequence edge
            # (required for fused halo recomputation).
            start = t_off - H + pad * (l + 1)     # global pos of output row 0

            @pl.when(needs_mask)
            def _():
                g = rows0[0:out_len, :] + start
                valid = jnp.logical_and(g >= 0, g < T_true)
                dst[pl.ds(0, out_len), c_out] = jnp.where(valid, y, 0).astype(y.dtype)

            src = dst
            cur_len = out_len
        else:
            # Final layer (no tanh): rows past T are discarded by the wrapper,
            # so no masking needed here.  out_len == TT.
            o_ref[...] = acc.astype(o_ref.dtype)


# ------------------------------- Wrapper ----------------------------------- #

def postnet_forward(x_nct, layers, *, compute_dtype=jnp.bfloat16, t_tile=512,
                    eps=1e-5):
    """x_nct: (B, n_mel, T) PyTorch layout -> (B, n_mel, T) (eval-mode forward)."""
    B, C0, T = x_nct.shape
    L = len(layers)
    K = int(layers[0]["w"].shape[-1])
    assert K % 2 == 1
    pad = (K - 1) // 2
    H = pad * L                                        # total halo per side

    # Per-layer channel padding to lane multiples of 128 (input/output layers
    # stay at 128 instead of being inflated to the widest layer).
    c_dims = [C0] + [int(l["w"].shape[0]) for l in layers]
    P = [_round_up(c, 128) for c in c_dims]
    Pbuf = max(P[1:L]) if L >= 2 else P[-1]            # widest intermediate

    # ---- fold BN scale into weights, conv bias + BN mean/beta into shift ----
    w_list, sh_list = [], []
    for i, layer in enumerate(layers):
        scale = layer["gamma"] / jnp.sqrt(layer["var"] + eps)
        shift = (layer["b"] - layer["mean"]) * scale + layer["beta"]
        # (C_out, C_in, K) -> (K, C_in, C_out); fold scale into output channels.
        w_kio = jnp.transpose(layer["w"], (2, 1, 0)) * scale[None, None, :]
        _, ci, co = w_kio.shape
        w_list.append(jnp.pad(w_kio, ((0, 0), (0, P[i] - ci), (0, P[i + 1] - co))
                              ).astype(compute_dtype))
        sh_list.append(jnp.pad(shift, (0, P[i + 1] - co)
                               ).reshape(1, P[i + 1]).astype(jnp.float32))

    # ---- T tiling: big tiles amortize halo + per-grid-step overhead; keep
    #      at least 2 grid steps so both v7x TensorCores get work -------------
    TT = _round_up(min(t_tile, _round_up(T, 8)), 8)
    while B * _cdiv(T, TT) < 2 and TT > 8:
        TT = _round_up(max(TT // 2, 8), 8)
    T_padded = _round_up(T, TT)
    nt = T_padded // TT
    T_win = TT + 2 * H

    # ---- input: channels-last, halo + tail zero padding, narrow channel pad -
    x = jnp.transpose(x_nct, (0, 2, 1))                # (B, T, C0)
    x = jnp.pad(x, ((0, 0), (H, H + (T_padded - T)), (0, P[0] - C0)))
    x = x.astype(compute_dtype)                        # (B, T_padded + 2H, P[0])

    kernel = functools.partial(_postnet_fused_kernel, L=L, K=K, TT=TT, H=H,
                               T_true=T, P=tuple(P), act_dtype=compute_dtype)

    def _resident(shape):                              # stays in VMEM, 1 buffer
        nd = len(shape)
        return pl.BlockSpec(shape, lambda b, t: (0,) * nd,
                            pipeline_mode=pl.Buffered(1))

    in_specs = ([pl.BlockSpec(memory_space=pl.ANY)]                    # raw HBM
                + [_resident((K, P[i], P[i + 1])) for i in range(L)]   # weights
                + [_resident((1, P[i + 1])) for i in range(L)])        # shifts
    out_specs = pl.BlockSpec((None, TT, P[L]), lambda b, t: (b, t, 0))
    scratch_shapes = [
        pltpu.VMEM((T_win, P[0]), compute_dtype),            # DMA'd input window
        pltpu.VMEM((T_win - (K - 1), Pbuf), compute_dtype),  # ping
        pltpu.VMEM((T_win - (K - 1), Pbuf), compute_dtype),  # pong
        pltpu.SemaphoreType.DMA(()),
    ]

    # ---- VMEM budget (single-buffered weights) with headroom below physical -
    csz = jnp.dtype(compute_dtype).itemsize
    est = (T_win * P[0] * csz                          # input window scratch
           + 2 * (T_win - (K - 1)) * Pbuf * csz        # ping-pong scratch
           + 2 * TT * P[L] * 4                         # output blocks (f32, x2)
           + sum(K * P[i] * P[i + 1] * csz for i in range(L))   # weights (x1)
           + sum(P[i + 1] * 4 for i in range(L))       # shifts
           + (T_win - (K - 1)) * max(P) * 4)           # live f32 accumulator
    try:
        phys_vmem = int(pltpu.get_tpu_info().vmem_capacity_bytes)
    except Exception:
        phys_vmem = 64 * 2 ** 20                       # v7x-safe fallback
    vmem_limit = int(min(phys_vmem * 3 // 4, max(32 * 2 ** 20, int(1.5 * est))))

    out_lens = [T_win - (K - 1) * (i + 1) for i in range(L)]
    cost = pl.CostEstimate(
        flops=int(2 * B * nt * sum(K * out_lens[i] * P[i] * P[i + 1]
                                   for i in range(L))),
        transcendentals=int(B * nt * sum(out_lens[i] * P[i + 1]
                                         for i in range(L - 1))),
        bytes_accessed=int(int(x.size) * csz
                           + sum(int(w.size) * csz for w in w_list)
                           + B * T_padded * P[L] * 4),
    )

    out = pl.pallas_call(
        kernel,
        out_shape=jax.ShapeDtypeStruct((B, T_padded, P[L]), jnp.float32),
        grid_spec=pltpu.PrefetchScalarGridSpec(
            num_scalar_prefetch=0,
            grid=(B, nt),
            in_specs=in_specs,
            out_specs=out_specs,
            scratch_shapes=scratch_shapes),
        compiler_params=pltpu.CompilerParams(
            dimension_semantics=("parallel", "parallel"),
            vmem_limit_bytes=vmem_limit),
        cost_estimate=cost,
    )(x, *w_list, *sh_list)

    C_out = c_dims[-1]
    return jnp.transpose(out[:, :T, :C_out], (0, 2, 1))   # back to (B, C, T)


# ---------------------------- Parameter setup ----------------------------- #

def make_postnet_params(key, n_mel, emb_dim, kernel_size, n_convs):
    """Deterministic synthetic parameters matching the PyTorch module shapes."""
    layers = []
    dims = [n_mel] + [emb_dim] * (n_convs - 1) + [n_mel]
    for i in range(n_convs):
        c_in, c_out = dims[i], dims[i + 1]
        key, kw, kb, kg, kbe, km, kv = jax.random.split(key, 7)
        limit = np.sqrt(6.0 / (c_in * kernel_size + c_out * kernel_size))
        w = jax.random.uniform(kw, (c_out, c_in, kernel_size), jnp.float32,
                               -limit, limit)
        b = jax.random.uniform(kb, (c_out,), jnp.float32, -0.1, 0.1)
        gamma = jax.random.uniform(kg, (c_out,), jnp.float32, 0.8, 1.2)
        beta = jax.random.uniform(kbe, (c_out,), jnp.float32, -0.1, 0.1)
        rmean = jax.random.uniform(km, (c_out,), jnp.float32, -0.1, 0.1)
        rvar = jax.random.uniform(kv, (c_out,), jnp.float32, 0.5, 1.5)
        layers.append(dict(w=w, b=b, gamma=gamma, beta=beta,
                           mean=rmean, var=rvar))
    return layers


# Pure-JAX reference (lax.conv) for correctness checks.
def postnet_reference(x_nct, layers, eps=1e-5):
    x = x_nct
    n = len(layers)
    for i, layer in enumerate(layers):
        y = lax.conv_general_dilated(
            x, layer["w"], window_strides=(1,), padding=((2, 2),),
            dimension_numbers=("NCH", "OIH", "NCH"),
            preferred_element_type=jnp.float32)
        y = y + layer["b"][None, :, None]
        scale = layer["gamma"] / jnp.sqrt(layer["var"] + eps)
        y = (y - layer["mean"][None, :, None]) * scale[None, :, None] \
            + layer["beta"][None, :, None]
        if i < n - 1:
            y = jnp.tanh(y)
        x = y
    return x


if __name__ == "__main__":
    # Small hparams consistent with the module's __init__.
    n_mel_channels = 8
    postnet_embedding_dim = 32
    postnet_kernel_size = 5
    postnet_n_convolutions = 5
    B, T = 2, 16

    key = jax.random.PRNGKey(0)
    key, kx = jax.random.split(key)
    x = jax.random.normal(kx, (B, n_mel_channels, T), jnp.float32)

    layers = make_postnet_params(key, n_mel_channels, postnet_embedding_dim,
                                 postnet_kernel_size, postnet_n_convolutions)

    ref = jax.block_until_ready(postnet_reference(x, layers))

    # f32 compute path (single tile): validates fold / halo / boundary-mask.
    # (TPU default-precision f32 matmuls are bf16-internal, hence 2e-2.)
    out_f32 = jax.block_until_ready(
        postnet_forward(x, layers, compute_dtype=jnp.float32))
    assert out_f32.shape == (B, n_mel_channels, T)
    np.testing.assert_allclose(np.asarray(out_f32), np.asarray(ref),
                               rtol=2e-2, atol=2e-2)

    # bf16 compute path (the optimized configuration).
    out_bf16 = jax.block_until_ready(
        postnet_forward(x, layers, compute_dtype=jnp.bfloat16))
    assert out_bf16.shape == (B, n_mel_channels, T)
    np.testing.assert_allclose(np.asarray(out_bf16), np.asarray(ref),
                               rtol=5e-2, atol=5e-2)

    # Multi-tile path: exercises interior tiles (mask skipped via pl.when),
    # boundary tiles, manual halo DMA at non-zero offsets, and tail padding.
    T2 = 300
    key, kx2 = jax.random.split(key)
    x2 = jax.random.normal(kx2, (B, n_mel_channels, T2), jnp.float32)
    ref2 = jax.block_until_ready(postnet_reference(x2, layers))
    out2 = jax.block_until_ready(
        postnet_forward(x2, layers, compute_dtype=jnp.float32, t_tile=128))
    assert out2.shape == (B, n_mel_channels, T2)
    np.testing.assert_allclose(np.asarray(out2), np.asarray(ref2),
                               rtol=2e-2, atol=2e-2)

    print("KERNEL_OK")
</pallas_src>

<mosaic_0001>
module attributes {stable_mosaic.version = 11 : i64} {
  func.func @_postnet_fused_kernel(%arg0: i32, %arg1: i32, %arg2: memref<2x36x128xf32, #tpu.memory_space<any>>, %arg3: memref<5x128x128xf32, #tpu.memory_space<vmem>>, %arg4: memref<5x128x128xf32, #tpu.memory_space<vmem>>, %arg5: memref<5x128x128xf32, #tpu.memory_space<vmem>>, %arg6: memref<5x128x128xf32, #tpu.memory_space<vmem>>, %arg7: memref<5x128x128xf32, #tpu.memory_space<vmem>>, %arg8: memref<1x128xf32, #tpu.memory_space<vmem>>, %arg9: memref<1x128xf32, #tpu.memory_space<vmem>>, %arg10: memref<1x128xf32, #tpu.memory_space<vmem>>, %arg11: memref<1x128xf32, #tpu.memory_space<vmem>>, %arg12: memref<1x128xf32, #tpu.memory_space<vmem>>, %arg13: memref<1x16x128xf32, #tpu.memory_space<vmem>>, %arg14: memref<36x128xf32, #tpu.memory_space<vmem>>, %arg15: memref<32x128xf32, #tpu.memory_space<vmem>>, %arg16: memref<32x128xf32, #tpu.memory_space<vmem>>, %arg17: memref<!tpu.dma_semaphore, #tpu.memory_space<semaphore_mem>>) attributes {dimension_semantics = [#tpu.dimension_semantics<parallel>, #tpu.dimension_semantics<parallel>], iteration_bounds = array<i64: 2, 1>, scalar_prefetch = 0 : i64, scratch_operands = 4 : i64, tpu.core_type = #tpu.core_type<tc>, window_params = [{}, {pipeline_mode = #tpu.pipeline_mode<synchronous>, transform_indices = @transform_1, window_bounds = array<i64: 5, 128, 128>}, {pipeline_mode = #tpu.pipeline_mode<synchronous>, transform_indices = @transform_2, window_bounds = array<i64: 5, 128, 128>}, {pipeline_mode = #tpu.pipeline_mode<synchronous>, transform_indices = @transform_3, window_bounds = array<i64: 5, 128, 128>}, {pipeline_mode = #tpu.pipeline_mode<synchronous>, transform_indices = @transform_4, window_bounds = array<i64: 5, 128, 128>}, {pipeline_mode = #tpu.pipeline_mode<synchronous>, transform_indices = @transform_5, window_bounds = array<i64: 5, 128, 128>}, {pipeline_mode = #tpu.pipeline_mode<synchronous>, transform_indices = @transform_6, window_bounds = array<i64: 1, 128>}, {pipeline_mode = #tpu.pipeline_mode<synchronous>, transform_indices = @transform_7, window_bounds = array<i64: 1, 128>}, {pipeline_mode = #tpu.pipeline_mode<synchronous>, transform_indices = @transform_8, window_bounds = array<i64: 1, 128>}, {pipeline_mode = #tpu.pipeline_mode<synchronous>, transform_indices = @transform_9, window_bounds = array<i64: 1, 128>}, {pipeline_mode = #tpu.pipeline_mode<synchronous>, transform_indices = @transform_10, window_bounds = array<i64: 1, 128>}, {transform_indices = @transform_11, window_bounds = array<i64: 1, 16, 128>}]} {
    %c16_i32 = arith.constant 16 : i32
    %0 = arith.muli %arg1, %c16_i32 : i32
    %1 = tpu.assume_multiple %0, 8 : i32
    %c0_i32 = arith.constant 0 : i32
    %2 = tpu.memref_slice %arg2[%arg0, %1, %c0_i32] : memref<2x36x128xf32, #tpu.memory_space<any>> -> memref<1x36x128xf32, #tpu.memory_space<any>>
    %3 = tpu.memref_squeeze %2 : memref<1x36x128xf32, #tpu.memory_space<any>> -> memref<36x128xf32, #tpu.memory_space<any>>
    tpu.enqueue_dma source(%3 : memref<36x128xf32, #tpu.memory_space<any>>) target(%arg14 : memref<36x128xf32, #tpu.memory_space<vmem>>) target_semaphore(%arg17 : memref<!tpu.dma_semaphore, #tpu.memory_space<semaphore_mem>>)
    %c0_i32_0 = arith.constant 0 : i32
    %4 = tpu.memref_slice %arg2[%arg0, %1, %c0_i32_0] : memref<2x36x128xf32, #tpu.memory_space<any>> -> memref<1x36x128xf32, #tpu.memory_space<any>>
    %5 = tpu.memref_squeeze %4 : memref<1x36x128xf32, #tpu.memory_space<any>> -> memref<36x128xf32, #tpu.memory_space<any>>
    tpu.wait_dma2 semaphore(%arg17 : memref<!tpu.dma_semaphore, #tpu.memory_space<semaphore_mem>>) src(%5 : memref<36x128xf32, #tpu.memory_space<any>>) dst(%arg14 : memref<36x128xf32, #tpu.memory_space<vmem>>)
    %c2_i32 = arith.constant 2 : i32
    %6 = arith.addi %1, %c2_i32 : i32
    %c10_i32 = arith.constant 10 : i32
    %7 = arith.subi %6, %c10_i32 : i32
    %c0_i32_1 = arith.constant 0 : i32
    %8 = arith.cmpi slt, %7, %c0_i32_1 : i32
    %c16_i32_2 = arith.constant 16 : i32
    %9 = arith.addi %1, %c16_i32_2 : i32
    %c10_i32_3 = arith.constant 10 : i32
    %10 = arith.addi %9, %c10_i32_3 : i32
    %c2_i32_4 = arith.constant 2 : i32
    %11 = arith.subi %10, %c2_i32_4 : i32
    %c16_i32_5 = arith.constant 16 : i32
    %12 = arith.cmpi sgt, %11, %c16_i32_5 : i32
    %13 = arith.ori %8, %12 : i1
    %14 = tpu.iota {dimensions = array<i32: 0>} : vector<32x1xi32>
    %c0 = arith.constant 0 : index
    %c0_6 = arith.constant 0 : index
    %15 = vector.load %arg8[%c0, %c0_6] : memref<1x128xf32, #tpu.memory_space<vmem>>, vector<1x128xf32>
    %16 = vector.shape_cast %15 : vector<1x128xf32> to vector<1x128xf32>
    %17 = vector.broadcast %16 : vector<1x128xf32> to vector<32x128xf32>
    %c0_7 = arith.constant 0 : index
    %c0_8 = arith.constant 0 : index
    %18 = vector.load %arg14[%c0_7, %c0_8] : memref<36x128xf32, #tpu.memory_space<vmem>>, vector<32x128xf32>
    %c0_9 = arith.constant 0 : index
    %c0_10 = arith.constant 0 : index
    %c0_11 = arith.constant 0 : index
    %19 = vector.load %arg3[%c0_9, %c0_10, %c0_11] : memref<5x128x128xf32, #tpu.memory_space<vmem>>, vector<1x128x128xf32>
    %20 = vector.shape_cast %19 : vector<1x128x128xf32> to vector<128x128xf32>
    %cst = arith.constant dense<0.000000e+00> : vector<32x128xf32>
    %21 = tpu.matmul %18, %20, %cst {dimension_numbers = #tpu.dot_dimension_numbers<[1], [0], [0], [1], [0, 0, 1, 1], [], []>} : vector<32x128xf32>, vector<128x128xf32>, vector<32x128xf32> -> vector<32x128xf32>
    %22 = arith.addf %17, %21 : vector<32x128xf32>
    %c1 = arith.constant 1 : index
    %c0_12 = arith.constant 0 : index
    %23 = vector.load %arg14[%c1, %c0_12] : memref<36x128xf32, #tpu.memory_space<vmem>>, vector<32x128xf32>
    %c1_13 = arith.constant 1 : index
    %c0_14 = arith.constant 0 : index
    %c0_15 = arith.constant 0 : index
    %24 = vector.load %arg3[%c1_13, %c0_14, %c0_15] : memref<5x128x128xf32, #tpu.memory_space<vmem>>, vector<1x128x128xf32>
    %25 = vector.shape_cast %24 : vector<1x128x128xf32> to vector<128x128xf32>
    %cst_16 = arith.constant dense<0.000000e+00> : vector<32x128xf32>
    %26 = tpu.matmul %23, %25, %cst_16 {dimension_numbers = #tpu.dot_dimension_numbers<[1], [0], [0], [1], [0, 0, 1, 1], [], []>} : vector<32x128xf32>, vector<128x128xf32>, vector<32x128xf32> -> vector<32x128xf32>
    %27 = arith.addf %22, %26 : vector<32x128xf32>
    %c2 = arith.constant 2 : index
    %c0_17 = arith.constant 0 : index
    %28 = vector.load %arg14[%c2, %c0_17] : memref<36x128xf32, #tpu.memory_space<vmem>>, vector<32x128xf32>
    %c2_18 = arith.constant 2 : index
    %c0_19 = arith.constant 0 : index
    %c0_20 = arith.constant 0 : index
    %29 = vector.load %arg3[%c2_18, %c0_19, %c0_20] : memref<5x128x128xf32, #tpu.memory_space<vmem>>, vector<1x128x128xf32>
    %30 = vector.shape_cast %29 : vector<1x128x128xf32> to vector<128x128xf32>
    %cst_21 = arith.constant dense<0.000000e+00> : vector<32x128xf32>
    %31 = tpu.matmul %28, %30, %cst_21 {dimension_numbers = #tpu.dot_dimension_numbers<[1], [0], [0], [1], [0, 0, 1, 1], [], []>} : vector<32x128xf32>, vector<128x128xf32>, vector<32x128xf32> -> vector<32x128xf32>
    %32 = arith.addf %27, %31 : vector<32x128xf32>
    %c3 = arith.constant 3 : index
    %c0_22 = arith.constant 0 : index
    %33 = vector.load %arg14[%c3, %c0_22] : memref<36x128xf32, #tpu.memory_space<vmem>>, vector<32x128xf32>
    %c3_23 = arith.constant 3 : index
    %c0_24 = arith.constant 0 : index
    %c0_25 = arith.constant 0 : index
    %34 = vector.load %arg3[%c3_23, %c0_24, %c0_25] : memref<5x128x128xf32, #tpu.memory_space<vmem>>, vector<1x128x128xf32>
    %35 = vector.shape_cast %34 : vector<1x128x128xf32> to vector<128x128xf32>
    %cst_26 = arith.constant dense<0.000000e+00> : vector<32x128xf32>
    %36 = tpu.matmul %33, %35, %cst_26 {dimension_numbers = #tpu.dot_dimension_numbers<[1], [0], [0], [1], [0, 0, 1, 1], [], []>} : vector<32x128xf32>, vector<128x128xf32>, vector<32x128xf32> -> vector<32x128xf32>
    %37 = arith.addf %32, %36 : vector<32x128xf32>
    %c4 = arith.constant 4 : index
    %c0_27 = arith.constant 0 : index
    %38 = vector.load %arg14[%c4, %c0_27] : memref<36x128xf32, #tpu.memory_space<vmem>>, vector<32x128xf32>
    %c4_28 = arith.constant 4 : index
    %c0_29 = arith.constant 0 : index
    %c0_30 = arith.constant 0 : index
    %39 = vector.load %arg3[%c4_28, %c0_29, %c0_30] : memref<5x128x128xf32, #tpu.memory_space<vmem>>, vector<1x128x128xf32>
    %40 = vector.shape_cast %39 : vector<1x128x128xf32> to vector<128x128xf32>
    %cst_31 = arith.constant dense<0.000000e+00> : vector<32x128xf32>
    %41 = tpu.matmul %38, %40, %cst_31 {dimension_numbers = #tpu.dot_dimension_numbers<[1], [0], [0], [1], [0, 0, 1, 1], [], []>} : vector<32x128xf32>, vector<128x128xf32>, vector<32x128xf32> -> vector<32x128xf32>
    %42 = arith.addf %37, %41 : vector<32x128xf32>
    %43 = math.tanh %42 : vector<32x128xf32>
    %c0_32 = arith.constant 0 : index
    %c0_33 = arith.constant 0 : index
    %44 = vector.load %arg15[%c0_32, %c0_33] : memref<32x128xf32, #tpu.memory_space<vmem>>, vector<32x128xf32>
    tpu.vector_store %arg15[%c0_32, %c0_33], %43 {strides = array<i32>} : memref<32x128xf32, #tpu.memory_space<vmem>>, vector<32x128xf32>,
    %c10_i32_34 = arith.constant 10 : i32
    %45 = arith.subi %1, %c10_i32_34 : i32
    %c2_i32_35 = arith.constant 2 : i32
    %46 = arith.addi %45, %c2_i32_35 : i32
    %47 = arith.extui %13 : i1 to i32
    %c0_i32_36 = arith.constant 0 : i32
    %48 = arith.cmpi ne, %47, %c0_i32_36 : i32
    scf.if %48 {
      %182 = vector.broadcast %46 : i32 to vector<32x1xi32>
      %183 = arith.addi %14, %182 : vector<32x1xi32>
      %c0_i32_180 = arith.constant 0 : i32
      %184 = vector.broadcast %c0_i32_180 : i32 to vector<32x1xi32>
      %185 = arith.cmpi sge, %183, %184 : vector<32x1xi32>
      %c16_i32_181 = arith.constant 16 : i32
      %186 = vector.broadcast %c16_i32_181 : i32 to vector<32x1xi32>
      %187 = arith.cmpi slt, %183, %186 : vector<32x1xi32>
      %188 = arith.andi %185, %187 : vector<32x1xi1>
      %c0_i32_182 = arith.constant 0 : i32
      %189 = arith.sitofp %c0_i32_182 : i32 to f32
      %190 = vector.shape_cast %188 : vector<32x1xi1> to vector<32x1xi1>
      %191 = vector.broadcast %190 : vector<32x1xi1> to vector<32x128xi1>
      %192 = vector.broadcast %189 : f32 to vector<32x128xf32>
      %193 = arith.select %191, %43, %192 : vector<32x128xi1>, vector<32x128xf32>
      %c0_183 = arith.constant 0 : index
      %c0_184 = arith.constant 0 : index
      %194 = vector.load %arg15[%c0_183, %c0_184] : memref<32x128xf32, #tpu.memory_space<vmem>>, vector<32x128xf32>
      tpu.vector_store %arg15[%c0_183, %c0_184], %193 {strides = array<i32>} : memref<32x128xf32, #tpu.memory_space<vmem>>, vector<32x128xf32>,
    } else {
    }
    %c0_37 = arith.constant 0 : index
    %c0_38 = arith.constant 0 : index
    %49 = vector.load %arg9[%c0_37, %c0_38] : memref<1x128xf32, #tpu.memory_space<vmem>>, vector<1x128xf32>
    %50 = vector.shape_cast %49 : vector<1x128xf32> to vector<1x128xf32>
    %51 = vector.broadcast %50 : vector<1x128xf32> to vector<28x128xf32>
    %c0_39 = arith.constant 0 : index
    %c0_40 = arith.constant 0 : index
    %52 = vector.load %arg15[%c0_39, %c0_40] : memref<32x128xf32, #tpu.memory_space<vmem>>, vector<28x128xf32>
    %c0_41 = arith.constant 0 : index
    %c0_42 = arith.constant 0 : index
    %c0_43 = arith.constant 0 : index
    %53 = vector.load %arg4[%c0_41, %c0_42, %c0_43] : memref<5x128x128xf32, #tpu.memory_space<vmem>>, vector<1x128x128xf32>
    %54 = vector.shape_cast %53 : vector<1x128x128xf32> to vector<128x128xf32>
    %cst_44 = arith.constant dense<0.000000e+00> : vector<28x128xf32>
    %55 = tpu.matmul %52, %54, %cst_44 {dimension_numbers = #tpu.dot_dimension_numbers<[1], [0], [0], [1], [0, 0, 1, 1], [], []>} : vector<28x128xf32>, vector<128x128xf32>, vector<28x128xf32> -> vector<28x128xf32>
    %56 = arith.addf %51, %55 : vector<28x128xf32>
    %c1_45 = arith.constant 1 : index
    %c0_46 = arith.constant 0 : index
    %57 = vector.load %arg15[%c1_45, %c0_46] : memref<32x128xf32, #tpu.memory_space<vmem>>, vector<28x128xf32>
    %c1_47 = arith.constant 1 : index
    %c0_48 = arith.constant 0 : index
    %c0_49 = arith.constant 0 : index
    %58 = vector.load %arg4[%c1_47, %c0_48, %c0_49] : memref<5x128x128xf32, #tpu.memory_space<vmem>>, vector<1x128x128xf32>
    %59 = vector.shape_cast %58 : vector<1x128x128xf32> to vector<128x128xf32>
    %cst_50 = arith.constant dense<0.000000e+00> : vector<28x128xf32>
    %60 = tpu.matmul %57, %59, %cst_50 {dimension_numbers = #tpu.dot_dimension_numbers<[1], [0], [0], [1], [0, 0, 1, 1], [], []>} : vector<28x128xf32>, vector<128x128xf32>, vector<28x128xf32> -> vector<28x128xf32>
    %61 = arith.addf %56, %60 : vector<28x128xf32>
    %c2_51 = arith.constant 2 : index
    %c0_52 = arith.constant 0 : index
    %62 = vector.load %arg15[%c2_51, %c0_52] : memref<32x128xf32, #tpu.memory_space<vmem>>, vector<28x128xf32>
    %c2_53 = arith.constant 2 : index
    %c0_54 = arith.constant 0 : index
    %c0_55 = arith.constant 0 : index
    %63 = vector.load %arg4[%c2_53, %c0_54, %c0_55] : memref<5x128x128xf32, #tpu.memory_space<vmem>>, vector<1x128x128xf32>
    %64 = vector.shape_cast %63 : vector<1x128x128xf32> to vector<128x128xf32>
    %cst_56 = arith.constant dense<0.000000e+00> : vector<28x128xf32>
    %65 = tpu.matmul %62, %64, %cst_56 {dimension_numbers = #tpu.dot_dimension_numbers<[1], [0], [0], [1], [0, 0, 1, 1], [], []>} : vector<28x128xf32>, vector<128x128xf32>, vector<28x128xf32> -> vector<28x128xf32>
    %66 = arith.addf %61, %65 : vector<28x128xf32>
    %c3_57 = arith.constant 3 : index
    %c0_58 = arith.constant 0 : index
    %67 = vector.load %arg15[%c3_57, %c0_58] : memref<32x128xf32, #tpu.memory_space<vmem>>, vector<28x128xf32>
    %c3_59 = arith.constant 3 : index
    %c0_60 = arith.constant 0 : index
    %c0_61 = arith.constant 0 : index
    %68 = vector.load %arg4[%c3_59, %c0_60, %c0_61] : memref<5x128x128xf32, #tpu.memory_space<vmem>>, vector<1x128x128xf32>
    %69 = vector.shape_cast %68 : vector<1x128x128xf32> to vector<128x128xf32>
    %cst_62 = arith.constant dense<0.000000e+00> : vector<28x128xf32>
    %70 = tpu.matmul %67, %69, %cst_62 {dimension_numbers = #tpu.dot_dimension_numbers<[1], [0], [0], [1], [0, 0, 1, 1], [], []>} : vector<28x128xf32>, vector<128x128xf32>, vector<28x128xf32> -> vector<28x128xf32>
    %71 = arith.addf %66, %70 : vector<28x128xf32>
    %c4_63 = arith.constant 4 : index
    %c0_64 = arith.constant 0 : index
    %72 = vector.load %arg15[%c4_63, %c0_64] : memref<32x128xf32, #tpu.memory_space<vmem>>, vector<28x128xf32>
    %c4_65 = arith.constant 4 : index
    %c0_66 = arith.constant 0 : index
    %c0_67 = arith.constant 0 : index
    %73 = vector.load %arg4[%c4_65, %c0_66, %c0_67] : memref<5x128x128xf32, #tpu.memory_space<vmem>>, vector<1x128x128xf32>
    %74 = vector.shape_cast %73 : vector<1x128x128xf32> to vector<128x128xf32>
    %cst_68 = arith.constant dense<0.000000e+00> : vector<28x128xf32>
    %75 = tpu.matmul %72, %74, %cst_68 {dimension_numbers = #tpu.dot_dimension_numbers<[1], [0], [0], [1], [0, 0, 1, 1], [], []>} : vector<28x128xf32>, vector<128x128xf32>, vector<28x128xf32> -> vector<28x128xf32>
    %76 = arith.addf %71, %75 : vector<28x128xf32>
    %77 = math.tanh %76 : vector<28x128xf32>
    %c0_69 = arith.constant 0 : index
    %c0_70 = arith.constant 0 : index
    %78 = vector.load %arg16[%c0_69, %c0_70] : memref<32x128xf32, #tpu.memory_space<vmem>>, vector<28x128xf32>
    tpu.vector_store %arg16[%c0_69, %c0_70], %77 {strides = array<i32>} : memref<32x128xf32, #tpu.memory_space<vmem>>, vector<28x128xf32>,
    %c10_i32_71 = arith.constant 10 : i32
    %79 = arith.subi %1, %c10_i32_71 : i32
    %c4_i32 = arith.constant 4 : i32
    %80 = arith.addi %79, %c4_i32 : i32
    %81 = arith.extui %13 : i1 to i32
    %c0_i32_72 = arith.constant 0 : i32
    %82 = arith.cmpi ne, %81, %c0_i32_72 : i32
    scf.if %82 {
      %182 = vector.extract_strided_slice %14 {offsets = [0, 0], sizes = [28, 1], strides = [1, 1]} : vector<32x1xi32> to vector<28x1xi32>
      %183 = vector.broadcast %80 : i32 to vector<28x1xi32>
      %184 = arith.addi %182, %183 : vector<28x1xi32>
      %c0_i32_180 = arith.constant 0 : i32
      %185 = vector.broadcast %c0_i32_180 : i32 to vector<28x1xi32>
      %186 = arith.cmpi sge, %184, %185 : vector<28x1xi32>
      %c16_i32_181 = arith.constant 16 : i32
      %187 = vector.broadcast %c16_i32_181 : i32 to vector<28x1xi32>
      %188 = arith.cmpi slt, %184, %187 : vector<28x1xi32>
      %189 = arith.andi %186, %188 : vector<28x1xi1>
      %c0_i32_182 = arith.constant 0 : i32
      %190 = arith.sitofp %c0_i32_182 : i32 to f32
      %191 = vector.shape_cast %189 : vector<28x1xi1> to vector<28x1xi1>
      %192 = vector.broadcast %191 : vector<28x1xi1> to vector<28x128xi1>
      %193 = vector.broadcast %190 : f32 to vector<28x128xf32>
      %194 = arith.select %192, %77, %193 : vector<28x128xi1>, vector<28x128xf32>
      %c0_183 = arith.constant 0 : index
      %c0_184 = arith.constant 0 : index
      %195 = vector.load %arg16[%c0_183, %c0_184] : memref<32x128xf32, #tpu.memory_space<vmem>>, vector<28x128xf32>
      tpu.vector_store %arg16[%c0_183, %c0_184], %194 {strides = array<i32>} : memref<32x128xf32, #tpu.memory_space<vmem>>, vector<28x128xf32>,
    } else {
    }
    %c0_73 = arith.constant 0 : index
    %c0_74 = arith.constant 0 : index
    %83 = vector.load %arg10[%c0_73, %c0_74] : memref<1x128xf32, #tpu.memory_space<vmem>>, vector<1x128xf32>
    %84 = vector.shape_cast %83 : vector<1x128xf32> to vector<1x128xf32>
    %85 = vector.broadcast %84 : vector<1x128xf32> to vector<24x128xf32>
    %c0_75 = arith.constant 0 : index
    %c0_76 = arith.constant 0 : index
    %86 = vector.load %arg16[%c0_75, %c0_76] : memref<32x128xf32, #tpu.memory_space<vmem>>, vector<24x128xf32>
    %c0_77 = arith.constant 0 : index
    %c0_78 = arith.constant 0 : index
    %c0_79 = arith.constant 0 : index
    %87 = vector.load %arg5[%c0_77, %c0_78, %c0_79] : memref<5x128x128xf32, #tpu.memory_space<vmem>>, vector<1x128x128xf32>
    %88 = vector.shape_cast %87 : vector<1x128x128xf32> to vector<128x128xf32>
    %cst_80 = arith.constant dense<0.000000e+00> : vector<24x128xf32>
    %89 = tpu.matmul %86, %88, %cst_80 {dimension_numbers = #tpu.dot_dimension_numbers<[1], [0], [0], [1], [0, 0, 1, 1], [], []>} : vector<24x128xf32>, vector<128x128xf32>, vector<24x128xf32> -> vector<24x128xf32>
    %90 = arith.addf %85, %89 : vector<24x128xf32>
    %c1_81 = arith.constant 1 : index
    %c0_82 = arith.constant 0 : index
    %91 = vector.load %arg16[%c1_81, %c0_82] : memref<32x128xf32, #tpu.memory_space<vmem>>, vector<24x128xf32>
    %c1_83 = arith.constant 1 : index
    %c0_84 = arith.constant 0 : index
    %c0_85 = arith.constant 0 : index
    %92 = vector.load %arg5[%c1_83, %c0_84, %c0_85] : memref<5x128x128xf32, #tpu.memory_space<vmem>>, vector<1x128x128xf32>
    %93 = vector.shape_cast %92 : vector<1x128x128xf32> to vector<128x128xf32>
    %cst_86 = arith.constant dense<0.000000e+00> : vector<24x128xf32>
    %94 = tpu.matmul %91, %93, %cst_86 {dimension_numbers = #tpu.dot_dimension_numbers<[1], [0], [0], [1], [0, 0, 1, 1], [], []>} : vector<24x128xf32>, vector<128x128xf32>, vector<24x128xf32> -> vector<24x128xf32>
    %95 = arith.addf %90, %94 : vector<24x128xf32>
    %c2_87 = arith.constant 2 : index
    %c0_88 = arith.constant 0 : index
    %96 = vector.load %arg16[%c2_87, %c0_88] : memref<32x128xf32, #tpu.memory_space<vmem>>, vector<24x128xf32>
    %c2_89 = arith.constant 2 : index
    %c0_90 = arith.constant 0 : index
    %c0_91 = arith.constant 0 : index
    %97 = vector.load %arg5[%c2_89, %c0_90, %c0_91] : memref<5x128x128xf32, #tpu.memory_space<vmem>>, vector<1x128x128xf32>
    %98 = vector.shape_cast %97 : vector<1x128x128xf32> to vector<128x128xf32>
    %cst_92 = arith.constant dense<0.000000e+00> : vector<24x128xf32>
    %99 = tpu.matmul %96, %98, %cst_92 {dimension_numbers = #tpu.dot_dimension_numbers<[1], [0], [0], [1], [0, 0, 1, 1], [], []>} : vector<24x128xf32>, vector<128x128xf32>, vector<24x128xf32> -> vector<24x128xf32>
    %100 = arith.addf %95, %99 : vector<24x128xf32>
    %c3_93 = arith.constant 3 : index
    %c0_94 = arith.constant 0 : index
    %101 = vector.load %arg16[%c3_93, %c0_94] : memref<32x128xf32, #tpu.memory_space<vmem>>, vector<24x128xf32>
    %c3_95 = arith.constant 3 : index
    %c0_96 = arith.constant 0 : index
    %c0_97 = arith.constant 0 : index
    %102 = vector.load %arg5[%c3_95, %c0_96, %c0_97] : memref<5x128x128xf32, #tpu.memory_space<vmem>>, vector<1x128x128xf32>
    %103 = vector.shape_cast %102 : vector<1x128x128xf32> to vector<128x128xf32>
    %cst_98 = arith.constant dense<0.000000e+00> : vector<24x128xf32>
    %104 = tpu.matmul %101, %103, %cst_98 {dimension_numbers = #tpu.dot_dimension_numbers<[1], [0], [0], [1], [0, 0, 1, 1], [], []>} : vector<24x128xf32>, vector<128x128xf32>, vector<24x128xf32> -> vector<24x128xf32>
    %105 = arith.addf %100, %104 : vector<24x128xf32>
    %c4_99 = arith.constant 4 : index
    %c0_100 = arith.constant 0 : index
    %106 = vector.load %arg16[%c4_99, %c0_100] : memref<32x128xf32, #tpu.memory_space<vmem>>, vector<24x128xf32>
    %c4_101 = arith.constant 4 : index
    %c0_102 = arith.constant 0 : index
    %c0_103 = arith.constant 0 : index
    %107 = vector.load %arg5[%c4_101, %c0_102, %c0_103] : memref<5x128x128xf32, #tpu.memory_space<vmem>>, vector<1x128x128xf32>
    %108 = vector.shape_cast %107 : vector<1x128x128xf32> to vector<128x128xf32>
    %cst_104 = arith.constant dense<0.000000e+00> : vector<24x128xf32>
    %109 = tpu.matmul %106, %108, %cst_104 {dimension_numbers = #tpu.dot_dimension_numbers<[1], [0], [0], [1], [0, 0, 1, 1], [], []>} : vector<24x128xf32>, vector<128x128xf32>, vector<24x128xf32> -> vector<24x128xf32>
    %110 = arith.addf %105, %109 : vector<24x128xf32>
    %111 = math.tanh %110 : vector<24x128xf32>
    %c0_105 = arith.constant 0 : index
    %c0_106 = arith.constant 0 : index
    %112 = vector.load %arg15[%c0_105, %c0_106] : memref<32x128xf32, #tpu.memory_space<vmem>>, vector<24x128xf32>
    tpu.vector_store %arg15[%c0_105, %c0_106], %111 {strides = array<i32>} : memref<32x128xf32, #tpu.memory_space<vmem>>, vector<24x128xf32>,
    %c10_i32_107 = arith.constant 10 : i32
    %113 = arith.subi %1, %c10_i32_107 : i32
    %c6_i32 = arith.constant 6 : i32
    %114 = arith.addi %113, %c6_i32 : i32
    %115 = arith.extui %13 : i1 to i32
    %c0_i32_108 = arith.constant 0 : i32
    %116 = arith.cmpi ne, %115, %c0_i32_108 : i32
    scf.if %116 {
      %182 = vector.extract_strided_slice %14 {offsets = [0, 0], sizes = [24, 1], strides = [1, 1]} : vector<32x1xi32> to vector<24x1xi32>
      %183 = vector.broadcast %114 : i32 to vector<24x1xi32>
      %184 = arith.addi %182, %183 : vector<24x1xi32>
      %c0_i32_180 = arith.constant 0 : i32
      %185 = vector.broadcast %c0_i32_180 : i32 to vector<24x1xi32>
      %186 = arith.cmpi sge, %184, %185 : vector<24x1xi32>
      %c16_i32_181 = arith.constant 16 : i32
      %187 = vector.broadcast %c16_i32_181 : i32 to vector<24x1xi32>
      %188 = arith.cmpi slt, %184, %187 : vector<24x1xi32>
      %189 = arith.andi %186, %188 : vector<24x1xi1>
      %c0_i32_182 = arith.constant 0 : i32
      %190 = arith.sitofp %c0_i32_182 : i32 to f32
      %191 = vector.shape_cast %189 : vector<24x1xi1> to vector<24x1xi1>
      %192 = vector.broadcast %191 : vector<24x1xi1> to vector<24x128xi1>
      %193 = vector.broadcast %190 : f32 to vector<24x128xf32>
      %194 = arith.select %192, %111, %193 : vector<24x128xi1>, vector<24x128xf32>
      %c0_183 = arith.constant 0 : index
      %c0_184 = arith.constant 0 : index
      %195 = vector.load %arg15[%c0_183, %c0_184] : memref<32x128xf32, #tpu.memory_space<vmem>>, vector<24x128xf32>
      tpu.vector_store %arg15[%c0_183, %c0_184], %194 {strides = array<i32>} : memref<32x128xf32, #tpu.memory_space<vmem>>, vector<24x128xf32>,
    } else {
    }
    %c0_109 = arith.constant 0 : index
    %c0_110 = arith.constant 0 : index
    %117 = vector.load %arg11[%c0_109, %c0_110] : memref<1x128xf32, #tpu.memory_space<vmem>>, vector<1x128xf32>
    %118 = vector.shape_cast %117 : vector<1x128xf32> to vector<1x128xf32>
    %119 = vector.broadcast %118 : vector<1x128xf32> to vector<20x128xf32>
    %c0_111 = arith.constant 0 : index
    %c0_112 = arith.constant 0 : index
    %120 = vector.load %arg15[%c0_111, %c0_112] : memref<32x128xf32, #tpu.memory_space<vmem>>, vector<20x128xf32>
    %c0_113 = arith.constant 0 : index
    %c0_114 = arith.constant 0 : index
    %c0_115 = arith.constant 0 : index
    %121 = vector.load %arg6[%c0_113, %c0_114, %c0_115] : memref<5x128x128xf32, #tpu.memory_space<vmem>>, vector<1x128x128xf32>
    %122 = vector.shape_cast %121 : vector<1x128x128xf32> to vector<128x128xf32>
    %cst_116 = arith.constant dense<0.000000e+00> : vector<20x128xf32>
    %123 = tpu.matmul %120, %122, %cst_116 {dimension_numbers = #tpu.dot_dimension_numbers<[1], [0], [0], [1], [0, 0, 1, 1], [], []>} : vector<20x128xf32>, vector<128x128xf32>, vector<20x128xf32> -> vector<20x128xf32>
    %124 = arith.addf %119, %123 : vector<20x128xf32>
    %c1_117 = arith.constant 1 : index
    %c0_118 = arith.constant 0 : index
    %125 = vector.load %arg15[%c1_117, %c0_118] : memref<32x128xf32, #tpu.memory_space<vmem>>, vector<20x128xf32>
    %c1_119 = arith.constant 1 : index
    %c0_120 = arith.constant 0 : index
    %c0_121 = arith.constant 0 : index
    %126 = vector.load %arg6[%c1_119, %c0_120, %c0_121] : memref<5x128x128xf32, #tpu.memory_space<vmem>>, vector<1x128x128xf32>
    %127 = vector.shape_cast %126 : vector<1x128x128xf32> to vector<128x128xf32>
    %cst_122 = arith.constant dense<0.000000e+00> : vector<20x128xf32>
    %128 = tpu.matmul %125, %127, %cst_122 {dimension_numbers = #tpu.dot_dimension_numbers<[1], [0], [0], [1], [0, 0, 1, 1], [], []>} : vector<20x128xf32>, vector<128x128xf32>, vector<20x128xf32> -> vector<20x128xf32>
    %129 = arith.addf %124, %128 : vector<20x128xf32>
    %c2_123 = arith.constant 2 : index
    %c0_124 = arith.constant 0 : index
    %130 = vector.load %arg15[%c2_123, %c0_124] : memref<32x128xf32, #tpu.memory_space<vmem>>, vector<20x128xf32>
    %c2_125 = arith.constant 2 : index
    %c0_126 = arith.constant 0 : index
    %c0_127 = arith.constant 0 : index
    %131 = vector.load %arg6[%c2_125, %c0_126, %c0_127] : memref<5x128x128xf32, #tpu.memory_space<vmem>>, vector<1x128x128xf32>
    %132 = vector.shape_cast %131 : vector<1x128x128xf32> to vector<128x128xf32>
    %cst_128 = arith.constant dense<0.000000e+00> : vector<20x128xf32>
    %133 = tpu.matmul %130, %132, %cst_128 {dimension_numbers = #tpu.dot_dimension_numbers<[1], [0], [0], [1], [0, 0, 1, 1], [], []>} : vector<20x128xf32>, vector<128x128xf32>, vector<20x128xf32> -> vector<20x128xf32>
    %134 = arith.addf %129, %133 : vector<20x128xf32>
    %c3_129 = arith.constant 3 : index
    %c0_130 = arith.constant 0 : index
    %135 = vector.load %arg15[%c3_129, %c0_130] : memref<32x128xf32, #tpu.memory_space<vmem>>, vector<20x128xf32>
    %c3_131 = arith.constant 3 : index
    %c0_132 = arith.constant 0 : index
    %c0_133 = arith.constant 0 : index
    %136 = vector.load %arg6[%c3_131, %c0_132, %c0_133] : memref<5x128x128xf32, #tpu.memory_space<vmem>>, vector<1x128x128xf32>
    %137 = vector.shape_cast %136 : vector<1x128x128xf32> to vector<128x128xf32>
    %cst_134 = arith.constant dense<0.000000e+00> : vector<20x128xf32>
    %138 = tpu.matmul %135, %137, %cst_134 {dimension_numbers = #tpu.dot_dimension_numbers<[1], [0], [0], [1], [0, 0, 1, 1], [], []>} : vector<20x128xf32>, vector<128x128xf32>, vector<20x128xf32> -> vector<20x128xf32>
    %139 = arith.addf %134, %138 : vector<20x128xf32>
    %c4_135 = arith.constant 4 : index
    %c0_136 = arith.constant 0 : index
    %140 = vector.load %arg15[%c4_135, %c0_136] : memref<32x128xf32, #tpu.memory_space<vmem>>, vector<20x128xf32>
    %c4_137 = arith.constant 4 : index
    %c0_138 = arith.constant 0 : index
    %c0_139 = arith.constant 0 : index
    %141 = vector.load %arg6[%c4_137, %c0_138, %c0_139] : memref<5x128x128xf32, #tpu.memory_space<vmem>>, vector<1x128x128xf32>
    %142 = vector.shape_cast %141 : vector<1x128x128xf32> to vector<128x128xf32>
    %cst_140 = arith.constant dense<0.000000e+00> : vector<20x128xf32>
    %143 = tpu.matmul %140, %142, %cst_140 {dimension_numbers = #tpu.dot_dimension_numbers<[1], [0], [0], [1], [0, 0, 1, 1], [], []>} : vector<20x128xf32>, vector<128x128xf32>, vector<20x128xf32> -> vector<20x128xf32>
    %144 = arith.addf %139, %143 : vector<20x128xf32>
    %145 = math.tanh %144 : vector<20x128xf32>
    %c0_141 = arith.constant 0 : index
    %c0_142 = arith.constant 0 : index
    %146 = vector.load %arg16[%c0_141, %c0_142] : memref<32x128xf32, #tpu.memory_space<vmem>>, vector<20x128xf32>
    tpu.vector_store %arg16[%c0_141, %c0_142], %145 {strides = array<i32>} : memref<32x128xf32, #tpu.memory_space<vmem>>, vector<20x128xf32>,
    %c10_i32_143 = arith.constant 10 : i32
    %147 = arith.subi %1, %c10_i32_143 : i32
    %c8_i32 = arith.constant 8 : i32
    %148 = arith.addi %147, %c8_i32 : i32
    %149 = arith.extui %13 : i1 to i32
    %c0_i32_144 = arith.constant 0 : i32
    %150 = arith.cmpi ne, %149, %c0_i32_144 : i32
    scf.if %150 {
      %182 = vector.extract_strided_slice %14 {offsets = [0, 0], sizes = [20, 1], strides = [1, 1]} : vector<32x1xi32> to vector<20x1xi32>
      %183 = vector.broadcast %148 : i32 to vector<20x1xi32>
      %184 = arith.addi %182, %183 : vector<20x1xi32>
      %c0_i32_180 = arith.constant 0 : i32
      %185 = vector.broadcast %c0_i32_180 : i32 to vector<20x1xi32>
      %186 = arith.cmpi sge, %184, %185 : vector<20x1xi32>
      %c16_i32_181 = arith.constant 16 : i32
      %187 = vector.broadcast %c16_i32_181 : i32 to vector<20x1xi32>
      %188 = arith.cmpi slt, %184, %187 : vector<20x1xi32>
      %189 = arith.andi %186, %188 : vector<20x1xi1>
      %c0_i32_182 = arith.constant 0 : i32
      %190 = arith.sitofp %c0_i32_182 : i32 to f32
      %191 = vector.shape_cast %189 : vector<20x1xi1> to vector<20x1xi1>
      %192 = vector.broadcast %191 : vector<20x1xi1> to vector<20x128xi1>
      %193 = vector.broadcast %190 : f32 to vector<20x128xf32>
      %194 = arith.select %192, %145, %193 : vector<20x128xi1>, vector<20x128xf32>
      %c0_183 = arith.constant 0 : index
      %c0_184 = arith.constant 0 : index
      %195 = vector.load %arg16[%c0_183, %c0_184] : memref<32x128xf32, #tpu.memory_space<vmem>>, vector<20x128xf32>
      tpu.vector_store %arg16[%c0_183, %c0_184], %194 {strides = array<i32>} : memref<32x128xf32, #tpu.memory_space<vmem>>, vector<20x128xf32>,
    } else {
    }
    %c0_145 = arith.constant 0 : index
    %c0_146 = arith.constant 0 : index
    %151 = vector.load %arg12[%c0_145, %c0_146] : memref<1x128xf32, #tpu.memory_space<vmem>>, vector<1x128xf32>
    %152 = vector.shape_cast %151 : vector<1x128xf32> to vector<1x128xf32>
    %153 = vector.broadcast %152 : vector<1x128xf32> to vector<16x128xf32>
    %c0_147 = arith.constant 0 : index
    %c0_148 = arith.constant 0 : index
    %154 = vector.load %arg16[%c0_147, %c0_148] : memref<32x128xf32, #tpu.memory_space<vmem>>, vector<16x128xf32>
    %c0_149 = arith.constant 0 : index
    %c0_150 = arith.constant 0 : index
    %c0_151 = arith.constant 0 : index
    %155 = vector.load %arg7[%c0_149, %c0_150, %c0_151] : memref<5x128x128xf32, #tpu.memory_space<vmem>>, vector<1x128x128xf32>
    %156 = vector.shape_cast %155 : vector<1x128x128xf32> to vector<128x128xf32>
    %cst_152 = arith.constant dense<0.000000e+00> : vector<16x128xf32>
    %157 = tpu.matmul %154, %156, %cst_152 {dimension_numbers = #tpu.dot_dimension_numbers<[1], [0], [0], [1], [0, 0, 1, 1], [], []>} : vector<16x128xf32>, vector<128x128xf32>, vector<16x128xf32> -> vector<16x128xf32>
    %158 = arith.addf %153, %157 : vector<16x128xf32>
    %c1_153 = arith.constant 1 : index
    %c0_154 = arith.constant 0 : index
    %159 = vector.load %arg16[%c1_153, %c0_154] : memref<32x128xf32, #tpu.memory_space<vmem>>, vector<16x128xf32>
    %c1_155 = arith.constant 1 : index
    %c0_156 = arith.constant 0 : index
    %c0_157 = arith.constant 0 : index
    %160 = vector.load %arg7[%c1_155, %c0_156, %c0_157] : memref<5x128x128xf32, #tpu.memory_space<vmem>>, vector<1x128x128xf32>
    %161 = vector.shape_cast %160 : vector<1x128x128xf32> to vector<128x128xf32>
    %cst_158 = arith.constant dense<0.000000e+00> : vector<16x128xf32>
    %162 = tpu.matmul %159, %161, %cst_158 {dimension_numbers = #tpu.dot_dimension_numbers<[1], [0], [0], [1], [0, 0, 1, 1], [], []>} : vector<16x128xf32>, vector<128x128xf32>, vector<16x128xf32> -> vector<16x128xf32>
    %163 = arith.addf %158, %162 : vector<16x128xf32>
    %c2_159 = arith.constant 2 : index
    %c0_160 = arith.constant 0 : index
    %164 = vector.load %arg16[%c2_159, %c0_160] : memref<32x128xf32, #tpu.memory_space<vmem>>, vector<16x128xf32>
    %c2_161 = arith.constant 2 : index
    %c0_162 = arith.constant 0 : index
    %c0_163 = arith.constant 0 : index
    %165 = vector.load %arg7[%c2_161, %c0_162, %c0_163] : memref<5x128x128xf32, #tpu.memory_space<vmem>>, vector<1x128x128xf32>
    %166 = vector.shape_cast %165 : vector<1x128x128xf32> to vector<128x128xf32>
    %cst_164 = arith.constant dense<0.000000e+00> : vector<16x128xf32>
    %167 = tpu.matmul %164, %166, %cst_164 {dimension_numbers = #tpu.dot_dimension_numbers<[1], [0], [0], [1], [0, 0, 1, 1], [], []>} : vector<16x128xf32>, vector<128x128xf32>, vector<16x128xf32> -> vector<16x128xf32>
    %168 = arith.addf %163, %167 : vector<16x128xf32>
    %c3_165 = arith.constant 3 : index
    %c0_166 = arith.constant 0 : index
    %169 = vector.load %arg16[%c3_165, %c0_166] : memref<32x128xf32, #tpu.memory_space<vmem>>, vector<16x128xf32>
    %c3_167 = arith.constant 3 : index
    %c0_168 = arith.constant 0 : index
    %c0_169 = arith.constant 0 : index
    %170 = vector.load %arg7[%c3_167, %c0_168, %c0_169] : memref<5x128x128xf32, #tpu.memory_space<vmem>>, vector<1x128x128xf32>
    %171 = vector.shape_cast %170 : vector<1x128x128xf32> to vector<128x128xf32>
    %cst_170 = arith.constant dense<0.000000e+00> : vector<16x128xf32>
    %172 = tpu.matmul %169, %171, %cst_170 {dimension_numbers = #tpu.dot_dimension_numbers<[1], [0], [0], [1], [0, 0, 1, 1], [], []>} : vector<16x128xf32>, vector<128x128xf32>, vector<16x128xf32> -> vector<16x128xf32>
    %173 = arith.addf %168, %172 : vector<16x128xf32>
    %c4_171 = arith.constant 4 : index
    %c0_172 = arith.constant 0 : index
    %174 = vector.load %arg16[%c4_171, %c0_172] : memref<32x128xf32, #tpu.memory_space<vmem>>, vector<16x128xf32>
    %c4_173 = arith.constant 4 : index
    %c0_174 = arith.constant 0 : index
    %c0_175 = arith.constant 0 : index
    %175 = vector.load %arg7[%c4_173, %c0_174, %c0_175] : memref<5x128x128xf32, #tpu.memory_space<vmem>>, vector<1x128x128xf32>
    %176 = vector.shape_cast %175 : vector<1x128x128xf32> to vector<128x128xf32>
    %cst_176 = arith.constant dense<0.000000e+00> : vector<16x128xf32>
    %177 = tpu.matmul %174, %176, %cst_176 {dimension_numbers = #tpu.dot_dimension_numbers<[1], [0], [0], [1], [0, 0, 1, 1], [], []>} : vector<16x128xf32>, vector<128x128xf32>, vector<16x128xf32> -> vector<16x128xf32>
    %178 = arith.addf %173, %177 : vector<16x128xf32>
    %c0_177 = arith.constant 0 : index
    %c0_178 = arith.constant 0 : index
    %c0_179 = arith.constant 0 : index
    %179 = vector.load %arg13[%c0_177, %c0_178, %c0_179] : memref<1x16x128xf32, #tpu.memory_space<vmem>>, vector<1x16x128xf32>
    %180 = vector.shape_cast %179 : vector<1x16x128xf32> to vector<16x128xf32>
    %181 = vector.shape_cast %178 : vector<16x128xf32> to vector<1x16x128xf32>
    tpu.vector_store %arg13[%c0_177, %c0_178, %c0_179], %181 {strides = array<i32>} : memref<1x16x128xf32, #tpu.memory_space<vmem>>, vector<1x16x128xf32>,
    return
  }
  func.func @transform_1(%arg0: i32, %arg1: i32) -> (i32, i32, i32) {
    %c0_i32 = arith.constant 0 : i32
    %c0_i32_0 = arith.constant 0 : i32
    %c0_i32_1 = arith.constant 0 : i32
    %c0_i32_2 = arith.constant 0 : i32
    return %c0_i32, %c0_i32_0, %c0_i32_1 : i32, i32, i32
  }
  func.func @transform_2(%arg0: i32, %arg1: i32) -> (i32, i32, i32) {
    %c0_i32 = arith.constant 0 : i32
    %c0_i32_0 = arith.constant 0 : i32
    %c0_i32_1 = arith.constant 0 : i32
    %c0_i32_2 = arith.constant 0 : i32
    return %c0_i32, %c0_i32_0, %c0_i32_1 : i32, i32, i32
  }
  func.func @transform_3(%arg0: i32, %arg1: i32) -> (i32, i32, i32) {
    %c0_i32 = arith.constant 0 : i32
    %c0_i32_0 = arith.constant 0 : i32
    %c0_i32_1 = arith.constant 0 : i32
    %c0_i32_2 = arith.constant 0 : i32
    return %c0_i32, %c0_i32_0, %c0_i32_1 : i32, i32, i32
  }
  func.func @transform_4(%arg0: i32, %arg1: i32) -> (i32, i32, i32) {
    %c0_i32 = arith.constant 0 : i32
    %c0_i32_0 = arith.constant 0 : i32
    %c0_i32_1 = arith.constant 0 : i32
    %c0_i32_2 = arith.constant 0 : i32
    return %c0_i32, %c0_i32_0, %c0_i32_1 : i32, i32, i32
  }
  func.func @transform_5(%arg0: i32, %arg1: i32) -> (i32, i32, i32) {
    %c0_i32 = arith.constant 0 : i32
    %c0_i32_0 = arith.constant 0 : i32
    %c0_i32_1 = arith.constant 0 : i32
    %c0_i32_2 = arith.constant 0 : i32
    return %c0_i32, %c0_i32_0, %c0_i32_1 : i32, i32, i32
  }
  func.func @transform_6(%arg0: i32, %arg1: i32) -> (i32, i32) {
    %c0_i32 = arith.constant 0 : i32
    %c0_i32_0 = arith.constant 0 : i32
    %c0_i32_1 = arith.constant 0 : i32
    return %c0_i32, %c0_i32_0 : i32, i32
  }
  func.func @transform_7(%arg0: i32, %arg1: i32) -> (i32, i32) {
    %c0_i32 = arith.constant 0 : i32
    %c0_i32_0 = arith.constant 0 : i32
    %c0_i32_1 = arith.constant 0 : i32
    return %c0_i32, %c0_i32_0 : i32, i32
  }
  func.func @transform_8(%arg0: i32, %arg1: i32) -> (i32, i32) {
    %c0_i32 = arith.constant 0 : i32
    %c0_i32_0 = arith.constant 0 : i32
    %c0_i32_1 = arith.constant 0 : i32
    return %c0_i32, %c0_i32_0 : i32, i32
  }
  func.func @transform_9(%arg0: i32, %arg1: i32) -> (i32, i32) {
    %c0_i32 = arith.constant 0 : i32
    %c0_i32_0 = arith.constant 0 : i32
    %c0_i32_1 = arith.constant 0 : i32
    return %c0_i32, %c0_i32_0 : i32, i32
  }
  func.func @transform_10(%arg0: i32, %arg1: i32) -> (i32, i32) {
    %c0_i32 = arith.constant 0 : i32
    %c0_i32_0 = arith.constant 0 : i32
    %c0_i32_1 = arith.constant 0 : i32
    return %c0_i32, %c0_i32_0 : i32, i32
  }
  func.func @transform_11(%arg0: i32, %arg1: i32) -> (i32, i32, i32) {
    %c0_i32 = arith.constant 0 : i32
    %c0_i32_0 = arith.constant 0 : i32
    return %arg0, %arg1, %c0_i32 : i32, i32, i32
  }
}

</mosaic_0001>

<llo_original>
// kernel: tpu_custom_call.1
$region0: #{tpu_custom_call.1}
  #allocation0 [shape = 'u32[]', space=smem, size = 0x4, offset = 0x4, fixed_abs, tag = 'smem constant byte address 0x4 - core index']
  #allocation1 [shape = 'u32[144,128]{1,0:T(1,128)}', space=vmem, size = 0x12000, scoped, tag = 'internal scratch']
  #allocation2 [shape = 'f32[36,128]{1,0:T(8,128)}', space=vmem, size = 0x5000, scoped, tag = 'scratch operand']
  #allocation3 [shape = 'f32[32,128]{1,0:T(8,128)}', space=vmem, size = 0x4000, scoped, tag = 'scratch operand']
  #allocation4 [shape = 'f32[32,128]{1,0:T(8,128)}', space=vmem, size = 0x4000, scoped, tag = 'scratch operand']
  #allocation5 [shape = 's32[1]{0}', space=sflag, size = 0x4, scoped, tag = 'scratch operand']
  #allocation16 [shape = 's32[]', space=sflag, size = 0x4, offset = 0, fixed_abs, tag = 'sflag constant byte address 0x0 - dummy sync flag']
  %s0 = inlined_call_operand.vmem [shape: f32[2,36,128], index: 0, kind: input, shape index: {}]
  %s1 = inlined_call_operand.hbm [shape: f32[5,128,128], index: 1, kind: input, shape index: {}]
  %s2 = inlined_call_operand.hbm [shape: f32[5,128,128], index: 2, kind: input, shape index: {}]
  %s3 = inlined_call_operand.hbm [shape: f32[5,128,128], index: 3, kind: input, shape index: {}]
  %s4 = inlined_call_operand.hbm [shape: f32[5,128,128], index: 4, kind: input, shape index: {}]
  %s5 = inlined_call_operand.hbm [shape: f32[5,128,128], index: 5, kind: input, shape index: {}]
  %s6 = inlined_call_operand.vmem [shape: f32[1,128], index: 6, kind: input, shape index: {}]
  %s7 = inlined_call_operand.vmem [shape: f32[1,128], index: 7, kind: input, shape index: {}]
  %s8 = inlined_call_operand.vmem [shape: f32[1,128], index: 8, kind: input, shape index: {}]
  %s9 = inlined_call_operand.vmem [shape: f32[1,128], index: 9, kind: input, shape index: {}]
  %s10 = inlined_call_operand.vmem [shape: f32[1,128], index: 10, kind: input, shape index: {}]
  %s11 = inlined_call_operand.hbm [shape: f32[2,16,128], index: 11, kind: output, shape index: {}]
  %s12 = sld [smem:[#allocation0]]
  $region146: #{tpu_custom_call.1} parent=0
    _
  %s14 = ssub.s32 1, %s12
  %s15 = scalar_select 0, %s14, %s12
  $region1: #{tpu_custom_call.1} parent=0
    #allocation6 [shape = 'u8[327680]{0}', space=vmem, size = 0x50000, scoped, tag = 'input window, operand 1, single buffered']
    #allocation7 [shape = 's32[2]{0}', space=sflag, size = 0x8, scoped, tag = 'scoped memory for tpu_custom_call.1']
    #allocation8 [shape = 's32[2]{0}', space=sflag, size = 0x8, scoped, tag = 'scoped memory for tpu_custom_call.1']
    #allocation9 [shape = 'u8[327680]{0}', space=vmem, size = 0x50000, scoped, tag = 'input window, operand 2, single buffered']
    #allocation10 [shape = 's32[1]{0}', space=sflag, size = 0x4, scoped, tag = 'scoped memory for tpu_custom_call.1']
    #allocation11 [shape = 'u8[327680]{0}', space=vmem, size = 0x50000, scoped, tag = 'input window, operand 3, single buffered']
    #allocation12 [shape = 'u8[327680]{0}', space=vmem, size = 0x50000, scoped, tag = 'input window, operand 4, single buffered']
    #allocation13 [shape = 's32[1]{0}', space=sflag, size = 0x4, scoped, tag = 'scoped memory for tpu_custom_call.1']
    #allocation14 [shape = 'u8[327680]{0}', space=vmem, size = 0x50000, scoped, tag = 'input window, operand 5, single buffered']
    #allocation15 [shape = 'u8[16384]{0}', space=vmem, size = 0x4000, scoped, tag = 'output window, operand 0']
    %16 = vsyncpa [#allocation7], 0
    %17 = vsyncpa [#allocation10], 0
    %18 = vsyncpa [#allocation13], 0
    %19 = vsyncpa [#allocation8], 0
    %s20 = scalar_lea.sflag [#allocation8], 1
    %21 = vsyncpa %s20, 0
    loop: start=0, step=1, limit=4
    $region2: #{tpu_custom_call.1} parent=1 // loop_pre_header
      _
    $region3: #{tpu_custom_call.1} parent=1 // loop_header
      %s23 = sphi 0, %s27
      %p24 = scmp.ge.s32.totalorder %s23, 4
      %s30 = sphi 0, %s42
      %s31 = sphi 0, %s38
      %s32 = sphi 0, %s30
      %s33 = sphi 0, %s31
      %s34 = sphi 0, %s32
      %s35 = sphi 0, %s33
      %s43 = sphi 0, %s43
      %s45 = sphi 0, %s43
      %s46 = sphi 0, %s45
      %s60 = sphi 0, %s46
      %s64 = sphi 0, %s64
      %s66 = sphi 0, %s64
      %s67 = sphi 0, %s66
      %s81 = sphi 0, %s67
      %s85 = sphi 0, %s85
      %s87 = sphi 0, %s85
      %s88 = sphi 0, %s87
      %s102 = sphi 0, %s88
      %s106 = sphi 0, %s106
      %s108 = sphi 0, %s106
      %s109 = sphi 0, %s108
      %s123 = sphi 0, %s109
      %s127 = sphi 0, %s127
      %s129 = sphi 0, %s127
      %s130 = sphi 0, %s129
      %s144 = sphi 0, %s130
      %s148 = sphi 0, %s148
      %s150 = sphi 0, %s148
      %s151 = sphi 0, %s150
      %s165 = sphi 0, %s151
      %s169 = sphi 0, %s169
      %s171 = sphi 0, %s169
      %s172 = sphi 0, %s171
      %s186 = sphi 0, %s172
      %s190 = sphi 0, %s190
      %s192 = sphi 0, %s190
      %s193 = sphi 0, %s192
      %s207 = sphi 0, %s193
      %s211 = sphi 0, %s211
      %s213 = sphi 0, %s211
      %s214 = sphi 0, %s213
      %s228 = sphi 0, %s214
      %s232 = sphi 0, %s232
      %s234 = sphi 0, %s232
      %s235 = sphi 0, %s234
      %s249 = sphi 0, %s235
      %s257 = sphi 0, %s259
      %s260 = sphi 0, %s257
      %s261 = sphi 0, %s260
      %s277 = sphi 0, %s261
    $region4: #{tpu_custom_call.1} parent=1 // loop_header_branch
      %26 = sbr.rel (%p24) target = $region8
    $region5: #{tpu_custom_call.1} parent=1 // loop_body
      %s28 = ssub.s32 %s23, 1
      %s29 = ssub.s32 %s23, 2
      %s36 = sadd.s32 1, %s31
      %p37 = scmp.ge.s32.totalorder %s36, 1
      %s38 = scalar_select %p37, 0, %s36
      %s39 = sadd.s32 1, %s30
      %s40 = scalar_select %p37, %s39, %s30
      %p41 = scmp.ge.s32.totalorder %s40, 2
      %s42 = scalar_select %p41, 0, %s40
      %s44 = sadd.s32 %s43, 1
      %p47 = scmp.eq.s32.totalorder %s23, 1
      %p48 = scmp.ne.s32.totalorder %s43, %s45
      %p49 = scmp.eq.s32.totalorder %s23, 0
      %p50 = por %p48, %p49
      %p51 = scmp.ne.s32.totalorder %s43, %s45
      %p52 = scmp.eq.s32.totalorder %s28, 1
      %p53 = por %p51, %p52
      %p54 = scmp.ne.s32.totalorder %s45, %s46
      %p55 = scmp.eq.s32.totalorder %s28, 0
      %p56 = por %p54, %p55
      %p57 = scmp.ne.s32.totalorder %s45, %s46
      %p58 = scmp.eq.s32.totalorder %s29, 1
      %p59 = por %p57, %p58
      %p61 = scmp.ne.s32.totalorder %s46, %s60
      %p62 = scmp.eq.s32.totalorder %s29, 0
      %p63 = por %p61, %p62
      %s65 = sadd.s32 %s64, 1
      %p68 = scmp.eq.s32.totalorder %s23, 1
      %p69 = scmp.ne.s32.totalorder %s64, %s66
      %p70 = scmp.eq.s32.totalorder %s23, 0
      %p71 = por %p69, %p70
      %p72 = scmp.ne.s32.totalorder %s64, %s66
      %p73 = scmp.eq.s32.totalorder %s28, 1
      %p74 = por %p72, %p73
      %p75 = scmp.ne.s32.totalorder %s66, %s67
      %p76 = scmp.eq.s32.totalorder %s28, 0
      %p77 = por %p75, %p76
      %p78 = scmp.ne.s32.totalorder %s66, %s67
      %p79 = scmp.eq.s32.totalorder %s29, 1
      %p80 = por %p78, %p79
      %p82 = scmp.ne.s32.totalorder %s67, %s81
      %p83 = scmp.eq.s32.totalorder %s29, 0
      %p84 = por %p82, %p83
      %s86 = sadd.s32 %s85, 1
      %p89 = scmp.eq.s32.totalorder %s23, 1
      %p90 = scmp.ne.s32.totalorder %s85, %s87
      %p91 = scmp.eq.s32.totalorder %s23, 0
      %p92 = por %p90, %p91
      %p93 = scmp.ne.s32.totalorder %s85, %s87
      %p94 = scmp.eq.s32.totalorder %s28, 1
      %p95 = por %p93, %p94
      %p96 = scmp.ne.s32.totalorder %s87, %s88
      %p97 = scmp.eq.s32.totalorder %s28, 0
      %p98 = por %p96, %p97
      %p99 = scmp.ne.s32.totalorder %s87, %s88
      %p100 = scmp.eq.s32.totalorder %s29, 1
      %p101 = por %p99, %p100
      %p103 = scmp.ne.s32.totalorder %s88, %s102
      %p104 = scmp.eq.s32.totalorder %s29, 0
      %p105 = por %p103, %p104
      %s107 = sadd.s32 %s106, 1
      %p110 = scmp.eq.s32.totalorder %s23, 1
      %p111 = scmp.ne.s32.totalorder %s106, %s108
      %p112 = scmp.eq.s32.totalorder %s23, 0
      %p113 = por %p111, %p112
      %p114 = scmp.ne.s32.totalorder %s106, %s108
      %p115 = scmp.eq.s32.totalorder %s28, 1
      %p116 = por %p114, %p115
      %p117 = scmp.ne.s32.totalorder %s108, %s109
      %p118 = scmp.eq.s32.totalorder %s28, 0
      %p119 = por %p117, %p118
      %p120 = scmp.ne.s32.totalorder %s108, %s109
      %p121 = scmp.eq.s32.totalorder %s29, 1
      %p122 = por %p120, %p121
      %p124 = scmp.ne.s32.totalorder %s109, %s123
      %p125 = scmp.eq.s32.totalorder %s29, 0
      %p126 = por %p124, %p125
      %s128 = sadd.s32 %s127, 1
      %p131 = scmp.eq.s32.totalorder %s23, 1
      %p132 = scmp.ne.s32.totalorder %s127, %s129
      %p133 = scmp.eq.s32.totalorder %s23, 0
      %p134 = por %p132, %p133
      %p135 = scmp.ne.s32.totalorder %s127, %s129
      %p136 = scmp.eq.s32.totalorder %s28, 1
      %p137 = por %p135, %p136
      %p138 = scmp.ne.s32.totalorder %s129, %s130
      %p139 = scmp.eq.s32.totalorder %s28, 0
      %p140 = por %p138, %p139
      %p141 = scmp.ne.s32.totalorder %s129, %s130
      %p142 = scmp.eq.s32.totalorder %s29, 1
      %p143 = por %p141, %p142
      %p145 = scmp.ne.s32.totalorder %s130, %s144
      %p146 = scmp.eq.s32.totalorder %s29, 0
      %p147 = por %p145, %p146
      %s149 = sadd.s32 %s148, 1
      %p152 = scmp.eq.s32.totalorder %s23, 1
      %p153 = scmp.ne.s32.totalorder %s148, %s150
      %p154 = scmp.eq.s32.totalorder %s23, 0
      %p155 = por %p153, %p154
      %p156 = scmp.ne.s32.totalorder %s148, %s150
      %p157 = scmp.eq.s32.totalorder %s28, 1
      %p158 = por %p156, %p157
      %p159 = scmp.ne.s32.totalorder %s150, %s151
      %p160 = scmp.eq.s32.totalorder %s28, 0
      %p161 = por %p159, %p160
      %p162 = scmp.ne.s32.totalorder %s150, %s151
      %p163 = scmp.eq.s32.totalorder %s29, 1
      %p164 = por %p162, %p163
      %p166 = scmp.ne.s32.totalorder %s151, %s165
      %p167 = scmp.eq.s32.totalorder %s29, 0
      %p168 = por %p166, %p167
      %s170 = sadd.s32 %s169, 1
      %p173 = scmp.eq.s32.totalorder %s23, 1
      %p174 = scmp.ne.s32.totalorder %s169, %s171
      %p175 = scmp.eq.s32.totalorder %s23, 0
      %p176 = por %p174, %p175
      %p177 = scmp.ne.s32.totalorder %s169, %s171
      %p178 = scmp.eq.s32.totalorder %s28, 1
      %p179 = por %p177, %p178
      %p180 = scmp.ne.s32.totalorder %s171, %s172
      %p181 = scmp.eq.s32.totalorder %s28, 0
      %p182 = por %p180, %p181
      %p183 = scmp.ne.s32.totalorder %s171, %s172
      %p184 = scmp.eq.s32.totalorder %s29, 1
      %p185 = por %p183, %p184
      %p187 = scmp.ne.s32.totalorder %s172, %s186
      %p188 = scmp.eq.s32.totalorder %s29, 0
      %p189 = por %p187, %p188
      %s191 = sadd.s32 %s190, 1
      %p194 = scmp.eq.s32.totalorder %s23, 1
      %p195 = scmp.ne.s32.totalorder %s190, %s192
      %p196 = scmp.eq.s32.totalorder %s23, 0
      %p197 = por %p195, %p196
      %p198 = scmp.ne.s32.totalorder %s190, %s192
      %p199 = scmp.eq.s32.totalorder %s28, 1
      %p200 = por %p198, %p199
      %p201 = scmp.ne.s32.totalorder %s192, %s193
      %p202 = scmp.eq.s32.totalorder %s28, 0
      %p203 = por %p201, %p202
      %p204 = scmp.ne.s32.totalorder %s192, %s193
      %p205 = scmp.eq.s32.totalorder %s29, 1
      %p206 = por %p204, %p205
      %p208 = scmp.ne.s32.totalorder %s193, %s207
      %p209 = scmp.eq.s32.totalorder %s29, 0
      %p210 = por %p208, %p209
      %s212 = sadd.s32 %s211, 1
      %p215 = scmp.eq.s32.totalorder %s23, 1
      %p216 = scmp.ne.s32.totalorder %s211, %s213
      %p217 = scmp.eq.s32.totalorder %s23, 0
      %p218 = por %p216, %p217
      %p219 = scmp.ne.s32.totalorder %s211, %s213
      %p220 = scmp.eq.s32.totalorder %s28, 1
      %p221 = por %p219, %p220
      %p222 = scmp.ne.s32.totalorder %s213, %s214
      %p223 = scmp.eq.s32.totalorder %s28, 0
      %p224 = por %p222, %p223
      %p225 = scmp.ne.s32.totalorder %s213, %s214
      %p226 = scmp.eq.s32.totalorder %s29, 1
      %p227 = por %p225, %p226
      %p229 = scmp.ne.s32.totalorder %s214, %s228
      %p230 = scmp.eq.s32.totalorder %s29, 0
      %p231 = por %p229, %p230
      %s233 = sadd.s32 %s232, 1
      %p236 = scmp.eq.s32.totalorder %s23, 1
      %p237 = scmp.ne.s32.totalorder %s232, %s234
      %p238 = scmp.eq.s32.totalorder %s23, 0
      %p239 = por %p237, %p238
      %p240 = scmp.ne.s32.totalorder %s232, %s234
      %p241 = scmp.eq.s32.totalorder %s28, 1
      %p242 = por %p240, %p241
      %p243 = scmp.ne.s32.totalorder %s234, %s235
      %p244 = scmp.eq.s32.totalorder %s28, 0
      %p245 = por %p243, %p244
      %p246 = scmp.ne.s32.totalorder %s234, %s235
      %p247 = scmp.eq.s32.totalorder %s29, 1
      %p248 = por %p246, %p247
      %p250 = scmp.ne.s32.totalorder %s235, %s249
      %p251 = scmp.eq.s32.totalorder %s29, 0
      %p252 = por %p250, %p251
      %s253 = ssub.s32 %s30, %s42
      %s254 = ssub.s32 %s31, %s38
      %s255 = sor.u32 %s253, %s254
      %p256 = scmp.eq.s32.totalorder %s255, 0
      %s258 = sadd.s32 %s257, 1
      %s259 = scalar_select %p256, %s257, %s258
      %p262 = pneg %p256
      %p263 = scmp.eq.s32.totalorder %s23, 1
      %p264 = por %p262, %p263
      %p265 = scmp.ne.s32.totalorder %s257, %s260
      %p266 = scmp.eq.s32.totalorder %s23, 0
      %p267 = por %p265, %p266
      %p268 = scmp.ne.s32.totalorder %s257, %s260
      %p269 = scmp.eq.s32.totalorder %s28, 1
      %p270 = por %p268, %p269
      %p271 = scmp.ne.s32.totalorder %s260, %s261
      %p272 = scmp.eq.s32.totalorder %s28, 0
      %p273 = por %p271, %p272
      %p274 = scmp.ne.s32.totalorder %s260, %s261
      %p275 = scmp.eq.s32.totalorder %s29, 1
      %p276 = por %p274, %p275
      %p278 = scmp.ne.s32.totalorder %s261, %s277
      %p279 = scmp.eq.s32.totalorder %s29, 0
      %p280 = por %p278, %p279
      %p281 = scmp.le.s32.totalorder 1, %s23
      %p282 = scmp.lt.s32.totalorder %s23, 3
      %p283 = pnand %p281, %p282
      %p284 = pneg %p283
      // Predicated region
      $region9: #{tpu_custom_call.1} parent=5 // pred_check
        _
      $region10: #{tpu_custom_call.1} parent=5 // pred_check_branch
        %286 = sbr.rel (%p283) target = $region12
      $region11: #{tpu_custom_call.1} parent=5 // pred_region
        %s287 = ssub.s32 %s23, 1
        // Predicated region
        $region13: #{tpu_custom_call.1} parent=11 // pred_check
          %p288 = pneg %p56
        $region14: #{tpu_custom_call.1} parent=11 // pred_check_branch
          %290 = sbr.rel (%p288) target = $region16
        $region15: #{tpu_custom_call.1} parent=11 // pred_region
          %s292 = ssub.s32 10240, 10240
          %293 = vsyncadd [#allocation7], %s292
          %s294 = sshll.u32 [#allocation6], 4
          %s295 = int_to_ptr.vmem [resolvable:$true] %s294
          %300 = dma.hbm_to_vmem [thread:$0]  %s1, 10240, %s295, [#allocation7], 128, 128, 8
        $region16: #{tpu_custom_call.1} parent=11 // pred_fallthru
          _
        // Predicated region
        $region17: #{tpu_custom_call.1} parent=11 // pred_check
          %p301 = pneg %p77
        $region18: #{tpu_custom_call.1} parent=11 // pred_check_branch
          %303 = sbr.rel (%p301) target = $region20
        $region19: #{tpu_custom_call.1} parent=11 // pred_region
          %s305 = ssub.s32 10240, 10240
          %306 = vsyncadd [#allocation10], %s305
          %s307 = sshll.u32 [#allocation9], 4
          %s308 = int_to_ptr.vmem [resolvable:$true] %s307
          %313 = dma.hbm_to_vmem [thread:$0]  %s2, 10240, %s308, [#allocation10], 128, 128, 8
        $region20: #{tpu_custom_call.1} parent=11 // pred_fallthru
          _
        // Predicated region
        $region21: #{tpu_custom_call.1} parent=11 // pred_check
          %p314 = pneg %p98
        $region22: #{tpu_custom_call.1} parent=11 // pred_check_branch
          %316 = sbr.rel (%p314) target = $region24
        $region23: #{tpu_custom_call.1} parent=11 // pred_region
          %s318 = ssub.s32 10240, 10240
          %319 = vsyncadd [#allocation10], %s318
          %s320 = sshll.u32 [#allocation11], 4
          %s321 = int_to_ptr.vmem [resolvable:$true] %s320
          %326 = dma.hbm_to_vmem [thread:$0]  %s3, 10240, %s321, [#allocation10], 128, 128, 8
        $region24: #{tpu_custom_call.1} parent=11 // pred_fallthru
          _
        // Predicated region
        $region25: #{tpu_custom_call.1} parent=11 // pred_check
          %p327 = pneg %p119
        $region26: #{tpu_custom_call.1} parent=11 // pred_check_branch
          %329 = sbr.rel (%p327) target = $region28
        $region27: #{tpu_custom_call.1} parent=11 // pred_region
          %s331 = ssub.s32 10240, 10240
          %332 = vsyncadd [#allocation13], %s331
          %s333 = sshll.u32 [#allocation12], 4
          %s334 = int_to_ptr.vmem [resolvable:$true] %s333
          %339 = dma.hbm_to_vmem [thread:$0]  %s4, 10240, %s334, [#allocation13], 128, 128, 8
        $region28: #{tpu_custom_call.1} parent=11 // pred_fallthru
          _
        // Predicated region
        $region29: #{tpu_custom_call.1} parent=11 // pred_check
          %p340 = pneg %p140
        $region30: #{tpu_custom_call.1} parent=11 // pred_check_branch
          %342 = sbr.rel (%p340) target = $region32
        $region31: #{tpu_custom_call.1} parent=11 // pred_region
          %s344 = ssub.s32 10240, 10240
          %345 = vsyncadd [#allocation13], %s344
          %s346 = sshll.u32 [#allocation14], 4
          %s347 = int_to_ptr.vmem [resolvable:$true] %s346
          %352 = dma.hbm_to_vmem [thread:$0]  %s5, 10240, %s347, [#allocation13], 128, 128, 8
        $region32: #{tpu_custom_call.1} parent=11 // pred_fallthru
          _
        // Predicated region
        $region33: #{tpu_custom_call.1} parent=11 // pred_check
          %p353 = pneg %p161
        $region34: #{tpu_custom_call.1} parent=11 // pred_check_branch
          %355 = sbr.rel (%p353) target = $region36
        $region35: #{tpu_custom_call.1} parent=11 // pred_region
          _
        $region36: #{tpu_custom_call.1} parent=11 // pred_fallthru
          _
        // Predicated region
        $region37: #{tpu_custom_call.1} parent=11 // pred_check
          %p356 = pneg %p182
        $region38: #{tpu_custom_call.1} parent=11 // pred_check_branch
          %358 = sbr.rel (%p356) target = $region40
        $region39: #{tpu_custom_call.1} parent=11 // pred_region
          _
        $region40: #{tpu_custom_call.1} parent=11 // pred_fallthru
          _
        // Predicated region
        $region41: #{tpu_custom_call.1} parent=11 // pred_check
          %p359 = pneg %p203
        $region42: #{tpu_custom_call.1} parent=11 // pred_check_branch
          %361 = sbr.rel (%p359) target = $region44
        $region43: #{tpu_custom_call.1} parent=11 // pred_region
          _
        $region44: #{tpu_custom_call.1} parent=11 // pred_fallthru
          _
        // Predicated region
        $region45: #{tpu_custom_call.1} parent=11 // pred_check
          %p362 = pneg %p224
        $region46: #{tpu_custom_call.1} parent=11 // pred_check_branch
          %364 = sbr.rel (%p362) target = $region48
        $region47: #{tpu_custom_call.1} parent=11 // pred_region
          _
        $region48: #{tpu_custom_call.1} parent=11 // pred_fallthru
          _
        // Predicated region
        $region49: #{tpu_custom_call.1} parent=11 // pred_check
          %p365 = pneg %p245
        $region50: #{tpu_custom_call.1} parent=11 // pred_check_branch
          %367 = sbr.rel (%p365) target = $region52
        $region51: #{tpu_custom_call.1} parent=11 // pred_region
          _
        $region52: #{tpu_custom_call.1} parent=11 // pred_fallthru
          _
      $region12: #{tpu_custom_call.1} parent=5 // pred_fallthru
        _
      %p368 = scmp.lt.s32.totalorder %s23, 2
      // Predicated region
      $region53: #{tpu_custom_call.1} parent=5 // pred_check
        %p369 = pneg %p368
      $region54: #{tpu_custom_call.1} parent=5 // pred_check_branch
        %371 = sbr.rel (%p369) target = $region56
      $region55: #{tpu_custom_call.1} parent=5 // pred_region
        _
      $region56: #{tpu_custom_call.1} parent=5 // pred_fallthru
        _
      %p372 = scmp.le.s32.totalorder 1, %s23
      %p373 = scmp.lt.s32.totalorder %s23, 3
      %p374 = pnand %p372, %p373
      %p375 = pneg %p374
      // Predicated region
      $region57: #{tpu_custom_call.1} parent=5 // pred_check
        _
      $region58: #{tpu_custom_call.1} parent=5 // pred_check_branch
        %377 = sbr.rel (%p374) target = $region60
      $region59: #{tpu_custom_call.1} parent=5 // pred_region
        %s378 = ssub.s32 %s23, 1
        // Predicated region
        $region61: #{tpu_custom_call.1} parent=59 // pred_check
          %p379 = pneg %p56
        $region62: #{tpu_custom_call.1} parent=59 // pred_check_branch
          %381 = sbr.rel (%p379) target = $region64
        $region63: #{tpu_custom_call.1} parent=59 // pred_region
          %382 = dma.done [#allocation7], 10240
        $region64: #{tpu_custom_call.1} parent=59 // pred_fallthru
          _
        // Predicated region
        $region65: #{tpu_custom_call.1} parent=59 // pred_check
          %p383 = pneg %p77
        $region66: #{tpu_custom_call.1} parent=59 // pred_check_branch
          %385 = sbr.rel (%p383) target = $region68
        $region67: #{tpu_custom_call.1} parent=59 // pred_region
          %386 = dma.done [#allocation10], 10240
        $region68: #{tpu_custom_call.1} parent=59 // pred_fallthru
          _
        // Predicated region
        $region69: #{tpu_custom_call.1} parent=59 // pred_check
          %p387 = pneg %p98
        $region70: #{tpu_custom_call.1} parent=59 // pred_check_branch
          %389 = sbr.rel (%p387) target = $region72
        $region71: #{tpu_custom_call.1} parent=59 // pred_region
          %390 = dma.done [#allocation10], 10240
        $region72: #{tpu_custom_call.1} parent=59 // pred_fallthru
          _
        // Predicated region
        $region73: #{tpu_custom_call.1} parent=59 // pred_check
          %p391 = pneg %p119
        $region74: #{tpu_custom_call.1} parent=59 // pred_check_branch
          %393 = sbr.rel (%p391) target = $region76
        $region75: #{tpu_custom_call.1} parent=59 // pred_region
          %394 = dma.done [#allocation13], 10240
        $region76: #{tpu_custom_call.1} parent=59 // pred_fallthru
          _
        // Predicated region
        $region77: #{tpu_custom_call.1} parent=59 // pred_check
          %p395 = pneg %p140
        $region78: #{tpu_custom_call.1} parent=59 // pred_check_branch
          %397 = sbr.rel (%p395) target = $region80
        $region79: #{tpu_custom_call.1} parent=59 // pred_region
          %398 = dma.done [#allocation13], 10240
        $region80: #{tpu_custom_call.1} parent=59 // pred_fallthru
          _
        %p399 = pneg %p56
        %p400 = pneg %p53
        %p401 = pneg %p77
        %p402 = pneg %p74
        %p403 = pneg %p98
        %p404 = pneg %p95
        %p405 = pneg %p119
        %p406 = pneg %p116
        %p407 = pneg %p140
        %p408 = pneg %p137
        %p409 = pneg %p161
        %p410 = pneg %p158
        %p411 = pneg %p182
        %p412 = pneg %p179
        %p413 = pneg %p203
        %p414 = pneg %p200
        %p415 = pneg %p224
        %p416 = pneg %p221
        %p417 = pneg %p245
        %p418 = pneg %p242
        %p419 = pneg %p273
        %p420 = pneg %p270
        %s421 = sand.u32 %s260, 1
        %s422 = scalar_lea.sflag [#allocation8], %s421
        %s423 = sand.u32 %s260, 1
        %s424 = smul.addr %s423, 16
        %s425 = scalar_lea.vmem [#allocation15], %s424
        %s426 = smul.u32 2, %s33
        %s427 = smul.u32 %s33, 16
        %s428 = smul.u32 %s32, 40
        %s429 = sadd.s32 %s427, %s428
        %s430 = scalar_lea.vmem %s0, %s429
        %p432 = scmp.lt.u32.totalorder 36, 8
        %p433 = pneg %p432
        // Predicated region
        $region81: #{tpu_custom_call.1} parent=59 // pred_check
          _
        $region82: #{tpu_custom_call.1} parent=59 // pred_check_branch
          %435 = sbr.rel (%p432) target = $region84
        $region83: #{tpu_custom_call.1} parent=59 // pred_region
          %s451 = sand.u32 36, 7
          %p452 = scmp.eq.s32.totalorder %s451, 0
          %p453 = pneg %p452
          // Predicated region
          $region96: #{tpu_custom_call.1} parent=83 // pred_check
            _
          $region97: #{tpu_custom_call.1} parent=83 // pred_check_branch
            %455 = sbr.rel (%p452) target = $region99
          $region98: #{tpu_custom_call.1} parent=83 // pred_region
            %s456 = sand.u32 36, 7
            %s457 = ssub.s32 36, %s456
            %s458 = scalar_lea.vmem %s430, %s457
            %s459 = ssub.s32 36, %s456
            %s460 = scalar_lea.vmem [#allocation2], %s459
            loop: start=0, step=1, limit=1
            $region100: #{tpu_custom_call.1} parent=98 // loop_pre_header
              _
            $region101: #{tpu_custom_call.1} parent=98 // loop_header
              %s462 = sphi 0, %s466
              %p463 = scmp.ge.s32.totalorder %s462, 1
              %s467 = sphi %s430, %s430
              %s468 = sphi [#allocation2], [#allocation2]
            $region102: #{tpu_custom_call.1} parent=98 // loop_header_branch
              %465 = sbr.rel (%p463) target = $region106
            $region103: #{tpu_custom_call.1} parent=98 // loop_body
              %v469 = vld [vmem:[%s467] sm:$0xff]
              %470 = vst [vmem:[%s468] sm:$0xff] %v469
              %v471 = vld [vmem:[%s467 + $0x8] sm:$0xff]
              %472 = vst [vmem:[%s468 + $0x8] sm:$0xff] %v471
              %v473 = vld [vmem:[%s467 + $0x10] sm:$0xff]
              %474 = vst [vmem:[%s468 + $0x10] sm:$0xff] %v473
              %v475 = vld [vmem:[%s467 + $0x18] sm:$0xff]
              %476 = vst [vmem:[%s468 + $0x18] sm:$0xff] %v475
            $region104: #{tpu_custom_call.1} parent=98 // loop_footer
              %s466 = sadd.s32 1, %s462
            $region105: #{tpu_custom_call.1} parent=98 // loop_footer_branch
              %461 = sbr.rel target = $region101
            $region106: #{tpu_custom_call.1} parent=98 // loop_exit
              _
            %s477 = sshll.u32 1, %s456
            %s478 = ssub.s32 %s477, 1
            loop: start=0, step=1, limit=1
            $region107: #{tpu_custom_call.1} parent=98 // loop_pre_header
              _
            $region108: #{tpu_custom_call.1} parent=98 // loop_header
              %s480 = sphi 0, %s484
              %p481 = scmp.ge.s32.totalorder %s480, 1
              %s485 = sphi %s458, %s458
              %s486 = sphi %s460, %s460
            $region109: #{tpu_custom_call.1} parent=98 // loop_header_branch
              %483 = sbr.rel (%p481) target = $region113
            $region110: #{tpu_custom_call.1} parent=98 // loop_body
              %v487 = vld [vmem:[%s485] sm:%s478]
              %488 = vst [vmem:[%s486] sm:%s478] %v487
            $region111: #{tpu_custom_call.1} parent=98 // loop_footer
              %s484 = sadd.s32 1, %s480
            $region112: #{tpu_custom_call.1} parent=98 // loop_footer_branch
              %479 = sbr.rel target = $region108
            $region113: #{tpu_custom_call.1} parent=98 // loop_exit
              _
          $region99: #{tpu_custom_call.1} parent=83 // pred_fallthru
            _
        $region84: #{tpu_custom_call.1} parent=59 // pred_fallthru
          _
        // Predicated region
        $region85: #{tpu_custom_call.1} parent=59 // pred_check
          %p436 = pneg %p432
        $region86: #{tpu_custom_call.1} parent=59 // pred_check_branch
          %438 = sbr.rel (%p436) target = $region88
        $region87: #{tpu_custom_call.1} parent=59 // pred_region
          %s439 = sshll.u32 1, 36
          %s440 = ssub.s32 %s439, 1
          loop: start=0, step=1, limit=1
          $region89: #{tpu_custom_call.1} parent=87 // loop_pre_header
            _
          $region90: #{tpu_custom_call.1} parent=87 // loop_header
            %s442 = sphi 0, %s446
            %p443 = scmp.ge.s32.totalorder %s442, 1
            %s447 = sphi %s430, %s430
            %s448 = sphi [#allocation2], [#allocation2]
          $region91: #{tpu_custom_call.1} parent=87 // loop_header_branch
            %445 = sbr.rel (%p443) target = $region95
          $region92: #{tpu_custom_call.1} parent=87 // loop_body
            %v449 = vld [vmem:[%s447] sm:%s440]
            %450 = vst [vmem:[%s448] sm:%s440] %v449
          $region93: #{tpu_custom_call.1} parent=87 // loop_footer
            %s446 = sadd.s32 1, %s442
          $region94: #{tpu_custom_call.1} parent=87 // loop_footer_branch
            %441 = sbr.rel target = $region90
          $region95: #{tpu_custom_call.1} parent=87 // loop_exit
            _
        $region88: #{tpu_custom_call.1} parent=59 // pred_fallthru
          _
        // Predicated region
        $region114: #{tpu_custom_call.1} parent=59 // pred_check
          _
        $region115: #{tpu_custom_call.1} parent=59 // pred_check_branch
          %491 = sbr.rel (0) target = $region117
        $region116: #{tpu_custom_call.1} parent=59 // pred_region
          %492 = vsyncadd [#allocation5], 576
        $region117: #{tpu_custom_call.1} parent=59 // pred_fallthru
          _
        %s493 = smul.u32 36, 1
        %s494 = sshll.u32 %s493, 4
        %495 = dma.done [#allocation5], %s494
        %s496 = sadd.s32 %s427, 4294967288
        %p497 = scmp.lt.s32.totalorder %s496, 0
        %s498 = sadd.s32 %s427, 24
        %p499 = scmp.gt.s32.totalorder %s498, 16
        %p500 = por %p497, %p499
        %v501 = vlaneseq
        %v502 = vshrl.u32 %v501, 7
        %v503 = vadd.s32 %v502, 8
        %v504 = vadd.s32 %v502, 16
        %v505 = vadd.s32 %v502, 24
        %v506 = vld [vmem:[%s6] sm:$0x1]
        %v508 = vlaneseq
        %v509 = vshrl.u32 %v508, 7
        %v510 = vsub.s32 0, %v509
        %v511 = vrot.slane %v506, %v510
        %v513 = vld [vmem:[#allocation2] sm:$0xff]
        %v514 = vld [vmem:[#allocation2 + $0x8] sm:$0xff]
        %v515 = vld [vmem:[#allocation2 + $0x10] sm:$0xff]
        %v516 = vld [vmem:[#allocation2 + $0x18] sm:$0xff]
        %v517 = vld [vmem:[#allocation6] sm:$0xff]
        %v518 = vld [vmem:[#allocation6 + $0x8] sm:$0xff]
        %v519 = vld [vmem:[#allocation6 + $0x10] sm:$0xff]
        %v520 = vld [vmem:[#allocation6 + $0x18] sm:$0xff]
        %v521 = vld [vmem:[#allocation6 + $0x20] sm:$0xff]
        %v522 = vld [vmem:[#allocation6 + $0x28] sm:$0xff]
        %v523 = vld [vmem:[#allocation6 + $0x30] sm:$0xff]
        %v524 = vld [vmem:[#allocation6 + $0x38] sm:$0xff]
        %v525 = vld [vmem:[#allocation6 + $0x40] sm:$0xff]
        %v526 = vld [vmem:[#allocation6 + $0x48] sm:$0xff]
        %v527 = vld [vmem:[#allocation6 + $0x50] sm:$0xff]
        %v528 = vld [vmem:[#allocation6 + $0x58] sm:$0xff]
        %v529 = vld [vmem:[#allocation6 + $0x60] sm:$0xff]
        %v530 = vld [vmem:[#allocation6 + $0x68] sm:$0xff]
        %v531 = vld [vmem:[#allocation6 + $0x70] sm:$0xff]
        %v532 = vld [vmem:[#allocation6 + $0x78] sm:$0xff]
        %533 = vmatprep.subr.mxu0 0.0
        %534 = vmatpush1.msra.mxu0 %v532
        %535 = vmatprep.subr.mxu0 0.0
        %536 = vmatpush1.msra.mxu0 %v531
        %537 = vmatprep.subr.mxu0 0.0
        %538 = vmatpush1.msra.mxu0 %v530
        %539 = vmatprep.subr.mxu0 0.0
        %540 = vmatpush1.msra.mxu0 %v529
        %541 = vmatprep.subr.mxu0 0.0
        %542 = vmatpush1.msra.mxu0 %v528
        %543 = vmatprep.subr.mxu0 0.0
        %544 = vmatpush1.msra.mxu0 %v527
        %545 = vmatprep.subr.mxu0 0.0
        %546 = vmatpush1.msra.mxu0 %v526
        %547 = vmatprep.subr.mxu0 0.0
        %548 = vmatpush1.msra.mxu0 %v525
        %549 = vmatprep.subr.mxu0 0.0
        %550 = vmatpush1.msra.mxu0 %v524
        %551 = vmatprep.subr.mxu0 0.0
        %552 = vmatpush1.msra.mxu0 %v523
        %553 = vmatprep.subr.mxu0 0.0
        %554 = vmatpush1.msra.mxu0 %v522
        %555 = vmatprep.subr.mxu0 0.0
        %556 = vmatpush1.msra.mxu0 %v521
        %557 = vmatprep.subr.mxu0 0.0
        %558 = vmatpush1.msra.mxu0 %v520
        %559 = vmatprep.subr.mxu0 0.0
        %560 = vmatpush1.msra.mxu0 %v519
        %561 = vmatprep.subr.mxu0 0.0
        %562 = vmatpush1.msra.mxu0 %v518
        %563 = vmatprep.subr.mxu0 0.0
        %564 = vmatpush1.msra.mxu0 %v517
        %565 = vmatprep.subr.mxu0 0.0
        %566 = vmatpush2.msra.mxu0 0.0
        %567 = vmatprep.subr.mxu0 0.0
        %568 = vmatpush2.msra.mxu0 0.0
        %569 = vmatprep.subr.mxu0 0.0
        %570 = vmatpush2.msra.mxu0 0.0
        %571 = vmatprep.subr.mxu0 0.0
        %572 = vmatpush2.msra.mxu0 0.0
        %573 = vmatprep.subr.mxu0 0.0
        %574 = vmatpush2.msra.mxu0 0.0
        %575 = vmatprep.subr.mxu0 0.0
        %576 = vmatpush2.msra.mxu0 0.0
        %577 = vmatprep.subr.mxu0 0.0
        %578 = vmatpush2.msra.mxu0 0.0
        %579 = vmatprep.subr.mxu0 0.0
        %580 = vmatpush2.msra.mxu0 0.0
        %581 = vmatprep.subr.mxu0 0.0
        %582 = vmatpush2.msra.mxu0 0.0
        %583 = vmatprep.subr.mxu0 0.0
        %584 = vmatpush2.msra.mxu0 0.0
        %585 = vmatprep.subr.mxu0 0.0
        %586 = vmatpush2.msra.mxu0 0.0
        %587 = vmatprep.subr.mxu0 0.0
        %588 = vmatpush2.msra.mxu0 0.0
        %589 = vmatprep.subr.mxu0 0.0
        %590 = vmatpush2.msra.mxu0 0.0
        %591 = vmatprep.subr.mxu0 0.0
        %592 = vmatpush2.msra.mxu0 0.0
        %593 = vmatprep.subr.mxu0 0.0
        %594 = vmatpush2.msra.mxu0 0.0
        %595 = vmatprep.subr.mxu0 0.0
        %596 = vmatpush2.msra.mxu0 0.0
        %597 = vmatprep.mubr.f32.mxu0 0.0
        %598 = vmatmul.mubr.f32.gmra.mxu0 %v513
        %v599 = vpop.f32.mrf.mxu0
        %v600 = vadd.f32 0.0, %v599
        %v601 = vpop.f32.mrf.mxu0
        %602 = vmatprep.mubr.f32.mxu0 0.0
        %603 = vmatmul.mubr.f32.gmra.mxu0 %v514
        %v604 = vpop.f32.mrf.mxu0
        %v605 = vadd.f32 0.0, %v604
        %v606 = vpop.f32.mrf.mxu0
        %607 = vmatprep.mubr.f32.mxu0 0.0
        %608 = vmatmul.mubr.f32.gmra.mxu0 %v515
        %v609 = vpop.f32.mrf.mxu0
        %v610 = vadd.f32 0.0, %v609
        %v611 = vpop.f32.mrf.mxu0
        %612 = vmatprep.mubr.f32.mxu0 0.0
        %613 = vmatmul.mubr.f32.gmra.mxu0 %v516
        %v614 = vpop.f32.mrf.mxu0
        %v615 = vadd.f32 0.0, %v614
        %v616 = vpop.f32.mrf.mxu0
        %617 = vdwg.mxu0
        %v618 = vadd.f32 %v511, %v600
        %v619 = vadd.f32 %v511, %v605
        %v620 = vadd.f32 %v511, %v610
        %v621 = vadd.f32 %v511, %v615
        %v622 = vld [vmem:[#allocation2 + $0x1] sm:$0xff]
        %v623 = vld [vmem:[#allocation2 + $0x9] sm:$0xff]
        %v624 = vld [vmem:[#allocation2 + $0x11] sm:$0xff]
        %v625 = vld [vmem:[#allocation2 + $0x19] sm:$0xff]
        %s626 = scalar_lea.vmem [#allocation6], 128
        %v627 = vld [vmem:[%s626] sm:$0xff]
        %v628 = vld [vmem:[%s626 + $0x8] sm:$0xff]
        %v629 = vld [vmem:[%s626 + $0x10] sm:$0xff]
        %v630 = vld [vmem:[%s626 + $0x18] sm:$0xff]
        %v631 = vld [vmem:[%s626 + $0x20] sm:$0xff]
        %v632 = vld [vmem:[%s626 + $0x28] sm:$0xff]
        %v633 = vld [vmem:[%s626 + $0x30] sm:$0xff]
        %v634 = vld [vmem:[%s626 + $0x38] sm:$0xff]
        %v635 = vld [vmem:[%s626 + $0x40] sm:$0xff]
        %v636 = vld [vmem:[%s626 + $0x48] sm:$0xff]
        %v637 = vld [vmem:[%s626 + $0x50] sm:$0xff]
        %v638 = vld [vmem:[%s626 + $0x58] sm:$0xff]
        %v639 = vld [vmem:[%s626 + $0x60] sm:$0xff]
        %v640 = vld [vmem:[%s626 + $0x68] sm:$0xff]
        %v641 = vld [vmem:[%s626 + $0x70] sm:$0xff]
        %v642 = vld [vmem:[%s626 + $0x78] sm:$0xff]
        %643 = vmatprep.subr.mxu0 0.0
        %644 = vmatpush1.msra.mxu0 %v642
        %645 = vmatprep.subr.mxu0 0.0
        %646 = vmatpush1.msra.mxu0 %v641
        %647 = vmatprep.subr.mxu0 0.0
        %648 = vmatpush1.msra.mxu0 %v640
        %649 = vmatprep.subr.mxu0 0.0
        %650 = vmatpush1.msra.mxu0 %v639
        %651 = vmatprep.subr.mxu0 0.0
        %652 = vmatpush1.msra.mxu0 %v638
        %653 = vmatprep.subr.mxu0 0.0
        %654 = vmatpush1.msra.mxu0 %v637
        %655 = vmatprep.subr.mxu0 0.0
        %656 = vmatpush1.msra.mxu0 %v636
        %657 = vmatprep.subr.mxu0 0.0
        %658 = vmatpush1.msra.mxu0 %v635
        %659 = vmatprep.subr.mxu0 0.0
        %660 = vmatpush1.msra.mxu0 %v634
        %661 = vmatprep.subr.mxu0 0.0
        %662 = vmatpush1.msra.mxu0 %v633
        %663 = vmatprep.subr.mxu0 0.0
        %664 = vmatpush1.msra.mxu0 %v632
        %665 = vmatprep.subr.mxu0 0.0
        %666 = vmatpush1.msra.mxu0 %v631
        %667 = vmatprep.subr.mxu0 0.0
        %668 = vmatpush1.msra.mxu0 %v630
        %669 = vmatprep.subr.mxu0 0.0
        %670 = vmatpush1.msra.mxu0 %v629
        %671 = vmatprep.subr.mxu0 0.0
        %672 = vmatpush1.msra.mxu0 %v628
        %673 = vmatprep.subr.mxu0 0.0
        %674 = vmatpush1.msra.mxu0 %v627
        %675 = vmatprep.subr.mxu0 0.0
        %676 = vmatpush2.msra.mxu0 0.0
        %677 = vmatprep.subr.mxu0 0.0
        %678 = vmatpush2.msra.mxu0 0.0
        %679 = vmatprep.subr.mxu0 0.0
        %680 = vmatpush2.msra.mxu0 0.0
        %681 = vmatprep.subr.mxu0 0.0
        %682 = vmatpush2.msra.mxu0 0.0
        %683 = vmatprep.subr.mxu0 0.0
        %684 = vmatpush2.msra.mxu0 0.0
        %685 = vmatprep.subr.mxu0 0.0
        %686 = vmatpush2.msra.mxu0 0.0
        %687 = vmatprep.subr.mxu0 0.0
        %688 = vmatpush2.msra.mxu0 0.0
        %689 = vmatprep.subr.mxu0 0.0
        %690 = vmatpush2.msra.mxu0 0.0
        %691 = vmatprep.subr.mxu0 0.0
        %692 = vmatpush2.msra.mxu0 0.0
        %693 = vmatprep.subr.mxu0 0.0
        %694 = vmatpush2.msra.mxu0 0.0
        %695 = vmatprep.subr.mxu0 0.0
        %696 = vmatpush2.msra.mxu0 0.0
        %697 = vmatprep.subr.mxu0 0.0
        %698 = vmatpush2.msra.mxu0 0.0
        %699 = vmatprep.subr.mxu0 0.0
        %700 = vmatpush2.msra.mxu0 0.0
        %701 = vmatprep.subr.mxu0 0.0
        %702 = vmatpush2.msra.mxu0 0.0
        %703 = vmatprep.subr.mxu0 0.0
        %704 = vmatpush2.msra.mxu0 0.0
        %705 = vmatprep.subr.mxu0 0.0
        %706 = vmatpush2.msra.mxu0 0.0
        %707 = vmatprep.mubr.f32.mxu0 0.0
        %708 = vmatmul.mubr.f32.gmra.mxu0 %v622
        %v709 = vpop.f32.mrf.mxu0
        %v710 = vadd.f32 0.0, %v709
        %v711 = vpop.f32.mrf.mxu0
        %712 = vmatprep.mubr.f32.mxu0 0.0
        %713 = vmatmul.mubr.f32.gmra.mxu0 %v623
        %v714 = vpop.f32.mrf.mxu0
        %v715 = vadd.f32 0.0, %v714
        %v716 = vpop.f32.mrf.mxu0
        %717 = vmatprep.mubr.f32.mxu0 0.0
        %718 = vmatmul.mubr.f32.gmra.mxu0 %v624
        %v719 = vpop.f32.mrf.mxu0
        %v720 = vadd.f32 0.0, %v719
        %v721 = vpop.f32.mrf.mxu0
        %722 = vmatprep.mubr.f32.mxu0 0.0
        %723 = vmatmul.mubr.f32.gmra.mxu0 %v625
        %v724 = vpop.f32.mrf.mxu0
        %v725 = vadd.f32 0.0, %v724
        %v726 = vpop.f32.mrf.mxu0
        %727 = vdwg.mxu0
        %v728 = vadd.f32 %v618, %v710
        %v729 = vadd.f32 %v619, %v715
        %v730 = vadd.f32 %v620, %v720
        %v731 = vadd.f32 %v621, %v725
        %v732 = vld [vmem:[#allocation2 + $0x2] sm:$0xff]
        %v733 = vld [vmem:[#allocation2 + $0xa] sm:$0xff]
        %v734 = vld [vmem:[#allocation2 + $0x12] sm:$0xff]
        %v735 = vld [vmem:[#allocation2 + $0x1a] sm:$0xff]
        %s736 = scalar_lea.vmem [#allocation6], 256
        %v737 = vld [vmem:[%s736] sm:$0xff]
        %v738 = vld [vmem:[%s736 + $0x8] sm:$0xff]
        %v739 = vld [vmem:[%s736 + $0x10] sm:$0xff]
        %v740 = vld [vmem:[%s736 + $0x18] sm:$0xff]
        %v741 = vld [vmem:[%s736 + $0x20] sm:$0xff]
        %v742 = vld [vmem:[%s736 + $0x28] sm:$0xff]
        %v743 = vld [vmem:[%s736 + $0x30] sm:$0xff]
        %v744 = vld [vmem:[%s736 + $0x38] sm:$0xff]
        %v745 = vld [vmem:[%s736 + $0x40] sm:$0xff]
        %v746 = vld [vmem:[%s736 + $0x48] sm:$0xff]
        %v747 = vld [vmem:[%s736 + $0x50] sm:$0xff]
        %v748 = vld [vmem:[%s736 + $0x58] sm:$0xff]
        %v749 = vld [vmem:[%s736 + $0x60] sm:$0xff]
        %v750 = vld [vmem:[%s736 + $0x68] sm:$0xff]
        %v751 = vld [vmem:[%s736 + $0x70] sm:$0xff]
        %v752 = vld [vmem:[%s736 + $0x78] sm:$0xff]
        %753 = vmatprep.subr.mxu0 0.0
        %754 = vmatpush1.msra.mxu0 %v752
        %755 = vmatprep.subr.mxu0 0.0
        %756 = vmatpush1.msra.mxu0 %v751
        %757 = vmatprep.subr.mxu0 0.0
        %758 = vmatpush1.msra.mxu0 %v750
        %759 = vmatprep.subr.mxu0 0.0
        %760 = vmatpush1.msra.mxu0 %v749
        %761 = vmatprep.subr.mxu0 0.0
        %762 = vmatpush1.msra.mxu0 %v748
        %763 = vmatprep.subr.mxu0 0.0
        %764 = vmatpush1.msra.mxu0 %v747
        %765 = vmatprep.subr.mxu0 0.0
        %766 = vmatpush1.msra.mxu0 %v746
        %767 = vmatprep.subr.mxu0 0.0
        %768 = vmatpush1.msra.mxu0 %v745
        %769 = vmatprep.subr.mxu0 0.0
        %770 = vmatpush1.msra.mxu0 %v744
        %771 = vmatprep.subr.mxu0 0.0
        %772 = vmatpush1.msra.mxu0 %v743
        %773 = vmatprep.subr.mxu0 0.0
        %774 = vmatpush1.msra.mxu0 %v742
        %775 = vmatprep.subr.mxu0 0.0
        %776 = vmatpush1.msra.mxu0 %v741
        %777 = vmatprep.subr.mxu0 0.0
        %778 = vmatpush1.msra.mxu0 %v740
        %779 = vmatprep.subr.mxu0 0.0
        %780 = vmatpush1.msra.mxu0 %v739
        %781 = vmatprep.subr.mxu0 0.0
        %782 = vmatpush1.msra.mxu0 %v738
        %783 = vmatprep.subr.mxu0 0.0
        %784 = vmatpush1.msra.mxu0 %v737
        %785 = vmatprep.subr.mxu0 0.0
        %786 = vmatpush2.msra.mxu0 0.0
        %787 = vmatprep.subr.mxu0 0.0
        %788 = vmatpush2.msra.mxu0 0.0
        %789 = vmatprep.subr.mxu0 0.0
        %790 = vmatpush2.msra.mxu0 0.0
        %791 = vmatprep.subr.mxu0 0.0
        %792 = vmatpush2.msra.mxu0 0.0
        %793 = vmatprep.subr.mxu0 0.0
        %794 = vmatpush2.msra.mxu0 0.0
        %795 = vmatprep.subr.mxu0 0.0
        %796 = vmatpush2.msra.mxu0 0.0
        %797 = vmatprep.subr.mxu0 0.0
        %798 = vmatpush2.msra.mxu0 0.0
        %799 = vmatprep.subr.mxu0 0.0
        %800 = vmatpush2.msra.mxu0 0.0
        %801 = vmatprep.subr.mxu0 0.0
        %802 = vmatpush2.msra.mxu0 0.0
        %803 = vmatprep.subr.mxu0 0.0
        %804 = vmatpush2.msra.mxu0 0.0
        %805 = vmatprep.subr.mxu0 0.0
        %806 = vmatpush2.msra.mxu0 0.0
        %807 = vmatprep.subr.mxu0 0.0
        %808 = vmatpush2.msra.mxu0 0.0
        %809 = vmatprep.subr.mxu0 0.0
        %810 = vmatpush2.msra.mxu0 0.0
        %811 = vmatprep.subr.mxu0 0.0
        %812 = vmatpush2.msra.mxu0 0.0
        %813 = vmatprep.subr.mxu0 0.0
        %814 = vmatpush2.msra.mxu0 0.0
        %815 = vmatprep.subr.mxu0 0.0
        %816 = vmatpush2.msra.mxu0 0.0
        %817 = vmatprep.mubr.f32.mxu0 0.0
        %818 = vmatmul.mubr.f32.gmra.mxu0 %v732
        %v819 = vpop.f32.mrf.mxu0
        %v820 = vadd.f32 0.0, %v819
        %v821 = vpop.f32.mrf.mxu0
        %822 = vmatprep.mubr.f32.mxu0 0.0
        %823 = vmatmul.mubr.f32.gmra.mxu0 %v733
        %v824 = vpop.f32.mrf.mxu0
        %v825 = vadd.f32 0.0, %v824
        %v826 = vpop.f32.mrf.mxu0
        %827 = vmatprep.mubr.f32.mxu0 0.0
        %828 = vmatmul.mubr.f32.gmra.mxu0 %v734
        %v829 = vpop.f32.mrf.mxu0
        %v830 = vadd.f32 0.0, %v829
        %v831 = vpop.f32.mrf.mxu0
        %832 = vmatprep.mubr.f32.mxu0 0.0
        %833 = vmatmul.mubr.f32.gmra.mxu0 %v735
        %v834 = vpop.f32.mrf.mxu0
        %v835 = vadd.f32 0.0, %v834
        %v836 = vpop.f32.mrf.mxu0
        %837 = vdwg.mxu0
        %v838 = vadd.f32 %v728, %v820
        %v839 = vadd.f32 %v729, %v825
        %v840 = vadd.f32 %v730, %v830
        %v841 = vadd.f32 %v731, %v835
        %v842 = vld [vmem:[#allocation2 + $0x3] sm:$0xff]
        %v843 = vld [vmem:[#allocation2 + $0xb] sm:$0xff]
        %v844 = vld [vmem:[#allocation2 + $0x13] sm:$0xff]
        %v845 = vld [vmem:[#allocation2 + $0x1b] sm:$0xff]
        %s846 = scalar_lea.vmem [#allocation6], 384
        %v847 = vld [vmem:[%s846] sm:$0xff]
        %v848 = vld [vmem:[%s846 + $0x8] sm:$0xff]
        %v849 = vld [vmem:[%s846 + $0x10] sm:$0xff]
        %v850 = vld [vmem:[%s846 + $0x18] sm:$0xff]
        %v851 = vld [vmem:[%s846 + $0x20] sm:$0xff]
        %v852 = vld [vmem:[%s846 + $0x28] sm:$0xff]
        %v853 = vld [vmem:[%s846 + $0x30] sm:$0xff]
        %v854 = vld [vmem:[%s846 + $0x38] sm:$0xff]
        %v855 = vld [vmem:[%s846 + $0x40] sm:$0xff]
        %v856 = vld [vmem:[%s846 + $0x48] sm:$0xff]
        %v857 = vld [vmem:[%s846 + $0x50] sm:$0xff]
        %v858 = vld [vmem:[%s846 + $0x58] sm:$0xff]
        %v859 = vld [vmem:[%s846 + $0x60] sm:$0xff]
        %v860 = vld [vmem:[%s846 + $0x68] sm:$0xff]
        %v861 = vld [vmem:[%s846 + $0x70] sm:$0xff]
        %v862 = vld [vmem:[%s846 + $0x78] sm:$0xff]
        %863 = vmatprep.subr.mxu0 0.0
        %864 = vmatpush1.msra.mxu0 %v862
        %865 = vmatprep.subr.mxu0 0.0
        %866 = vmatpush1.msra.mxu0 %v861
        %867 = vmatprep.subr.mxu0 0.0
        %868 = vmatpush1.msra.mxu0 %v860
        %869 = vmatprep.subr.mxu0 0.0
        %870 = vmatpush1.msra.mxu0 %v859
        %871 = vmatprep.subr.mxu0 0.0
        %872 = vmatpush1.msra.mxu0 %v858
        %873 = vmatprep.subr.mxu0 0.0
        %874 = vmatpush1.msra.mxu0 %v857
        %875 = vmatprep.subr.mxu0 0.0
        %876 = vmatpush1.msra.mxu0 %v856
        %877 = vmatprep.subr.mxu0 0.0
        %878 = vmatpush1.msra.mxu0 %v855
        %879 = vmatprep.subr.mxu0 0.0
        %880 = vmatpush1.msra.mxu0 %v854
        %881 = vmatprep.subr.mxu0 0.0
        %882 = vmatpush1.msra.mxu0 %v853
        %883 = vmatprep.subr.mxu0 0.0
        %884 = vmatpush1.msra.mxu0 %v852
        %885 = vmatprep.subr.mxu0 0.0
        %886 = vmatpush1.msra.mxu0 %v851
        %887 = vmatprep.subr.mxu0 0.0
        %888 = vmatpush1.msra.mxu0 %v850
        %889 = vmatprep.subr.mxu0 0.0
        %890 = vmatpush1.msra.mxu0 %v849
        %891 = vmatprep.subr.mxu0 0.0
        %892 = vmatpush1.msra.mxu0 %v848
        %893 = vmatprep.subr.mxu0 0.0
        %894 = vmatpush1.msra.mxu0 %v847
        %895 = vmatprep.subr.mxu0 0.0
        %896 = vmatpush2.msra.mxu0 0.0
        %897 = vmatprep.subr.mxu0 0.0
        %898 = vmatpush2.msra.mxu0 0.0
        %899 = vmatprep.subr.mxu0 0.0
        %900 = vmatpush2.msra.mxu0 0.0
        %901 = vmatprep.subr.mxu0 0.0
        %902 = vmatpush2.msra.mxu0 0.0
        %903 = vmatprep.subr.mxu0 0.0
        %904 = vmatpush2.msra.mxu0 0.0
        %905 = vmatprep.subr.mxu0 0.0
        %906 = vmatpush2.msra.mxu0 0.0
        %907 = vmatprep.subr.mxu0 0.0
        %908 = vmatpush2.msra.mxu0 0.0
        %909 = vmatprep.subr.mxu0 0.0
        %910 = vmatpush2.msra.mxu0 0.0
        %911 = vmatprep.subr.mxu0 0.0
        %912 = vmatpush2.msra.mxu0 0.0
        %913 = vmatprep.subr.mxu0 0.0
        %914 = vmatpush2.msra.mxu0 0.0
        %915 = vmatprep.subr.mxu0 0.0
        %916 = vmatpush2.msra.mxu0 0.0
        %917 = vmatprep.subr.mxu0 0.0
        %918 = vmatpush2.msra.mxu0 0.0
        %919 = vmatprep.subr.mxu0 0.0
        %920 = vmatpush2.msra.mxu0 0.0
        %921 = vmatprep.subr.mxu0 0.0
        %922 = vmatpush2.msra.mxu0 0.0
        %923 = vmatprep.subr.mxu0 0.0
        %924 = vmatpush2.msra.mxu0 0.0
        %925 = vmatprep.subr.mxu0 0.0
        %926 = vmatpush2.msra.mxu0 0.0
        %927 = vmatprep.mubr.f32.mxu0 0.0
        %928 = vmatmul.mubr.f32.gmra.mxu0 %v842
        %v929 = vpop.f32.mrf.mxu0
        %v930 = vadd.f32 0.0, %v929
        %v931 = vpop.f32.mrf.mxu0
        %932 = vmatprep.mubr.f32.mxu0 0.0
        %933 = vmatmul.mubr.f32.gmra.mxu0 %v843
        %v934 = vpop.f32.mrf.mxu0
        %v935 = vadd.f32 0.0, %v934
        %v936 = vpop.f32.mrf.mxu0
        %937 = vmatprep.mubr.f32.mxu0 0.0
        %938 = vmatmul.mubr.f32.gmra.mxu0 %v844
        %v939 = vpop.f32.mrf.mxu0
        %v940 = vadd.f32 0.0, %v939
        %v941 = vpop.f32.mrf.mxu0
        %942 = vmatprep.mubr.f32.mxu0 0.0
        %943 = vmatmul.mubr.f32.gmra.mxu0 %v845
        %v944 = vpop.f32.mrf.mxu0
        %v945 = vadd.f32 0.0, %v944
        %v946 = vpop.f32.mrf.mxu0
        %947 = vdwg.mxu0
        %v948 = vadd.f32 %v838, %v930
        %v949 = vadd.f32 %v839, %v935
        %v950 = vadd.f32 %v840, %v940
        %v951 = vadd.f32 %v841, %v945
        %v952 = vld [vmem:[#allocation2 + $0x4] sm:$0xff]
        %v953 = vld [vmem:[#allocation2 + $0xc] sm:$0xff]
        %v954 = vld [vmem:[#allocation2 + $0x14] sm:$0xff]
        %v955 = vld [vmem:[#allocation2 + $0x1c] sm:$0xff]
        %s956 = scalar_lea.vmem [#allocation6], 512
        %v957 = vld [vmem:[%s956] sm:$0xff]
        %v958 = vld [vmem:[%s956 + $0x8] sm:$0xff]
        %v959 = vld [vmem:[%s956 + $0x10] sm:$0xff]
        %v960 = vld [vmem:[%s956 + $0x18] sm:$0xff]
        %v961 = vld [vmem:[%s956 + $0x20] sm:$0xff]
        %v962 = vld [vmem:[%s956 + $0x28] sm:$0xff]
        %v963 = vld [vmem:[%s956 + $0x30] sm:$0xff]
        %v964 = vld [vmem:[%s956 + $0x38] sm:$0xff]
        %v965 = vld [vmem:[%s956 + $0x40] sm:$0xff]
        %v966 = vld [vmem:[%s956 + $0x48] sm:$0xff]
        %v967 = vld [vmem:[%s956 + $0x50] sm:$0xff]
        %v968 = vld [vmem:[%s956 + $0x58] sm:$0xff]
        %v969 = vld [vmem:[%s956 + $0x60] sm:$0xff]
        %v970 = vld [vmem:[%s956 + $0x68] sm:$0xff]
        %v971 = vld [vmem:[%s956 + $0x70] sm:$0xff]
        %v972 = vld [vmem:[%s956 + $0x78] sm:$0xff]
        %973 = vmatprep.subr.mxu0 0.0
        %974 = vmatpush1.msra.mxu0 %v972
        %975 = vmatprep.subr.mxu0 0.0
        %976 = vmatpush1.msra.mxu0 %v971
        %977 = vmatprep.subr.mxu0 0.0
        %978 = vmatpush1.msra.mxu0 %v970
        %979 = vmatprep.subr.mxu0 0.0
        %980 = vmatpush1.msra.mxu0 %v969
        %981 = vmatprep.subr.mxu0 0.0
        %982 = vmatpush1.msra.mxu0 %v968
        %983 = vmatprep.subr.mxu0 0.0
        %984 = vmatpush1.msra.mxu0 %v967
        %985 = vmatprep.subr.mxu0 0.0
        %986 = vmatpush1.msra.mxu0 %v966
        %987 = vmatprep.subr.mxu0 0.0
        %988 = vmatpush1.msra.mxu0 %v965
        %989 = vmatprep.subr.mxu0 0.0
        %990 = vmatpush1.msra.mxu0 %v964
        %991 = vmatprep.subr.mxu0 0.0
        %992 = vmatpush1.msra.mxu0 %v963
        %993 = vmatprep.subr.mxu0 0.0
        %994 = vmatpush1.msra.mxu0 %v962
        %995 = vmatprep.subr.mxu0 0.0
        %996 = vmatpush1.msra.mxu0 %v961
        %997 = vmatprep.subr.mxu0 0.0
        %998 = vmatpush1.msra.mxu0 %v960
        %999 = vmatprep.subr.mxu0 0.0
        %1000 = vmatpush1.msra.mxu0 %v959
        %1001 = vmatprep.subr.mxu0 0.0
        %1002 = vmatpush1.msra.mxu0 %v958
        %1003 = vmatprep.subr.mxu0 0.0
        %1004 = vmatpush1.msra.mxu0 %v957
        %1005 = vmatprep.subr.mxu0 0.0
        %1006 = vmatpush2.msra.mxu0 0.0
        %1007 = vmatprep.subr.mxu0 0.0
        %1008 = vmatpush2.msra.mxu0 0.0
        %1009 = vmatprep.subr.mxu0 0.0
        %1010 = vmatpush2.msra.mxu0 0.0
        %1011 = vmatprep.subr.mxu0 0.0
        %1012 = vmatpush2.msra.mxu0 0.0
        %1013 = vmatprep.subr.mxu0 0.0
        %1014 = vmatpush2.msra.mxu0 0.0
        %1015 = vmatprep.subr.mxu0 0.0
        %1016 = vmatpush2.msra.mxu0 0.0
        %1017 = vmatprep.subr.mxu0 0.0
        %1018 = vmatpush2.msra.mxu0 0.0
        %1019 = vmatprep.subr.mxu0 0.0
        %1020 = vmatpush2.msra.mxu0 0.0
        %1021 = vmatprep.subr.mxu0 0.0
        %1022 = vmatpush2.msra.mxu0 0.0
        %1023 = vmatprep.subr.mxu0 0.0
        %1024 = vmatpush2.msra.mxu0 0.0
        %1025 = vmatprep.subr.mxu0 0.0
        %1026 = vmatpush2.msra.mxu0 0.0
        %1027 = vmatprep.subr.mxu0 0.0
        %1028 = vmatpush2.msra.mxu0 0.0
        %1029 = vmatprep.subr.mxu0 0.0
        %1030 = vmatpush2.msra.mxu0 0.0
        %1031 = vmatprep.subr.mxu0 0.0
        %1032 = vmatpush2.msra.mxu0 0.0
        %1033 = vmatprep.subr.mxu0 0.0
        %1034 = vmatpush2.msra.mxu0 0.0
        %1035 = vmatprep.subr.mxu0 0.0
        %1036 = vmatpush2.msra.mxu0 0.0
        %1037 = vmatprep.mubr.f32.mxu0 0.0
        %1038 = vmatmul.mubr.f32.gmra.mxu0 %v952
        %v1039 = vpop.f32.mrf.mxu0
        %v1040 = vadd.f32 0.0, %v1039
        %v1041 = vpop.f32.mrf.mxu0
        %1042 = vmatprep.mubr.f32.mxu0 0.0
        %1043 = vmatmul.mubr.f32.gmra.mxu0 %v953
        %v1044 = vpop.f32.mrf.mxu0
        %v1045 = vadd.f32 0.0, %v1044
        %v1046 = vpop.f32.mrf.mxu0
        %1047 = vmatprep.mubr.f32.mxu0 0.0
        %1048 = vmatmul.mubr.f32.gmra.mxu0 %v954
        %v1049 = vpop.f32.mrf.mxu0
        %v1050 = vadd.f32 0.0, %v1049
        %v1051 = vpop.f32.mrf.mxu0
        %1052 = vmatprep.mubr.f32.mxu0 0.0
        %1053 = vmatmul.mubr.f32.gmra.mxu0 %v955
        %v1054 = vpop.f32.mrf.mxu0
        %v1055 = vadd.f32 0.0, %v1054
        %v1056 = vpop.f32.mrf.mxu0
        %1057 = vdwg.mxu0
        %v1058 = vadd.f32 %v948, %v1040
        %v1059 = vadd.f32 %v949, %v1045
        %v1060 = vadd.f32 %v950, %v1050
        %v1061 = vadd.f32 %v951, %v1055
        %v1062 = vtanh.pop %v1058
        %v1063 = vtanh.pop %v1059
        %v1064 = vtanh.pop %v1060
        %v1065 = vtanh.pop %v1061
        %1066 = vst [vmem:[#allocation3] sm:$0xff] %v1062
        %1067 = vst [vmem:[#allocation3 + $0x8] sm:$0xff] %v1063
        %1068 = vst [vmem:[#allocation3 + $0x10] sm:$0xff] %v1064
        %1069 = vst [vmem:[#allocation3 + $0x18] sm:$0xff] %v1065
        // Predicated region
        $region118: #{tpu_custom_call.1} parent=59 // pred_check
          %p1070 = pneg %p500
        $region119: #{tpu_custom_call.1} parent=59 // pred_check_branch
          %1072 = sbr.rel (%p1070) target = $region121
        $region120: #{tpu_custom_call.1} parent=59 // pred_region
          %v1073 = vstv %s496
          %v1074 = vadd.s32 %v502, %v1073
          %v1075 = vadd.s32 %v503, %v1073
          %v1076 = vadd.s32 %v504, %v1073
          %v1077 = vadd.s32 %v505, %v1073
          %vm1078 = vcmp.ge.s32.totalorder %v1074, 0
          %vm1079 = vcmp.ge.s32.totalorder %v1075, 0
          %vm1080 = vcmp.ge.s32.totalorder %v1076, 0
          %vm1081 = vcmp.ge.s32.totalorder %v1077, 0
          %vm1082 = vcmp.lt.s32.totalorder %v1074, 16
          %vm1083 = vcmp.lt.s32.totalorder %v1075, 16
          %vm1084 = vcmp.lt.s32.totalorder %v1076, 16
          %vm1085 = vcmp.lt.s32.totalorder %v1077, 16
          %vm1086 = vmand %vm1078, %vm1082
          %vm1087 = vmand %vm1079, %vm1083
          %vm1088 = vmand %vm1080, %vm1084
          %vm1089 = vmand %vm1081, %vm1085
          %v1090 = vsel %vm1086, 1, 0
          %v1091 = vsel %vm1087, 1, 0
          %v1092 = vsel %vm1088, 1, 0
          %v1093 = vsel %vm1089, 1, 0
          %vm1094 = vcmp.eq.s32.totalorder %v1090, 1
          %vm1095 = vcmp.eq.s32.totalorder %v1091, 1
          %vm1096 = vcmp.eq.s32.totalorder %v1092, 1
          %vm1097 = vcmp.eq.s32.totalorder %v1093, 1
          %v1098 = vsel %vm1094, %v1062, 0.0
          %v1099 = vsel %vm1095, %v1063, 0.0
          %v1100 = vsel %vm1096, %v1064, 0.0
          %v1101 = vsel %vm1097, %v1065, 0.0
          %1102 = vst [vmem:[#allocation3] sm:$0xff] %v1098
          %1103 = vst [vmem:[#allocation3 + $0x8] sm:$0xff] %v1099
          %1104 = vst [vmem:[#allocation3 + $0x10] sm:$0xff] %v1100
          %1105 = vst [vmem:[#allocation3 + $0x18] sm:$0xff] %v1101
        $region121: #{tpu_custom_call.1} parent=59 // pred_fallthru
          _
        %v1106 = vld [vmem:[%s7] sm:$0x1]
        %v1108 = vlaneseq
        %v1109 = vshrl.u32 %v1108, 7
        %v1110 = vsub.s32 0, %v1109
        %v1111 = vrot.slane %v1106, %v1110
        %v1113 = vld [vmem:[#allocation3] sm:$0xff]
        %v1114 = vld [vmem:[#allocation3 + $0x8] sm:$0xff]
        %v1115 = vld [vmem:[#allocation3 + $0x10] sm:$0xff]
        %v1116 = vld [vmem:[#allocation3 + $0x18] sm:$0xf]
        %v1117 = vld [vmem:[#allocation9] sm:$0xff]
        %v1118 = vld [vmem:[#allocation9 + $0x8] sm:$0xff]
        %v1119 = vld [vmem:[#allocation9 + $0x10] sm:$0xff]
        %v1120 = vld [vmem:[#allocation9 + $0x18] sm:$0xff]
        %v1121 = vld [vmem:[#allocation9 + $0x20] sm:$0xff]
        %v1122 = vld [vmem:[#allocation9 + $0x28] sm:$0xff]
        %v1123 = vld [vmem:[#allocation9 + $0x30] sm:$0xff]
        %v1124 = vld [vmem:[#allocation9 + $0x38] sm:$0xff]
        %v1125 = vld [vmem:[#allocation9 + $0x40] sm:$0xff]
        %v1126 = vld [vmem:[#allocation9 + $0x48] sm:$0xff]
        %v1127 = vld [vmem:[#allocation9 + $0x50] sm:$0xff]
        %v1128 = vld [vmem:[#allocation9 + $0x58] sm:$0xff]
        %v1129 = vld [vmem:[#allocation9 + $0x60] sm:$0xff]
        %v1130 = vld [vmem:[#allocation9 + $0x68] sm:$0xff]
        %v1131 = vld [vmem:[#allocation9 + $0x70] sm:$0xff]
        %v1132 = vld [vmem:[#allocation9 + $0x78] sm:$0xff]
        %1133 = vmatprep.subr.mxu0 0.0
        %1134 = vmatpush1.msra.mxu0 %v1132
        %1135 = vmatprep.subr.mxu0 0.0
        %1136 = vmatpush1.msra.mxu0 %v1131
        %1137 = vmatprep.subr.mxu0 0.0
        %1138 = vmatpush1.msra.mxu0 %v1130
        %1139 = vmatprep.subr.mxu0 0.0
        %1140 = vmatpush1.msra.mxu0 %v1129
        %1141 = vmatprep.subr.mxu0 0.0
        %1142 = vmatpush1.msra.mxu0 %v1128
        %1143 = vmatprep.subr.mxu0 0.0
        %1144 = vmatpush1.msra.mxu0 %v1127
        %1145 = vmatprep.subr.mxu0 0.0
        %1146 = vmatpush1.msra.mxu0 %v1126
        %1147 = vmatprep.subr.mxu0 0.0
        %1148 = vmatpush1.msra.mxu0 %v1125
        %1149 = vmatprep.subr.mxu0 0.0
        %1150 = vmatpush1.msra.mxu0 %v1124
        %1151 = vmatprep.subr.mxu0 0.0
        %1152 = vmatpush1.msra.mxu0 %v1123
        %1153 = vmatprep.subr.mxu0 0.0
        %1154 = vmatpush1.msra.mxu0 %v1122
        %1155 = vmatprep.subr.mxu0 0.0
        %1156 = vmatpush1.msra.mxu0 %v1121
        %1157 = vmatprep.subr.mxu0 0.0
        %1158 = vmatpush1.msra.mxu0 %v1120
        %1159 = vmatprep.subr.mxu0 0.0
        %1160 = vmatpush1.msra.mxu0 %v1119
        %1161 = vmatprep.subr.mxu0 0.0
        %1162 = vmatpush1.msra.mxu0 %v1118
        %1163 = vmatprep.subr.mxu0 0.0
        %1164 = vmatpush1.msra.mxu0 %v1117
        %1165 = vmatprep.subr.mxu0 0.0
        %1166 = vmatpush2.msra.mxu0 0.0
        %1167 = vmatprep.subr.mxu0 0.0
        %1168 = vmatpush2.msra.mxu0 0.0
        %1169 = vmatprep.subr.mxu0 0.0
        %1170 = vmatpush2.msra.mxu0 0.0
        %1171 = vmatprep.subr.mxu0 0.0
        %1172 = vmatpush2.msra.mxu0 0.0
        %1173 = vmatprep.subr.mxu0 0.0
        %1174 = vmatpush2.msra.mxu0 0.0
        %1175 = vmatprep.subr.mxu0 0.0
        %1176 = vmatpush2.msra.mxu0 0.0
        %1177 = vmatprep.subr.mxu0 0.0
        %1178 = vmatpush2.msra.mxu0 0.0
        %1179 = vmatprep.subr.mxu0 0.0
        %1180 = vmatpush2.msra.mxu0 0.0
        %1181 = vmatprep.subr.mxu0 0.0
        %1182 = vmatpush2.msra.mxu0 0.0
        %1183 = vmatprep.subr.mxu0 0.0
        %1184 = vmatpush2.msra.mxu0 0.0
        %1185 = vmatprep.subr.mxu0 0.0
        %1186 = vmatpush2.msra.mxu0 0.0
        %1187 = vmatprep.subr.mxu0 0.0
        %1188 = vmatpush2.msra.mxu0 0.0
        %1189 = vmatprep.subr.mxu0 0.0
        %1190 = vmatpush2.msra.mxu0 0.0
        %1191 = vmatprep.subr.mxu0 0.0
        %1192 = vmatpush2.msra.mxu0 0.0
        %1193 = vmatprep.subr.mxu0 0.0
        %1194 = vmatpush2.msra.mxu0 0.0
        %1195 = vmatprep.subr.mxu0 0.0
        %1196 = vmatpush2.msra.mxu0 0.0
        %1197 = vmatprep.mubr.f32.mxu0 0.0
        %1198 = vmatmul.mubr.f32.gmra.mxu0 %v1113
        %v1199 = vpop.f32.mrf.mxu0
        %v1200 = vadd.f32 0.0, %v1199
        %v1201 = vpop.f32.mrf.mxu0
        %1202 = vmatprep.mubr.f32.mxu0 0.0
        %1203 = vmatmul.mubr.f32.gmra.mxu0 %v1114
        %v1204 = vpop.f32.mrf.mxu0
        %v1205 = vadd.f32 0.0, %v1204
        %v1206 = vpop.f32.mrf.mxu0
        %1207 = vmatprep.mubr.f32.mxu0 0.0
        %1208 = vmatmul.mubr.f32.gmra.mxu0 %v1115
        %v1209 = vpop.f32.mrf.mxu0
        %v1210 = vadd.f32 0.0, %v1209
        %v1211 = vpop.f32.mrf.mxu0
        %1212 = vmatprep.mubr.f32.mxu0 0.0
        %1213 = vmatmul.mubr.f32.gmra.mxu0 %v1116
        %v1214 = vpop.f32.mrf.mxu0
        %v1215 = vadd.f32 0.0, %v1214
        %v1216 = vpop.f32.mrf.mxu0
        %1217 = vdwg.mxu0
        %v1218 = vadd.f32 %v1111, %v1200
        %v1219 = vadd.f32 %v1111, %v1205
        %v1220 = vadd.f32 %v1111, %v1210
        %v1221 = vadd.f32 %v1111, %v1215
        %v1222 = vld [vmem:[#allocation3 + $0x1] sm:$0xff]
        %v1223 = vld [vmem:[#allocation3 + $0x9] sm:$0xff]
        %v1224 = vld [vmem:[#allocation3 + $0x11] sm:$0xff]
        %v1225 = vld [vmem:[#allocation3 + $0x19] sm:$0xf]
        %s1226 = scalar_lea.vmem [#allocation9], 128
        %v1227 = vld [vmem:[%s1226] sm:$0xff]
        %v1228 = vld [vmem:[%s1226 + $0x8] sm:$0xff]
        %v1229 = vld [vmem:[%s1226 + $0x10] sm:$0xff]
        %v1230 = vld [vmem:[%s1226 + $0x18] sm:$0xff]
        %v1231 = vld [vmem:[%s1226 + $0x20] sm:$0xff]
        %v1232 = vld [vmem:[%s1226 + $0x28] sm:$0xff]
        %v1233 = vld [vmem:[%s1226 + $0x30] sm:$0xff]
        %v1234 = vld [vmem:[%s1226 + $0x38] sm:$0xff]
        %v1235 = vld [vmem:[%s1226 + $0x40] sm:$0xff]
        %v1236 = vld [vmem:[%s1226 + $0x48] sm:$0xff]
        %v1237 = vld [vmem:[%s1226 + $0x50] sm:$0xff]
        %v1238 = vld [vmem:[%s1226 + $0x58] sm:$0xff]
        %v1239 = vld [vmem:[%s1226 + $0x60] sm:$0xff]
        %v1240 = vld [vmem:[%s1226 + $0x68] sm:$0xff]
        %v1241 = vld [vmem:[%s1226 + $0x70] sm:$0xff]
        %v1242 = vld [vmem:[%s1226 + $0x78] sm:$0xff]
        %1243 = vmatprep.subr.mxu0 0.0
        %1244 = vmatpush1.msra.mxu0 %v1242
        %1245 = vmatprep.subr.mxu0 0.0
        %1246 = vmatpush1.msra.mxu0 %v1241
        %1247 = vmatprep.subr.mxu0 0.0
        %1248 = vmatpush1.msra.mxu0 %v1240
        %1249 = vmatprep.subr.mxu0 0.0
        %1250 = vmatpush1.msra.mxu0 %v1239
        %1251 = vmatprep.subr.mxu0 0.0
        %1252 = vmatpush1.msra.mxu0 %v1238
        %1253 = vmatprep.subr.mxu0 0.0
        %1254 = vmatpush1.msra.mxu0 %v1237
        %1255 = vmatprep.subr.mxu0 0.0
        %1256 = vmatpush1.msra.mxu0 %v1236
        %1257 = vmatprep.subr.mxu0 0.0
        %1258 = vmatpush1.msra.mxu0 %v1235
        %1259 = vmatprep.subr.mxu0 0.0
        %1260 = vmatpush1.msra.mxu0 %v1234
        %1261 = vmatprep.subr.mxu0 0.0
        %1262 = vmatpush1.msra.mxu0 %v1233
        %1263 = vmatprep.subr.mxu0 0.0
        %1264 = vmatpush1.msra.mxu0 %v1232
        %1265 = vmatprep.subr.mxu0 0.0
        %1266 = vmatpush1.msra.mxu0 %v1231
        %1267 = vmatprep.subr.mxu0 0.0
        %1268 = vmatpush1.msra.mxu0 %v1230
        %1269 = vmatprep.subr.mxu0 0.0
        %1270 = vmatpush1.msra.mxu0 %v1229
        %1271 = vmatprep.subr.mxu0 0.0
        %1272 = vmatpush1.msra.mxu0 %v1228
        %1273 = vmatprep.subr.mxu0 0.0
        %1274 = vmatpush1.msra.mxu0 %v1227
        %1275 = vmatprep.subr.mxu0 0.0
        %1276 = vmatpush2.msra.mxu0 0.0
        %1277 = vmatprep.subr.mxu0 0.0
        %1278 = vmatpush2.msra.mxu0 0.0
        %1279 = vmatprep.subr.mxu0 0.0
        %1280 = vmatpush2.msra.mxu0 0.0
        %1281 = vmatprep.subr.mxu0 0.0
        %1282 = vmatpush2.msra.mxu0 0.0
        %1283 = vmatprep.subr.mxu0 0.0
        %1284 = vmatpush2.msra.mxu0 0.0
        %1285 = vmatprep.subr.mxu0 0.0
        %1286 = vmatpush2.msra.mxu0 0.0
        %1287 = vmatprep.subr.mxu0 0.0
        %1288 = vmatpush2.msra.mxu0 0.0
        %1289 = vmatprep.subr.mxu0 0.0
        %1290 = vmatpush2.msra.mxu0 0.0
        %1291 = vmatprep.subr.mxu0 0.0
        %1292 = vmatpush2.msra.mxu0 0.0
        %1293 = vmatprep.subr.mxu0 0.0
        %1294 = vmatpush2.msra.mxu0 0.0
        %1295 = vmatprep.subr.mxu0 0.0
        %1296 = vmatpush2.msra.mxu0 0.0
        %1297 = vmatprep.subr.mxu0 0.0
        %1298 = vmatpush2.msra.mxu0 0.0
        %1299 = vmatprep.subr.mxu0 0.0
        %1300 = vmatpush2.msra.mxu0 0.0
        %1301 = vmatprep.subr.mxu0 0.0
        %1302 = vmatpush2.msra.mxu0 0.0
        %1303 = vmatprep.subr.mxu0 0.0
        %1304 = vmatpush2.msra.mxu0 0.0
        %1305 = vmatprep.subr.mxu0 0.0
        %1306 = vmatpush2.msra.mxu0 0.0
        %1307 = vmatprep.mubr.f32.mxu0 0.0
        %1308 = vmatmul.mubr.f32.gmra.mxu0 %v1222
        %v1309 = vpop.f32.mrf.mxu0
        %v1310 = vadd.f32 0.0, %v1309
        %v1311 = vpop.f32.mrf.mxu0
        %1312 = vmatprep.mubr.f32.mxu0 0.0
        %1313 = vmatmul.mubr.f32.gmra.mxu0 %v1223
        %v1314 = vpop.f32.mrf.mxu0
        %v1315 = vadd.f32 0.0, %v1314
        %v1316 = vpop.f32.mrf.mxu0
        %1317 = vmatprep.mubr.f32.mxu0 0.0
        %1318 = vmatmul.mubr.f32.gmra.mxu0 %v1224
        %v1319 = vpop.f32.mrf.mxu0
        %v1320 = vadd.f32 0.0, %v1319
        %v1321 = vpop.f32.mrf.mxu0
        %1322 = vmatprep.mubr.f32.mxu0 0.0
        %1323 = vmatmul.mubr.f32.gmra.mxu0 %v1225
        %v1324 = vpop.f32.mrf.mxu0
        %v1325 = vadd.f32 0.0, %v1324
        %v1326 = vpop.f32.mrf.mxu0
        %1327 = vdwg.mxu0
        %v1328 = vadd.f32 %v1218, %v1310
        %v1329 = vadd.f32 %v1219, %v1315
        %v1330 = vadd.f32 %v1220, %v1320
        %v1331 = vadd.f32 %v1221, %v1325
        %v1332 = vld [vmem:[#allocation3 + $0x2] sm:$0xff]
        %v1333 = vld [vmem:[#allocation3 + $0xa] sm:$0xff]
        %v1334 = vld [vmem:[#allocation3 + $0x12] sm:$0xff]
        %v1335 = vld [vmem:[#allocation3 + $0x1a] sm:$0xf]
        %s1336 = scalar_lea.vmem [#allocation9], 256
        %v1337 = vld [vmem:[%s1336] sm:$0xff]
        %v1338 = vld [vmem:[%s1336 + $0x8] sm:$0xff]
        %v1339 = vld [vmem:[%s1336 + $0x10] sm:$0xff]
        %v1340 = vld [vmem:[%s1336 + $0x18] sm:$0xff]
        %v1341 = vld [vmem:[%s1336 + $0x20] sm:$0xff]
        %v1342 = vld [vmem:[%s1336 + $0x28] sm:$0xff]
        %v1343 = vld [vmem:[%s1336 + $0x30] sm:$0xff]
        %v1344 = vld [vmem:[%s1336 + $0x38] sm:$0xff]
        %v1345 = vld [vmem:[%s1336 + $0x40] sm:$0xff]
        %v1346 = vld [vmem:[%s1336 + $0x48] sm:$0xff]
        %v1347 = vld [vmem:[%s1336 + $0x50] sm:$0xff]
        %v1348 = vld [vmem:[%s1336 + $0x58] sm:$0xff]
        %v1349 = vld [vmem:[%s1336 + $0x60] sm:$0xff]
        %v1350 = vld [vmem:[%s1336 + $0x68] sm:$0xff]
        %v1351 = vld [vmem:[%s1336 + $0x70] sm:$0xff]
        %v1352 = vld [vmem:[%s1336 + $0x78] sm:$0xff]
        %1353 = vmatprep.subr.mxu0 0.0
        %1354 = vmatpush1.msra.mxu0 %v1352
        %1355 = vmatprep.subr.mxu0 0.0
        %1356 = vmatpush1.msra.mxu0 %v1351
        %1357 = vmatprep.subr.mxu0 0.0
        %1358 = vmatpush1.msra.mxu0 %v1350
        %1359 = vmatprep.subr.mxu0 0.0
        %1360 = vmatpush1.msra.mxu0 %v1349
        %1361 = vmatprep.subr.mxu0 0.0
        %1362 = vmatpush1.msra.mxu0 %v1348
        %1363 = vmatprep.subr.mxu0 0.0
        %1364 = vmatpush1.msra.mxu0 %v1347
        %1365 = vmatprep.subr.mxu0 0.0
        %1366 = vmatpush1.msra.mxu0 %v1346
        %1367 = vmatprep.subr.mxu0 0.0
        %1368 = vmatpush1.msra.mxu0 %v1345
        %1369 = vmatprep.subr.mxu0 0.0
        %1370 = vmatpush1.msra.mxu0 %v1344
        %1371 = vmatprep.subr.mxu0 0.0
        %1372 = vmatpush1.msra.mxu0 %v1343
        %1373 = vmatprep.subr.mxu0 0.0
        %1374 = vmatpush1.msra.mxu0 %v1342
        %1375 = vmatprep.subr.mxu0 0.0
        %1376 = vmatpush1.msra.mxu0 %v1341
        %1377 = vmatprep.subr.mxu0 0.0
        %1378 = vmatpush1.msra.mxu0 %v1340
        %1379 = vmatprep.subr.mxu0 0.0
        %1380 = vmatpush1.msra.mxu0 %v1339
        %1381 = vmatprep.subr.mxu0 0.0
        %1382 = vmatpush1.msra.mxu0 %v1338
        %1383 = vmatprep.subr.mxu0 0.0
        %1384 = vmatpush1.msra.mxu0 %v1337
        %1385 = vmatprep.subr.mxu0 0.0
        %1386 = vmatpush2.msra.mxu0 0.0
        %1387 = vmatprep.subr.mxu0 0.0
        %1388 = vmatpush2.msra.mxu0 0.0
        %1389 = vmatprep.subr.mxu0 0.0
        %1390 = vmatpush2.msra.mxu0 0.0
        %1391 = vmatprep.subr.mxu0 0.0
        %1392 = vmatpush2.msra.mxu0 0.0
        %1393 = vmatprep.subr.mxu0 0.0
        %1394 = vmatpush2.msra.mxu0 0.0
        %1395 = vmatprep.subr.mxu0 0.0
        %1396 = vmatpush2.msra.mxu0 0.0
        %1397 = vmatprep.subr.mxu0 0.0
        %1398 = vmatpush2.msra.mxu0 0.0
        %1399 = vmatprep.subr.mxu0 0.0
        %1400 = vmatpush2.msra.mxu0 0.0
        %1401 = vmatprep.subr.mxu0 0.0
        %1402 = vmatpush2.msra.mxu0 0.0
        %1403 = vmatprep.subr.mxu0 0.0
        %1404 = vmatpush2.msra.mxu0 0.0
        %1405 = vmatprep.subr.mxu0 0.0
        %1406 = vmatpush2.msra.mxu0 0.0
        %1407 = vmatprep.subr.mxu0 0.0
        %1408 = vmatpush2.msra.mxu0 0.0
        %1409 = vmatprep.subr.mxu0 0.0
        %1410 = vmatpush2.msra.mxu0 0.0
        %1411 = vmatprep.subr.mxu0 0.0
        %1412 = vmatpush2.msra.mxu0 0.0
        %1413 = vmatprep.subr.mxu0 0.0
        %1414 = vmatpush2.msra.mxu0 0.0
        %1415 = vmatprep.subr.mxu0 0.0
        %1416 = vmatpush2.msra.mxu0 0.0
        %1417 = vmatprep.mubr.f32.mxu0 0.0
        %1418 = vmatmul.mubr.f32.gmra.mxu0 %v1332
        %v1419 = vpop.f32.mrf.mxu0
        %v1420 = vadd.f32 0.0, %v1419
        %v1421 = vpop.f32.mrf.mxu0
        %1422 = vmatprep.mubr.f32.mxu0 0.0
        %1423 = vmatmul.mubr.f32.gmra.mxu0 %v1333
        %v1424 = vpop.f32.mrf.mxu0
        %v1425 = vadd.f32 0.0, %v1424
        %v1426 = vpop.f32.mrf.mxu0
        %1427 = vmatprep.mubr.f32.mxu0 0.0
        %1428 = vmatmul.mubr.f32.gmra.mxu0 %v1334
        %v1429 = vpop.f32.mrf.mxu0
        %v1430 = vadd.f32 0.0, %v1429
        %v1431 = vpop.f32.mrf.mxu0
        %1432 = vmatprep.mubr.f32.mxu0 0.0
        %1433 = vmatmul.mubr.f32.gmra.mxu0 %v1335
        %v1434 = vpop.f32.mrf.mxu0
        %v1435 = vadd.f32 0.0, %v1434
        %v1436 = vpop.f32.mrf.mxu0
        %1437 = vdwg.mxu0
        %v1438 = vadd.f32 %v1328, %v1420
        %v1439 = vadd.f32 %v1329, %v1425
        %v1440 = vadd.f32 %v1330, %v1430
        %v1441 = vadd.f32 %v1331, %v1435
        %v1442 = vld [vmem:[#allocation3 + $0x3] sm:$0xff]
        %v1443 = vld [vmem:[#allocation3 + $0xb] sm:$0xff]
        %v1444 = vld [vmem:[#allocation3 + $0x13] sm:$0xff]
        %v1445 = vld [vmem:[#allocation3 + $0x1b] sm:$0xf]
        %s1446 = scalar_lea.vmem [#allocation9], 384
        %v1447 = vld [vmem:[%s1446] sm:$0xff]
        %v1448 = vld [vmem:[%s1446 + $0x8] sm:$0xff]
        %v1449 = vld [vmem:[%s1446 + $0x10] sm:$0xff]
        %v1450 = vld [vmem:[%s1446 + $0x18] sm:$0xff]
        %v1451 = vld [vmem:[%s1446 + $0x20] sm:$0xff]
        %v1452 = vld [vmem:[%s1446 + $0x28] sm:$0xff]
        %v1453 = vld [vmem:[%s1446 + $0x30] sm:$0xff]
        %v1454 = vld [vmem:[%s1446 + $0x38] sm:$0xff]
        %v1455 = vld [vmem:[%s1446 + $0x40] sm:$0xff]
        %v1456 = vld [vmem:[%s1446 + $0x48] sm:$0xff]
        %v1457 = vld [vmem:[%s1446 + $0x50] sm:$0xff]
        %v1458 = vld [vmem:[%s1446 + $0x58] sm:$0xff]
        %v1459 = vld [vmem:[%s1446 + $0x60] sm:$0xff]
        %v1460 = vld [vmem:[%s1446 + $0x68] sm:$0xff]
        %v1461 = vld [vmem:[%s1446 + $0x70] sm:$0xff]
        %v1462 = vld [vmem:[%s1446 + $0x78] sm:$0xff]
        %1463 = vmatprep.subr.mxu0 0.0
        %1464 = vmatpush1.msra.mxu0 %v1462
        %1465 = vmatprep.subr.mxu0 0.0
        %1466 = vmatpush1.msra.mxu0 %v1461
        %1467 = vmatprep.subr.mxu0 0.0
        %1468 = vmatpush1.msra.mxu0 %v1460
        %1469 = vmatprep.subr.mxu0 0.0
        %1470 = vmatpush1.msra.mxu0 %v1459
        %1471 = vmatprep.subr.mxu0 0.0
        %1472 = vmatpush1.msra.mxu0 %v1458
        %1473 = vmatprep.subr.mxu0 0.0
        %1474 = vmatpush1.msra.mxu0 %v1457
        %1475 = vmatprep.subr.mxu0 0.0
        %1476 = vmatpush1.msra.mxu0 %v1456
        %1477 = vmatprep.subr.mxu0 0.0
        %1478 = vmatpush1.msra.mxu0 %v1455
        %1479 = vmatprep.subr.mxu0 0.0
        %1480 = vmatpush1.msra.mxu0 %v1454
        %1481 = vmatprep.subr.mxu0 0.0
        %1482 = vmatpush1.msra.mxu0 %v1453
        %1483 = vmatprep.subr.mxu0 0.0
        %1484 = vmatpush1.msra.mxu0 %v1452
        %1485 = vmatprep.subr.mxu0 0.0
        %1486 = vmatpush1.msra.mxu0 %v1451
        %1487 = vmatprep.subr.mxu0 0.0
        %1488 = vmatpush1.msra.mxu0 %v1450
        %1489 = vmatprep.subr.mxu0 0.0
        %1490 = vmatpush1.msra.mxu0 %v1449
        %1491 = vmatprep.subr.mxu0 0.0
        %1492 = vmatpush1.msra.mxu0 %v1448
        %1493 = vmatprep.subr.mxu0 0.0
        %1494 = vmatpush1.msra.mxu0 %v1447
        %1495 = vmatprep.subr.mxu0 0.0
        %1496 = vmatpush2.msra.mxu0 0.0
        %1497 = vmatprep.subr.mxu0 0.0
        %1498 = vmatpush2.msra.mxu0 0.0
        %1499 = vmatprep.subr.mxu0 0.0
        %1500 = vmatpush2.msra.mxu0 0.0
        %1501 = vmatprep.subr.mxu0 0.0
        %1502 = vmatpush2.msra.mxu0 0.0
        %1503 = vmatprep.subr.mxu0 0.0
        %1504 = vmatpush2.msra.mxu0 0.0
        %1505 = vmatprep.subr.mxu0 0.0
        %1506 = vmatpush2.msra.mxu0 0.0
        %1507 = vmatprep.subr.mxu0 0.0
        %1508 = vmatpush2.msra.mxu0 0.0
        %1509 = vmatprep.subr.mxu0 0.0
        %1510 = vmatpush2.msra.mxu0 0.0
        %1511 = vmatprep.subr.mxu0 0.0
        %1512 = vmatpush2.msra.mxu0 0.0
        %1513 = vmatprep.subr.mxu0 0.0
        %1514 = vmatpush2.msra.mxu0 0.0
        %1515 = vmatprep.subr.mxu0 0.0
        %1516 = vmatpush2.msra.mxu0 0.0
        %1517 = vmatprep.subr.mxu0 0.0
        %1518 = vmatpush2.msra.mxu0 0.0
        %1519 = vmatprep.subr.mxu0 0.0
        %1520 = vmatpush2.msra.mxu0 0.0
        %1521 = vmatprep.subr.mxu0 0.0
        %1522 = vmatpush2.msra.mxu0 0.0
        %1523 = vmatprep.subr.mxu0 0.0
        %1524 = vmatpush2.msra.mxu0 0.0
        %1525 = vmatprep.subr.mxu0 0.0
        %1526 = vmatpush2.msra.mxu0 0.0
        %1527 = vmatprep.mubr.f32.mxu0 0.0
        %1528 = vmatmul.mubr.f32.gmra.mxu0 %v1442
        %v1529 = vpop.f32.mrf.mxu0
        %v1530 = vadd.f32 0.0, %v1529
        %v1531 = vpop.f32.mrf.mxu0
        %1532 = vmatprep.mubr.f32.mxu0 0.0
        %1533 = vmatmul.mubr.f32.gmra.mxu0 %v1443
        %v1534 = vpop.f32.mrf.mxu0
        %v1535 = vadd.f32 0.0, %v1534
        %v1536 = vpop.f32.mrf.mxu0
        %1537 = vmatprep.mubr.f32.mxu0 0.0
        %1538 = vmatmul.mubr.f32.gmra.mxu0 %v1444
        %v1539 = vpop.f32.mrf.mxu0
        %v1540 = vadd.f32 0.0, %v1539
        %v1541 = vpop.f32.mrf.mxu0
        %1542 = vmatprep.mubr.f32.mxu0 0.0
        %1543 = vmatmul.mubr.f32.gmra.mxu0 %v1445
        %v1544 = vpop.f32.mrf.mxu0
        %v1545 = vadd.f32 0.0, %v1544
        %v1546 = vpop.f32.mrf.mxu0
        %1547 = vdwg.mxu0
        %v1548 = vadd.f32 %v1438, %v1530
        %v1549 = vadd.f32 %v1439, %v1535
        %v1550 = vadd.f32 %v1440, %v1540
        %v1551 = vadd.f32 %v1441, %v1545
        %v1552 = vld [vmem:[#allocation3 + $0x4] sm:$0xff]
        %v1553 = vld [vmem:[#allocation3 + $0xc] sm:$0xff]
        %v1554 = vld [vmem:[#allocation3 + $0x14] sm:$0xff]
        %v1555 = vld [vmem:[#allocation3 + $0x1c] sm:$0xf]
        %s1556 = scalar_lea.vmem [#allocation9], 512
        %v1557 = vld [vmem:[%s1556] sm:$0xff]
        %v1558 = vld [vmem:[%s1556 + $0x8] sm:$0xff]
        %v1559 = vld [vmem:[%s1556 + $0x10] sm:$0xff]
        %v1560 = vld [vmem:[%s1556 + $0x18] sm:$0xff]
        %v1561 = vld [vmem:[%s1556 + $0x20] sm:$0xff]
        %v1562 = vld [vmem:[%s1556 + $0x28] sm:$0xff]
        %v1563 = vld [vmem:[%s1556 + $0x30] sm:$0xff]
        %v1564 = vld [vmem:[%s1556 + $0x38] sm:$0xff]
        %v1565 = vld [vmem:[%s1556 + $0x40] sm:$0xff]
        %v1566 = vld [vmem:[%s1556 + $0x48] sm:$0xff]
        %v1567 = vld [vmem:[%s1556 + $0x50] sm:$0xff]
        %v1568 = vld [vmem:[%s1556 + $0x58] sm:$0xff]
        %v1569 = vld [vmem:[%s1556 + $0x60] sm:$0xff]
        %v1570 = vld [vmem:[%s1556 + $0x68] sm:$0xff]
        %v1571 = vld [vmem:[%s1556 + $0x70] sm:$0xff]
        %v1572 = vld [vmem:[%s1556 + $0x78] sm:$0xff]
        %1573 = vmatprep.subr.mxu0 0.0
        %1574 = vmatpush1.msra.mxu0 %v1572
        %1575 = vmatprep.subr.mxu0 0.0
        %1576 = vmatpush1.msra.mxu0 %v1571
        %1577 = vmatprep.subr.mxu0 0.0
        %1578 = vmatpush1.msra.mxu0 %v1570
        %1579 = vmatprep.subr.mxu0 0.0
        %1580 = vmatpush1.msra.mxu0 %v1569
        %1581 = vmatprep.subr.mxu0 0.0
        %1582 = vmatpush1.msra.mxu0 %v1568
        %1583 = vmatprep.subr.mxu0 0.0
        %1584 = vmatpush1.msra.mxu0 %v1567
        %1585 = vmatprep.subr.mxu0 0.0
        %1586 = vmatpush1.msra.mxu0 %v1566
        %1587 = vmatprep.subr.mxu0 0.0
        %1588 = vmatpush1.msra.mxu0 %v1565
        %1589 = vmatprep.subr.mxu0 0.0
        %1590 = vmatpush1.msra.mxu0 %v1564
        %1591 = vmatprep.subr.mxu0 0.0
        %1592 = vmatpush1.msra.mxu0 %v1563
        %1593 = vmatprep.subr.mxu0 0.0
        %1594 = vmatpush1.msra.mxu0 %v1562
        %1595 = vmatprep.subr.mxu0 0.0
        %1596 = vmatpush1.msra.mxu0 %v1561
        %1597 = vmatprep.subr.mxu0 0.0
        %1598 = vmatpush1.msra.mxu0 %v1560
        %1599 = vmatprep.subr.mxu0 0.0
        %1600 = vmatpush1.msra.mxu0 %v1559
        %1601 = vmatprep.subr.mxu0 0.0
        %1602 = vmatpush1.msra.mxu0 %v1558
        %1603 = vmatprep.subr.mxu0 0.0
        %1604 = vmatpush1.msra.mxu0 %v1557
        %1605 = vmatprep.subr.mxu0 0.0
        %1606 = vmatpush2.msra.mxu0 0.0
        %1607 = vmatprep.subr.mxu0 0.0
        %1608 = vmatpush2.msra.mxu0 0.0
        %1609 = vmatprep.subr.mxu0 0.0
        %1610 = vmatpush2.msra.mxu0 0.0
        %1611 = vmatprep.subr.mxu0 0.0
        %1612 = vmatpush2.msra.mxu0 0.0
        %1613 = vmatprep.subr.mxu0 0.0
        %1614 = vmatpush2.msra.mxu0 0.0
        %1615 = vmatprep.subr.mxu0 0.0
        %1616 = vmatpush2.msra.mxu0 0.0
        %1617 = vmatprep.subr.mxu0 0.0
        %1618 = vmatpush2.msra.mxu0 0.0
        %1619 = vmatprep.subr.mxu0 0.0
        %1620 = vmatpush2.msra.mxu0 0.0
        %1621 = vmatprep.subr.mxu0 0.0
        %1622 = vmatpush2.msra.mxu0 0.0
        %1623 = vmatprep.subr.mxu0 0.0
        %1624 = vmatpush2.msra.mxu0 0.0
        %1625 = vmatprep.subr.mxu0 0.0
        %1626 = vmatpush2.msra.mxu0 0.0
        %1627 = vmatprep.subr.mxu0 0.0
        %1628 = vmatpush2.msra.mxu0 0.0
        %1629 = vmatprep.subr.mxu0 0.0
        %1630 = vmatpush2.msra.mxu0 0.0
        %1631 = vmatprep.subr.mxu0 0.0
        %1632 = vmatpush2.msra.mxu0 0.0
        %1633 = vmatprep.subr.mxu0 0.0
        %1634 = vmatpush2.msra.mxu0 0.0
        %1635 = vmatprep.subr.mxu0 0.0
        %1636 = vmatpush2.msra.mxu0 0.0
        %1637 = vmatprep.mubr.f32.mxu0 0.0
        %1638 = vmatmul.mubr.f32.gmra.mxu0 %v1552
        %v1639 = vpop.f32.mrf.mxu0
        %v1640 = vadd.f32 0.0, %v1639
        %v1641 = vpop.f32.mrf.mxu0
        %1642 = vmatprep.mubr.f32.mxu0 0.0
        %1643 = vmatmul.mubr.f32.gmra.mxu0 %v1553
        %v1644 = vpop.f32.mrf.mxu0
        %v1645 = vadd.f32 0.0, %v1644
        %v1646 = vpop.f32.mrf.mxu0
        %1647 = vmatprep.mubr.f32.mxu0 0.0
        %1648 = vmatmul.mubr.f32.gmra.mxu0 %v1554
        %v1649 = vpop.f32.mrf.mxu0
        %v1650 = vadd.f32 0.0, %v1649
        %v1651 = vpop.f32.mrf.mxu0
        %1652 = vmatprep.mubr.f32.mxu0 0.0
        %1653 = vmatmul.mubr.f32.gmra.mxu0 %v1555
        %v1654 = vpop.f32.mrf.mxu0
        %v1655 = vadd.f32 0.0, %v1654
        %v1656 = vpop.f32.mrf.mxu0
        %1657 = vdwg.mxu0
        %v1658 = vadd.f32 %v1548, %v1640
        %v1659 = vadd.f32 %v1549, %v1645
        %v1660 = vadd.f32 %v1550, %v1650
        %v1661 = vadd.f32 %v1551, %v1655
        %v1662 = vtanh.pop %v1658
        %v1663 = vtanh.pop %v1659
        %v1664 = vtanh.pop %v1660
        %v1665 = vtanh.pop %v1661
        %1666 = vst [vmem:[#allocation4] sm:$0xff] %v1662
        %1667 = vst [vmem:[#allocation4 + $0x8] sm:$0xff] %v1663
        %1668 = vst [vmem:[#allocation4 + $0x10] sm:$0xff] %v1664
        %1669 = vst [vmem:[#allocation4 + $0x18] sm:$0xf] %v1665
        %s1670 = sadd.s32 %s427, 4294967290
        // Predicated region
        $region122: #{tpu_custom_call.1} parent=59 // pred_check
          %p1671 = pneg %p500
        $region123: #{tpu_custom_call.1} parent=59 // pred_check_branch
          %1673 = sbr.rel (%p1671) target = $region125
        $region124: #{tpu_custom_call.1} parent=59 // pred_region
          %v1674 = vstv %s1670
          %v1675 = vadd.s32 %v502, %v1674
          %v1676 = vadd.s32 %v503, %v1674
          %v1677 = vadd.s32 %v504, %v1674
          %v1678 = vadd.s32 %v505, %v1674
          %vm1679 = vcmp.ge.s32.totalorder %v1675, 0
          %vm1680 = vcmp.ge.s32.totalorder %v1676, 0
          %vm1681 = vcmp.ge.s32.totalorder %v1677, 0
          %vm1682 = vcmp.ge.s32.totalorder %v1678, 0
          %vm1683 = vcmp.lt.s32.totalorder %v1675, 16
          %vm1684 = vcmp.lt.s32.totalorder %v1676, 16
          %vm1685 = vcmp.lt.s32.totalorder %v1677, 16
          %vm1686 = vcmp.lt.s32.totalorder %v1678, 16
          %vm1687 = vmand %vm1679, %vm1683
          %vm1688 = vmand %vm1680, %vm1684
          %vm1689 = vmand %vm1681, %vm1685
          %vm1690 = vmand %vm1682, %vm1686
          %v1691 = vsel %vm1687, 1, 0
          %v1692 = vsel %vm1688, 1, 0
          %v1693 = vsel %vm1689, 1, 0
          %v1694 = vsel %vm1690, 1, 0
          %vm1695 = vcmp.eq.s32.totalorder %v1691, 1
          %vm1696 = vcmp.eq.s32.totalorder %v1692, 1
          %vm1697 = vcmp.eq.s32.totalorder %v1693, 1
          %vm1698 = vcmp.eq.s32.totalorder %v1694, 1
          %v1699 = vsel %vm1695, %v1662, 0.0
          %v1700 = vsel %vm1696, %v1663, 0.0
          %v1701 = vsel %vm1697, %v1664, 0.0
          %v1702 = vsel %vm1698, %v1665, 0.0
          %1703 = vst [vmem:[#allocation4] sm:$0xff] %v1699
          %1704 = vst [vmem:[#allocation4 + $0x8] sm:$0xff] %v1700
          %1705 = vst [vmem:[#allocation4 + $0x10] sm:$0xff] %v1701
          %1706 = vst [vmem:[#allocation4 + $0x18] sm:$0xf] %v1702
        $region125: #{tpu_custom_call.1} parent=59 // pred_fallthru
          _
        %v1707 = vld [vmem:[%s8] sm:$0x1]
        %v1709 = vlaneseq
        %v1710 = vshrl.u32 %v1709, 7
        %v1711 = vsub.s32 0, %v1710
        %v1712 = vrot.slane %v1707, %v1711
        %v1714 = vld [vmem:[#allocation4] sm:$0xff]
        %v1715 = vld [vmem:[#allocation4 + $0x8] sm:$0xff]
        %v1716 = vld [vmem:[#allocation4 + $0x10] sm:$0xff]
        %v1717 = vld [vmem:[#allocation11] sm:$0xff]
        %v1718 = vld [vmem:[#allocation11 + $0x8] sm:$0xff]
        %v1719 = vld [vmem:[#allocation11 + $0x10] sm:$0xff]
        %v1720 = vld [vmem:[#allocation11 + $0x18] sm:$0xff]
        %v1721 = vld [vmem:[#allocation11 + $0x20] sm:$0xff]
        %v1722 = vld [vmem:[#allocation11 + $0x28] sm:$0xff]
        %v1723 = vld [vmem:[#allocation11 + $0x30] sm:$0xff]
        %v1724 = vld [vmem:[#allocation11 + $0x38] sm:$0xff]
        %v1725 = vld [vmem:[#allocation11 + $0x40] sm:$0xff]
        %v1726 = vld [vmem:[#allocation11 + $0x48] sm:$0xff]
        %v1727 = vld [vmem:[#allocation11 + $0x50] sm:$0xff]
        %v1728 = vld [vmem:[#allocation11 + $0x58] sm:$0xff]
        %v1729 = vld [vmem:[#allocation11 + $0x60] sm:$0xff]
        %v1730 = vld [vmem:[#allocation11 + $0x68] sm:$0xff]
        %v1731 = vld [vmem:[#allocation11 + $0x70] sm:$0xff]
        %v1732 = vld [vmem:[#allocation11 + $0x78] sm:$0xff]
        %1733 = vmatprep.subr.mxu0 0.0
        %1734 = vmatpush1.msra.mxu0 %v1732
        %1735 = vmatprep.subr.mxu0 0.0
        %1736 = vmatpush1.msra.mxu0 %v1731
        %1737 = vmatprep.subr.mxu0 0.0
        %1738 = vmatpush1.msra.mxu0 %v1730
        %1739 = vmatprep.subr.mxu0 0.0
        %1740 = vmatpush1.msra.mxu0 %v1729
        %1741 = vmatprep.subr.mxu0 0.0
        %1742 = vmatpush1.msra.mxu0 %v1728
        %1743 = vmatprep.subr.mxu0 0.0
        %1744 = vmatpush1.msra.mxu0 %v1727
        %1745 = vmatprep.subr.mxu0 0.0
        %1746 = vmatpush1.msra.mxu0 %v1726
        %1747 = vmatprep.subr.mxu0 0.0
        %1748 = vmatpush1.msra.mxu0 %v1725
        %1749 = vmatprep.subr.mxu0 0.0
        %1750 = vmatpush1.msra.mxu0 %v1724
        %1751 = vmatprep.subr.mxu0 0.0
        %1752 = vmatpush1.msra.mxu0 %v1723
        %1753 = vmatprep.subr.mxu0 0.0
        %1754 = vmatpush1.msra.mxu0 %v1722
        %1755 = vmatprep.subr.mxu0 0.0
        %1756 = vmatpush1.msra.mxu0 %v1721
        %1757 = vmatprep.subr.mxu0 0.0
        %1758 = vmatpush1.msra.mxu0 %v1720
        %1759 = vmatprep.subr.mxu0 0.0
        %1760 = vmatpush1.msra.mxu0 %v1719
        %1761 = vmatprep.subr.mxu0 0.0
        %1762 = vmatpush1.msra.mxu0 %v1718
        %1763 = vmatprep.subr.mxu0 0.0
        %1764 = vmatpush1.msra.mxu0 %v1717
        %1765 = vmatprep.subr.mxu0 0.0
        %1766 = vmatpush2.msra.mxu0 0.0
        %1767 = vmatprep.subr.mxu0 0.0
        %1768 = vmatpush2.msra.mxu0 0.0
        %1769 = vmatprep.subr.mxu0 0.0
        %1770 = vmatpush2.msra.mxu0 0.0
        %1771 = vmatprep.subr.mxu0 0.0
        %1772 = vmatpush2.msra.mxu0 0.0
        %1773 = vmatprep.subr.mxu0 0.0
        %1774 = vmatpush2.msra.mxu0 0.0
        %1775 = vmatprep.subr.mxu0 0.0
        %1776 = vmatpush2.msra.mxu0 0.0
        %1777 = vmatprep.subr.mxu0 0.0
        %1778 = vmatpush2.msra.mxu0 0.0
        %1779 = vmatprep.subr.mxu0 0.0
        %1780 = vmatpush2.msra.mxu0 0.0
        %1781 = vmatprep.subr.mxu0 0.0
        %1782 = vmatpush2.msra.mxu0 0.0
        %1783 = vmatprep.subr.mxu0 0.0
        %1784 = vmatpush2.msra.mxu0 0.0
        %1785 = vmatprep.subr.mxu0 0.0
        %1786 = vmatpush2.msra.mxu0 0.0
        %1787 = vmatprep.subr.mxu0 0.0
        %1788 = vmatpush2.msra.mxu0 0.0
        %1789 = vmatprep.subr.mxu0 0.0
        %1790 = vmatpush2.msra.mxu0 0.0
        %1791 = vmatprep.subr.mxu0 0.0
        %1792 = vmatpush2.msra.mxu0 0.0
        %1793 = vmatprep.subr.mxu0 0.0
        %1794 = vmatpush2.msra.mxu0 0.0
        %1795 = vmatprep.subr.mxu0 0.0
        %1796 = vmatpush2.msra.mxu0 0.0
        %1797 = vmatprep.mubr.f32.mxu0 0.0
        %1798 = vmatmul.mubr.f32.gmra.mxu0 %v1714
        %v1799 = vpop.f32.mrf.mxu0
        %v1800 = vadd.f32 0.0, %v1799
        %v1801 = vpop.f32.mrf.mxu0
        %1802 = vmatprep.mubr.f32.mxu0 0.0
        %1803 = vmatmul.mubr.f32.gmra.mxu0 %v1715
        %v1804 = vpop.f32.mrf.mxu0
        %v1805 = vadd.f32 0.0, %v1804
        %v1806 = vpop.f32.mrf.mxu0
        %1807 = vmatprep.mubr.f32.mxu0 0.0
        %1808 = vmatmul.mubr.f32.gmra.mxu0 %v1716
        %v1809 = vpop.f32.mrf.mxu0
        %v1810 = vadd.f32 0.0, %v1809
        %v1811 = vpop.f32.mrf.mxu0
        %1812 = vdwg.mxu0
        %v1813 = vadd.f32 %v1712, %v1800
        %v1814 = vadd.f32 %v1712, %v1805
        %v1815 = vadd.f32 %v1712, %v1810
        %v1816 = vld [vmem:[#allocation4 + $0x1] sm:$0xff]
        %v1817 = vld [vmem:[#allocation4 + $0x9] sm:$0xff]
        %v1818 = vld [vmem:[#allocation4 + $0x11] sm:$0xff]
        %s1819 = scalar_lea.vmem [#allocation11], 128
        %v1820 = vld [vmem:[%s1819] sm:$0xff]
        %v1821 = vld [vmem:[%s1819 + $0x8] sm:$0xff]
        %v1822 = vld [vmem:[%s1819 + $0x10] sm:$0xff]
        %v1823 = vld [vmem:[%s1819 + $0x18] sm:$0xff]
        %v1824 = vld [vmem:[%s1819 + $0x20] sm:$0xff]
        %v1825 = vld [vmem:[%s1819 + $0x28] sm:$0xff]
        %v1826 = vld [vmem:[%s1819 + $0x30] sm:$0xff]
        %v1827 = vld [vmem:[%s1819 + $0x38] sm:$0xff]
        %v1828 = vld [vmem:[%s1819 + $0x40] sm:$0xff]
        %v1829 = vld [vmem:[%s1819 + $0x48] sm:$0xff]
        %v1830 = vld [vmem:[%s1819 + $0x50] sm:$0xff]
        %v1831 = vld [vmem:[%s1819 + $0x58] sm:$0xff]
        %v1832 = vld [vmem:[%s1819 + $0x60] sm:$0xff]
        %v1833 = vld [vmem:[%s1819 + $0x68] sm:$0xff]
        %v1834 = vld [vmem:[%s1819 + $0x70] sm:$0xff]
        %v1835 = vld [vmem:[%s1819 + $0x78] sm:$0xff]
        %1836 = vmatprep.subr.mxu0 0.0
        %1837 = vmatpush1.msra.mxu0 %v1835
        %1838 = vmatprep.subr.mxu0 0.0
        %1839 = vmatpush1.msra.mxu0 %v1834
        %1840 = vmatprep.subr.mxu0 0.0
        %1841 = vmatpush1.msra.mxu0 %v1833
        %1842 = vmatprep.subr.mxu0 0.0
        %1843 = vmatpush1.msra.mxu0 %v1832
        %1844 = vmatprep.subr.mxu0 0.0
        %1845 = vmatpush1.msra.mxu0 %v1831
        %1846 = vmatprep.subr.mxu0 0.0
        %1847 = vmatpush1.msra.mxu0 %v1830
        %1848 = vmatprep.subr.mxu0 0.0
        %1849 = vmatpush1.msra.mxu0 %v1829
        %1850 = vmatprep.subr.mxu0 0.0
        %1851 = vmatpush1.msra.mxu0 %v1828
        %1852 = vmatprep.subr.mxu0 0.0
        %1853 = vmatpush1.msra.mxu0 %v1827
        %1854 = vmatprep.subr.mxu0 0.0
        %1855 = vmatpush1.msra.mxu0 %v1826
        %1856 = vmatprep.subr.mxu0 0.0
        %1857 = vmatpush1.msra.mxu0 %v1825
        %1858 = vmatprep.subr.mxu0 0.0
        %1859 = vmatpush1.msra.mxu0 %v1824
        %1860 = vmatprep.subr.mxu0 0.0
        %1861 = vmatpush1.msra.mxu0 %v1823
        %1862 = vmatprep.subr.mxu0 0.0
        %1863 = vmatpush1.msra.mxu0 %v1822
        %1864 = vmatprep.subr.mxu0 0.0
        %1865 = vmatpush1.msra.mxu0 %v1821
        %1866 = vmatprep.subr.mxu0 0.0
        %1867 = vmatpush1.msra.mxu0 %v1820
        %1868 = vmatprep.subr.mxu0 0.0
        %1869 = vmatpush2.msra.mxu0 0.0
        %1870 = vmatprep.subr.mxu0 0.0
        %1871 = vmatpush2.msra.mxu0 0.0
        %1872 = vmatprep.subr.mxu0 0.0
        %1873 = vmatpush2.msra.mxu0 0.0
        %1874 = vmatprep.subr.mxu0 0.0
        %1875 = vmatpush2.msra.mxu0 0.0
        %1876 = vmatprep.subr.mxu0 0.0
        %1877 = vmatpush2.msra.mxu0 0.0
        %1878 = vmatprep.subr.mxu0 0.0
        %1879 = vmatpush2.msra.mxu0 0.0
        %1880 = vmatprep.subr.mxu0 0.0
        %1881 = vmatpush2.msra.mxu0 0.0
        %1882 = vmatprep.subr.mxu0 0.0
        %1883 = vmatpush2.msra.mxu0 0.0
        %1884 = vmatprep.subr.mxu0 0.0
        %1885 = vmatpush2.msra.mxu0 0.0
        %1886 = vmatprep.subr.mxu0 0.0
        %1887 = vmatpush2.msra.mxu0 0.0
        %1888 = vmatprep.subr.mxu0 0.0
        %1889 = vmatpush2.msra.mxu0 0.0
        %1890 = vmatprep.subr.mxu0 0.0
        %1891 = vmatpush2.msra.mxu0 0.0
        %1892 = vmatprep.subr.mxu0 0.0
        %1893 = vmatpush2.msra.mxu0 0.0
        %1894 = vmatprep.subr.mxu0 0.0
        %1895 = vmatpush2.msra.mxu0 0.0
        %1896 = vmatprep.subr.mxu0 0.0
        %1897 = vmatpush2.msra.mxu0 0.0
        %1898 = vmatprep.subr.mxu0 0.0
        %1899 = vmatpush2.msra.mxu0 0.0
        %1900 = vmatprep.mubr.f32.mxu0 0.0
        %1901 = vmatmul.mubr.f32.gmra.mxu0 %v1816
        %v1902 = vpop.f32.mrf.mxu0
        %v1903 = vadd.f32 0.0, %v1902
        %v1904 = vpop.f32.mrf.mxu0
        %1905 = vmatprep.mubr.f32.mxu0 0.0
        %1906 = vmatmul.mubr.f32.gmra.mxu0 %v1817
        %v1907 = vpop.f32.mrf.mxu0
        %v1908 = vadd.f32 0.0, %v1907
        %v1909 = vpop.f32.mrf.mxu0
        %1910 = vmatprep.mubr.f32.mxu0 0.0
        %1911 = vmatmul.mubr.f32.gmra.mxu0 %v1818
        %v1912 = vpop.f32.mrf.mxu0
        %v1913 = vadd.f32 0.0, %v1912
        %v1914 = vpop.f32.mrf.mxu0
        %1915 = vdwg.mxu0
        %v1916 = vadd.f32 %v1813, %v1903
        %v1917 = vadd.f32 %v1814, %v1908
        %v1918 = vadd.f32 %v1815, %v1913
        %v1919 = vld [vmem:[#allocation4 + $0x2] sm:$0xff]
        %v1920 = vld [vmem:[#allocation4 + $0xa] sm:$0xff]
        %v1921 = vld [vmem:[#allocation4 + $0x12] sm:$0xff]
        %s1922 = scalar_lea.vmem [#allocation11], 256
        %v1923 = vld [vmem:[%s1922] sm:$0xff]
        %v1924 = vld [vmem:[%s1922 + $0x8] sm:$0xff]
        %v1925 = vld [vmem:[%s1922 + $0x10] sm:$0xff]
        %v1926 = vld [vmem:[%s1922 + $0x18] sm:$0xff]
        %v1927 = vld [vmem:[%s1922 + $0x20] sm:$0xff]
        %v1928 = vld [vmem:[%s1922 + $0x28] sm:$0xff]
        %v1929 = vld [vmem:[%s1922 + $0x30] sm:$0xff]
        %v1930 = vld [vmem:[%s1922 + $0x38] sm:$0xff]
        %v1931 = vld [vmem:[%s1922 + $0x40] sm:$0xff]
        %v1932 = vld [vmem:[%s1922 + $0x48] sm:$0xff]
        %v1933 = vld [vmem:[%s1922 + $0x50] sm:$0xff]
        %v1934 = vld [vmem:[%s1922 + $0x58] sm:$0xff]
        %v1935 = vld [vmem:[%s1922 + $0x60] sm:$0xff]
        %v1936 = vld [vmem:[%s1922 + $0x68] sm:$0xff]
        %v1937 = vld [vmem:[%s1922 + $0x70] sm:$0xff]
        %v1938 = vld [vmem:[%s1922 + $0x78] sm:$0xff]
        %1939 = vmatprep.subr.mxu0 0.0
        %1940 = vmatpush1.msra.mxu0 %v1938
        %1941 = vmatprep.subr.mxu0 0.0
        %1942 = vmatpush1.msra.mxu0 %v1937
        %1943 = vmatprep.subr.mxu0 0.0
        %1944 = vmatpush1.msra.mxu0 %v1936
        %1945 = vmatprep.subr.mxu0 0.0
        %1946 = vmatpush1.msra.mxu0 %v1935
        %1947 = vmatprep.subr.mxu0 0.0
        %1948 = vmatpush1.msra.mxu0 %v1934
        %1949 = vmatprep.subr.mxu0 0.0
        %1950 = vmatpush1.msra.mxu0 %v1933
        %1951 = vmatprep.subr.mxu0 0.0
        %1952 = vmatpush1.msra.mxu0 %v1932
        %1953 = vmatprep.subr.mxu0 0.0
        %1954 = vmatpush1.msra.mxu0 %v1931
        %1955 = vmatprep.subr.mxu0 0.0
        %1956 = vmatpush1.msra.mxu0 %v1930
        %1957 = vmatprep.subr.mxu0 0.0
        %1958 = vmatpush1.msra.mxu0 %v1929
        %1959 = vmatprep.subr.mxu0 0.0
        %1960 = vmatpush1.msra.mxu0 %v1928
        %1961 = vmatprep.subr.mxu0 0.0
        %1962 = vmatpush1.msra.mxu0 %v1927
        %1963 = vmatprep.subr.mxu0 0.0
        %1964 = vmatpush1.msra.mxu0 %v1926
        %1965 = vmatprep.subr.mxu0 0.0
        %1966 = vmatpush1.msra.mxu0 %v1925
        %1967 = vmatprep.subr.mxu0 0.0
        %1968 = vmatpush1.msra.mxu0 %v1924
        %1969 = vmatprep.subr.mxu0 0.0
        %1970 = vmatpush1.msra.mxu0 %v1923
        %1971 = vmatprep.subr.mxu0 0.0
        %1972 = vmatpush2.msra.mxu0 0.0
        %1973 = vmatprep.subr.mxu0 0.0
        %1974 = vmatpush2.msra.mxu0 0.0
        %1975 = vmatprep.subr.mxu0 0.0
        %1976 = vmatpush2.msra.mxu0 0.0
        %1977 = vmatprep.subr.mxu0 0.0
        %1978 = vmatpush2.msra.mxu0 0.0
        %1979 = vmatprep.subr.mxu0 0.0
        %1980 = vmatpush2.msra.mxu0 0.0
        %1981 = vmatprep.subr.mxu0 0.0
        %1982 = vmatpush2.msra.mxu0 0.0
        %1983 = vmatprep.subr.mxu0 0.0
        %1984 = vmatpush2.msra.mxu0 0.0
        %1985 = vmatprep.subr.mxu0 0.0
        %1986 = vmatpush2.msra.mxu0 0.0
        %1987 = vmatprep.subr.mxu0 0.0
        %1988 = vmatpush2.msra.mxu0 0.0
        %1989 = vmatprep.subr.mxu0 0.0
        %1990 = vmatpush2.msra.mxu0 0.0
        %1991 = vmatprep.subr.mxu0 0.0
        %1992 = vmatpush2.msra.mxu0 0.0
        %1993 = vmatprep.subr.mxu0 0.0
        %1994 = vmatpush2.msra.mxu0 0.0
        %1995 = vmatprep.subr.mxu0 0.0
        %1996 = vmatpush2.msra.mxu0 0.0
        %1997 = vmatprep.subr.mxu0 0.0
        %1998 = vmatpush2.msra.mxu0 0.0
        %1999 = vmatprep.subr.mxu0 0.0
        %2000 = vmatpush2.msra.mxu0 0.0
        %2001 = vmatprep.subr.mxu0 0.0
        %2002 = vmatpush2.msra.mxu0 0.0
        %2003 = vmatprep.mubr.f32.mxu0 0.0
        %2004 = vmatmul.mubr.f32.gmra.mxu0 %v1919
        %v2005 = vpop.f32.mrf.mxu0
        %v2006 = vadd.f32 0.0, %v2005
        %v2007 = vpop.f32.mrf.mxu0
        %2008 = vmatprep.mubr.f32.mxu0 0.0
        %2009 = vmatmul.mubr.f32.gmra.mxu0 %v1920
        %v2010 = vpop.f32.mrf.mxu0
        %v2011 = vadd.f32 0.0, %v2010
        %v2012 = vpop.f32.mrf.mxu0
        %2013 = vmatprep.mubr.f32.mxu0 0.0
        %2014 = vmatmul.mubr.f32.gmra.mxu0 %v1921
        %v2015 = vpop.f32.mrf.mxu0
        %v2016 = vadd.f32 0.0, %v2015
        %v2017 = vpop.f32.mrf.mxu0
        %2018 = vdwg.mxu0
        %v2019 = vadd.f32 %v1916, %v2006
        %v2020 = vadd.f32 %v1917, %v2011
        %v2021 = vadd.f32 %v1918, %v2016
        %v2022 = vld [vmem:[#allocation4 + $0x3] sm:$0xff]
        %v2023 = vld [vmem:[#allocation4 + $0xb] sm:$0xff]
        %v2024 = vld [vmem:[#allocation4 + $0x13] sm:$0xff]
        %s2025 = scalar_lea.vmem [#allocation11], 384
        %v2026 = vld [vmem:[%s2025] sm:$0xff]
        %v2027 = vld [vmem:[%s2025 + $0x8] sm:$0xff]
        %v2028 = vld [vmem:[%s2025 + $0x10] sm:$0xff]
        %v2029 = vld [vmem:[%s2025 + $0x18] sm:$0xff]
        %v2030 = vld [vmem:[%s2025 + $0x20] sm:$0xff]
        %v2031 = vld [vmem:[%s2025 + $0x28] sm:$0xff]
        %v2032 = vld [vmem:[%s2025 + $0x30] sm:$0xff]
        %v2033 = vld [vmem:[%s2025 + $0x38] sm:$0xff]
        %v2034 = vld [vmem:[%s2025 + $0x40] sm:$0xff]
        %v2035 = vld [vmem:[%s2025 + $0x48] sm:$0xff]
        %v2036 = vld [vmem:[%s2025 + $0x50] sm:$0xff]
        %v2037 = vld [vmem:[%s2025 + $0x58] sm:$0xff]
        %v2038 = vld [vmem:[%s2025 + $0x60] sm:$0xff]
        %v2039 = vld [vmem:[%s2025 + $0x68] sm:$0xff]
        %v2040 = vld [vmem:[%s2025 + $0x70] sm:$0xff]
        %v2041 = vld [vmem:[%s2025 + $0x78] sm:$0xff]
        %2042 = vmatprep.subr.mxu0 0.0
        %2043 = vmatpush1.msra.mxu0 %v2041
        %2044 = vmatprep.subr.mxu0 0.0
        %2045 = vmatpush1.msra.mxu0 %v2040
        %2046 = vmatprep.subr.mxu0 0.0
        %2047 = vmatpush1.msra.mxu0 %v2039
        %2048 = vmatprep.subr.mxu0 0.0
        %2049 = vmatpush1.msra.mxu0 %v2038
        %2050 = vmatprep.subr.mxu0 0.0
        %2051 = vmatpush1.msra.mxu0 %v2037
        %2052 = vmatprep.subr.mxu0 0.0
        %2053 = vmatpush1.msra.mxu0 %v2036
        %2054 = vmatprep.subr.mxu0 0.0
        %2055 = vmatpush1.msra.mxu0 %v2035
        %2056 = vmatprep.subr.mxu0 0.0
        %2057 = vmatpush1.msra.mxu0 %v2034
        %2058 = vmatprep.subr.mxu0 0.0
        %2059 = vmatpush1.msra.mxu0 %v2033
        %2060 = vmatprep.subr.mxu0 0.0
        %2061 = vmatpush1.msra.mxu0 %v2032
        %2062 = vmatprep.subr.mxu0 0.0
        %2063 = vmatpush1.msra.mxu0 %v2031
        %2064 = vmatprep.subr.mxu0 0.0
        %2065 = vmatpush1.msra.mxu0 %v2030
        %2066 = vmatprep.subr.mxu0 0.0
        %2067 = vmatpush1.msra.mxu0 %v2029
        %2068 = vmatprep.subr.mxu0 0.0
        %2069 = vmatpush1.msra.mxu0 %v2028
        %2070 = vmatprep.subr.mxu0 0.0
        %2071 = vmatpush1.msra.mxu0 %v2027
        %2072 = vmatprep.subr.mxu0 0.0
        %2073 = vmatpush1.msra.mxu0 %v2026
        %2074 = vmatprep.subr.mxu0 0.0
        %2075 = vmatpush2.msra.mxu0 0.0
        %2076 = vmatprep.subr.mxu0 0.0
        %2077 = vmatpush2.msra.mxu0 0.0
        %2078 = vmatprep.subr.mxu0 0.0
        %2079 = vmatpush2.msra.mxu0 0.0
        %2080 = vmatprep.subr.mxu0 0.0
        %2081 = vmatpush2.msra.mxu0 0.0
        %2082 = vmatprep.subr.mxu0 0.0
        %2083 = vmatpush2.msra.mxu0 0.0
        %2084 = vmatprep.subr.mxu0 0.0
        %2085 = vmatpush2.msra.mxu0 0.0
        %2086 = vmatprep.subr.mxu0 0.0
        %2087 = vmatpush2.msra.mxu0 0.0
        %2088 = vmatprep.subr.mxu0 0.0
        %2089 = vmatpush2.msra.mxu0 0.0
        %2090 = vmatprep.subr.mxu0 0.0
        %2091 = vmatpush2.msra.mxu0 0.0
        %2092 = vmatprep.subr.mxu0 0.0
        %2093 = vmatpush2.msra.mxu0 0.0
        %2094 = vmatprep.subr.mxu0 0.0
        %2095 = vmatpush2.msra.mxu0 0.0
        %2096 = vmatprep.subr.mxu0 0.0
        %2097 = vmatpush2.msra.mxu0 0.0
        %2098 = vmatprep.subr.mxu0 0.0
        %2099 = vmatpush2.msra.mxu0 0.0
        %2100 = vmatprep.subr.mxu0 0.0
        %2101 = vmatpush2.msra.mxu0 0.0
        %2102 = vmatprep.subr.mxu0 0.0
        %2103 = vmatpush2.msra.mxu0 0.0
        %2104 = vmatprep.subr.mxu0 0.0
        %2105 = vmatpush2.msra.mxu0 0.0
        %2106 = vmatprep.mubr.f32.mxu0 0.0
        %2107 = vmatmul.mubr.f32.gmra.mxu0 %v2022
        %v2108 = vpop.f32.mrf.mxu0
        %v2109 = vadd.f32 0.0, %v2108
        %v2110 = vpop.f32.mrf.mxu0
        %2111 = vmatprep.mubr.f32.mxu0 0.0
        %2112 = vmatmul.mubr.f32.gmra.mxu0 %v2023
        %v2113 = vpop.f32.mrf.mxu0
        %v2114 = vadd.f32 0.0, %v2113
        %v2115 = vpop.f32.mrf.mxu0
        %2116 = vmatprep.mubr.f32.mxu0 0.0
        %2117 = vmatmul.mubr.f32.gmra.mxu0 %v2024
        %v2118 = vpop.f32.mrf.mxu0
        %v2119 = vadd.f32 0.0, %v2118
        %v2120 = vpop.f32.mrf.mxu0
        %2121 = vdwg.mxu0
        %v2122 = vadd.f32 %v2019, %v2109
        %v2123 = vadd.f32 %v2020, %v2114
        %v2124 = vadd.f32 %v2021, %v2119
        %v2125 = vld [vmem:[#allocation4 + $0x4] sm:$0xff]
        %v2126 = vld [vmem:[#allocation4 + $0xc] sm:$0xff]
        %v2127 = vld [vmem:[#allocation4 + $0x14] sm:$0xff]
        %s2128 = scalar_lea.vmem [#allocation11], 512
        %v2129 = vld [vmem:[%s2128] sm:$0xff]
        %v2130 = vld [vmem:[%s2128 + $0x8] sm:$0xff]
        %v2131 = vld [vmem:[%s2128 + $0x10] sm:$0xff]
        %v2132 = vld [vmem:[%s2128 + $0x18] sm:$0xff]
        %v2133 = vld [vmem:[%s2128 + $0x20] sm:$0xff]
        %v2134 = vld [vmem:[%s2128 + $0x28] sm:$0xff]
        %v2135 = vld [vmem:[%s2128 + $0x30] sm:$0xff]
        %v2136 = vld [vmem:[%s2128 + $0x38] sm:$0xff]
        %v2137 = vld [vmem:[%s2128 + $0x40] sm:$0xff]
        %v2138 = vld [vmem:[%s2128 + $0x48] sm:$0xff]
        %v2139 = vld [vmem:[%s2128 + $0x50] sm:$0xff]
        %v2140 = vld [vmem:[%s2128 + $0x58] sm:$0xff]
        %v2141 = vld [vmem:[%s2128 + $0x60] sm:$0xff]
        %v2142 = vld [vmem:[%s2128 + $0x68] sm:$0xff]
        %v2143 = vld [vmem:[%s2128 + $0x70] sm:$0xff]
        %v2144 = vld [vmem:[%s2128 + $0x78] sm:$0xff]
        %2145 = vmatprep.subr.mxu0 0.0
        %2146 = vmatpush1.msra.mxu0 %v2144
        %2147 = vmatprep.subr.mxu0 0.0
        %2148 = vmatpush1.msra.mxu0 %v2143
        %2149 = vmatprep.subr.mxu0 0.0
        %2150 = vmatpush1.msra.mxu0 %v2142
        %2151 = vmatprep.subr.mxu0 0.0
        %2152 = vmatpush1.msra.mxu0 %v2141
        %2153 = vmatprep.subr.mxu0 0.0
        %2154 = vmatpush1.msra.mxu0 %v2140
        %2155 = vmatprep.subr.mxu0 0.0
        %2156 = vmatpush1.msra.mxu0 %v2139
        %2157 = vmatprep.subr.mxu0 0.0
        %2158 = vmatpush1.msra.mxu0 %v2138
        %2159 = vmatprep.subr.mxu0 0.0
        %2160 = vmatpush1.msra.mxu0 %v2137
        %2161 = vmatprep.subr.mxu0 0.0
        %2162 = vmatpush1.msra.mxu0 %v2136
        %2163 = vmatprep.subr.mxu0 0.0
        %2164 = vmatpush1.msra.mxu0 %v2135
        %2165 = vmatprep.subr.mxu0 0.0
        %2166 = vmatpush1.msra.mxu0 %v2134
        %2167 = vmatprep.subr.mxu0 0.0
        %2168 = vmatpush1.msra.mxu0 %v2133
        %2169 = vmatprep.subr.mxu0 0.0
        %2170 = vmatpush1.msra.mxu0 %v2132
        %2171 = vmatprep.subr.mxu0 0.0
        %2172 = vmatpush1.msra.mxu0 %v2131
        %2173 = vmatprep.subr.mxu0 0.0
        %2174 = vmatpush1.msra.mxu0 %v2130
        %2175 = vmatprep.subr.mxu0 0.0
        %2176 = vmatpush1.msra.mxu0 %v2129
        %2177 = vmatprep.subr.mxu0 0.0
        %2178 = vmatpush2.msra.mxu0 0.0
        %2179 = vmatprep.subr.mxu0 0.0
        %2180 = vmatpush2.msra.mxu0 0.0
        %2181 = vmatprep.subr.mxu0 0.0
        %2182 = vmatpush2.msra.mxu0 0.0
        %2183 = vmatprep.subr.mxu0 0.0
        %2184 = vmatpush2.msra.mxu0 0.0
        %2185 = vmatprep.subr.mxu0 0.0
        %2186 = vmatpush2.msra.mxu0 0.0
        %2187 = vmatprep.subr.mxu0 0.0
        %2188 = vmatpush2.msra.mxu0 0.0
        %2189 = vmatprep.subr.mxu0 0.0
        %2190 = vmatpush2.msra.mxu0 0.0
        %2191 = vmatprep.subr.mxu0 0.0
        %2192 = vmatpush2.msra.mxu0 0.0
        %2193 = vmatprep.subr.mxu0 0.0
        %2194 = vmatpush2.msra.mxu0 0.0
        %2195 = vmatprep.subr.mxu0 0.0
        %2196 = vmatpush2.msra.mxu0 0.0
        %2197 = vmatprep.subr.mxu0 0.0
        %2198 = vmatpush2.msra.mxu0 0.0
        %2199 = vmatprep.subr.mxu0 0.0
        %2200 = vmatpush2.msra.mxu0 0.0
        %2201 = vmatprep.subr.mxu0 0.0
        %2202 = vmatpush2.msra.mxu0 0.0
        %2203 = vmatprep.subr.mxu0 0.0
        %2204 = vmatpush2.msra.mxu0 0.0
        %2205 = vmatprep.subr.mxu0 0.0
        %2206 = vmatpush2.msra.mxu0 0.0
        %2207 = vmatprep.subr.mxu0 0.0
        %2208 = vmatpush2.msra.mxu0 0.0
        %2209 = vmatprep.mubr.f32.mxu0 0.0
        %2210 = vmatmul.mubr.f32.gmra.mxu0 %v2125
        %v2211 = vpop.f32.mrf.mxu0
        %v2212 = vadd.f32 0.0, %v2211
        %v2213 = vpop.f32.mrf.mxu0
        %2214 = vmatprep.mubr.f32.mxu0 0.0
        %2215 = vmatmul.mubr.f32.gmra.mxu0 %v2126
        %v2216 = vpop.f32.mrf.mxu0
        %v2217 = vadd.f32 0.0, %v2216
        %v2218 = vpop.f32.mrf.mxu0
        %2219 = vmatprep.mubr.f32.mxu0 0.0
        %2220 = vmatmul.mubr.f32.gmra.mxu0 %v2127
        %v2221 = vpop.f32.mrf.mxu0
        %v2222 = vadd.f32 0.0, %v2221
        %v2223 = vpop.f32.mrf.mxu0
        %2224 = vdwg.mxu0
        %v2225 = vadd.f32 %v2122, %v2212
        %v2226 = vadd.f32 %v2123, %v2217
        %v2227 = vadd.f32 %v2124, %v2222
        %v2228 = vtanh.pop %v2225
        %v2229 = vtanh.pop %v2226
        %v2230 = vtanh.pop %v2227
        %2231 = vst [vmem:[#allocation3] sm:$0xff] %v2228
        %2232 = vst [vmem:[#allocation3 + $0x8] sm:$0xff] %v2229
        %2233 = vst [vmem:[#allocation3 + $0x10] sm:$0xff] %v2230
        %s2234 = sadd.s32 %s427, 4294967292
        // Predicated region
        $region126: #{tpu_custom_call.1} parent=59 // pred_check
          %p2235 = pneg %p500
        $region127: #{tpu_custom_call.1} parent=59 // pred_check_branch
          %2237 = sbr.rel (%p2235) target = $region129
        $region128: #{tpu_custom_call.1} parent=59 // pred_region
          %v2238 = vstv %s2234
          %v2239 = vadd.s32 %v502, %v2238
          %v2240 = vadd.s32 %v503, %v2238
          %v2241 = vadd.s32 %v504, %v2238
          %vm2242 = vcmp.ge.s32.totalorder %v2239, 0
          %vm2243 = vcmp.ge.s32.totalorder %v2240, 0
          %vm2244 = vcmp.ge.s32.totalorder %v2241, 0
          %vm2245 = vcmp.lt.s32.totalorder %v2239, 16
          %vm2246 = vcmp.lt.s32.totalorder %v2240, 16
          %vm2247 = vcmp.lt.s32.totalorder %v2241, 16
          %vm2248 = vmand %vm2242, %vm2245
          %vm2249 = vmand %vm2243, %vm2246
          %vm2250 = vmand %vm2244, %vm2247
          %v2251 = vsel %vm2248, 1, 0
          %v2252 = vsel %vm2249, 1, 0
          %v2253 = vsel %vm2250, 1, 0
          %vm2254 = vcmp.eq.s32.totalorder %v2251, 1
          %vm2255 = vcmp.eq.s32.totalorder %v2252, 1
          %vm2256 = vcmp.eq.s32.totalorder %v2253, 1
          %v2257 = vsel %vm2254, %v2228, 0.0
          %v2258 = vsel %vm2255, %v2229, 0.0
          %v2259 = vsel %vm2256, %v2230, 0.0
          %2260 = vst [vmem:[#allocation3] sm:$0xff] %v2257
          %2261 = vst [vmem:[#allocation3 + $0x8] sm:$0xff] %v2258
          %2262 = vst [vmem:[#allocation3 + $0x10] sm:$0xff] %v2259
        $region129: #{tpu_custom_call.1} parent=59 // pred_fallthru
          _
        %v2263 = vld [vmem:[%s9] sm:$0x1]
        %v2265 = vlaneseq
        %v2266 = vshrl.u32 %v2265, 7
        %v2267 = vsub.s32 0, %v2266
        %v2268 = vrot.slane %v2263, %v2267
        %v2270 = vld [vmem:[#allocation3] sm:$0xff]
        %v2271 = vld [vmem:[#allocation3 + $0x8] sm:$0xff]
        %v2272 = vld [vmem:[#allocation3 + $0x10] sm:$0xf]
        %v2273 = vld [vmem:[#allocation12] sm:$0xff]
        %v2274 = vld [vmem:[#allocation12 + $0x8] sm:$0xff]
        %v2275 = vld [vmem:[#allocation12 + $0x10] sm:$0xff]
        %v2276 = vld [vmem:[#allocation12 + $0x18] sm:$0xff]
        %v2277 = vld [vmem:[#allocation12 + $0x20] sm:$0xff]
        %v2278 = vld [vmem:[#allocation12 + $0x28] sm:$0xff]
        %v2279 = vld [vmem:[#allocation12 + $0x30] sm:$0xff]
        %v2280 = vld [vmem:[#allocation12 + $0x38] sm:$0xff]
        %v2281 = vld [vmem:[#allocation12 + $0x40] sm:$0xff]
        %v2282 = vld [vmem:[#allocation12 + $0x48] sm:$0xff]
        %v2283 = vld [vmem:[#allocation12 + $0x50] sm:$0xff]
        %v2284 = vld [vmem:[#allocation12 + $0x58] sm:$0xff]
        %v2285 = vld [vmem:[#allocation12 + $0x60] sm:$0xff]
        %v2286 = vld [vmem:[#allocation12 + $0x68] sm:$0xff]
        %v2287 = vld [vmem:[#allocation12 + $0x70] sm:$0xff]
        %v2288 = vld [vmem:[#allocation12 + $0x78] sm:$0xff]
        %2289 = vmatprep.subr.mxu0 0.0
        %2290 = vmatpush1.msra.mxu0 %v2288
        %2291 = vmatprep.subr.mxu0 0.0
        %2292 = vmatpush1.msra.mxu0 %v2287
        %2293 = vmatprep.subr.mxu0 0.0
        %2294 = vmatpush1.msra.mxu0 %v2286
        %2295 = vmatprep.subr.mxu0 0.0
        %2296 = vmatpush1.msra.mxu0 %v2285
        %2297 = vmatprep.subr.mxu0 0.0
        %2298 = vmatpush1.msra.mxu0 %v2284
        %2299 = vmatprep.subr.mxu0 0.0
        %2300 = vmatpush1.msra.mxu0 %v2283
        %2301 = vmatprep.subr.mxu0 0.0
        %2302 = vmatpush1.msra.mxu0 %v2282
        %2303 = vmatprep.subr.mxu0 0.0
        %2304 = vmatpush1.msra.mxu0 %v2281
        %2305 = vmatprep.subr.mxu0 0.0
        %2306 = vmatpush1.msra.mxu0 %v2280
        %2307 = vmatprep.subr.mxu0 0.0
        %2308 = vmatpush1.msra.mxu0 %v2279
        %2309 = vmatprep.subr.mxu0 0.0
        %2310 = vmatpush1.msra.mxu0 %v2278
        %2311 = vmatprep.subr.mxu0 0.0
        %2312 = vmatpush1.msra.mxu0 %v2277
        %2313 = vmatprep.subr.mxu0 0.0
        %2314 = vmatpush1.msra.mxu0 %v2276
        %2315 = vmatprep.subr.mxu0 0.0
        %2316 = vmatpush1.msra.mxu0 %v2275
        %2317 = vmatprep.subr.mxu0 0.0
        %2318 = vmatpush1.msra.mxu0 %v2274
        %2319 = vmatprep.subr.mxu0 0.0
        %2320 = vmatpush1.msra.mxu0 %v2273
        %2321 = vmatprep.subr.mxu0 0.0
        %2322 = vmatpush2.msra.mxu0 0.0
        %2323 = vmatprep.subr.mxu0 0.0
        %2324 = vmatpush2.msra.mxu0 0.0
        %2325 = vmatprep.subr.mxu0 0.0
        %2326 = vmatpush2.msra.mxu0 0.0
        %2327 = vmatprep.subr.mxu0 0.0
        %2328 = vmatpush2.msra.mxu0 0.0
        %2329 = vmatprep.subr.mxu0 0.0
        %2330 = vmatpush2.msra.mxu0 0.0
        %2331 = vmatprep.subr.mxu0 0.0
        %2332 = vmatpush2.msra.mxu0 0.0
        %2333 = vmatprep.subr.mxu0 0.0
        %2334 = vmatpush2.msra.mxu0 0.0
        %2335 = vmatprep.subr.mxu0 0.0
        %2336 = vmatpush2.msra.mxu0 0.0
        %2337 = vmatprep.subr.mxu0 0.0
        %2338 = vmatpush2.msra.mxu0 0.0
        %2339 = vmatprep.subr.mxu0 0.0
        %2340 = vmatpush2.msra.mxu0 0.0
        %2341 = vmatprep.subr.mxu0 0.0
        %2342 = vmatpush2.msra.mxu0 0.0
        %2343 = vmatprep.subr.mxu0 0.0
        %2344 = vmatpush2.msra.mxu0 0.0
        %2345 = vmatprep.subr.mxu0 0.0
        %2346 = vmatpush2.msra.mxu0 0.0
        %2347 = vmatprep.subr.mxu0 0.0
        %2348 = vmatpush2.msra.mxu0 0.0
        %2349 = vmatprep.subr.mxu0 0.0
        %2350 = vmatpush2.msra.mxu0 0.0
        %2351 = vmatprep.subr.mxu0 0.0
        %2352 = vmatpush2.msra.mxu0 0.0
        %2353 = vmatprep.mubr.f32.mxu0 0.0
        %2354 = vmatmul.mubr.f32.gmra.mxu0 %v2270
        %v2355 = vpop.f32.mrf.mxu0
        %v2356 = vadd.f32 0.0, %v2355
        %v2357 = vpop.f32.mrf.mxu0
        %2358 = vmatprep.mubr.f32.mxu0 0.0
        %2359 = vmatmul.mubr.f32.gmra.mxu0 %v2271
        %v2360 = vpop.f32.mrf.mxu0
        %v2361 = vadd.f32 0.0, %v2360
        %v2362 = vpop.f32.mrf.mxu0
        %2363 = vmatprep.mubr.f32.mxu0 0.0
        %2364 = vmatmul.mubr.f32.gmra.mxu0 %v2272
        %v2365 = vpop.f32.mrf.mxu0
        %v2366 = vadd.f32 0.0, %v2365
        %v2367 = vpop.f32.mrf.mxu0
        %2368 = vdwg.mxu0
        %v2369 = vadd.f32 %v2268, %v2356
        %v2370 = vadd.f32 %v2268, %v2361
        %v2371 = vadd.f32 %v2268, %v2366
        %v2372 = vld [vmem:[#allocation3 + $0x1] sm:$0xff]
        %v2373 = vld [vmem:[#allocation3 + $0x9] sm:$0xff]
        %v2374 = vld [vmem:[#allocation3 + $0x11] sm:$0xf]
        %s2375 = scalar_lea.vmem [#allocation12], 128
        %v2376 = vld [vmem:[%s2375] sm:$0xff]
        %v2377 = vld [vmem:[%s2375 + $0x8] sm:$0xff]
        %v2378 = vld [vmem:[%s2375 + $0x10] sm:$0xff]
        %v2379 = vld [vmem:[%s2375 + $0x18] sm:$0xff]
        %v2380 = vld [vmem:[%s2375 + $0x20] sm:$0xff]
        %v2381 = vld [vmem:[%s2375 + $0x28] sm:$0xff]
        %v2382 = vld [vmem:[%s2375 + $0x30] sm:$0xff]
        %v2383 = vld [vmem:[%s2375 + $0x38] sm:$0xff]
        %v2384 = vld [vmem:[%s2375 + $0x40] sm:$0xff]
        %v2385 = vld [vmem:[%s2375 + $0x48] sm:$0xff]
        %v2386 = vld [vmem:[%s2375 + $0x50] sm:$0xff]
        %v2387 = vld [vmem:[%s2375 + $0x58] sm:$0xff]
        %v2388 = vld [vmem:[%s2375 + $0x60] sm:$0xff]
        %v2389 = vld [vmem:[%s2375 + $0x68] sm:$0xff]
        %v2390 = vld [vmem:[%s2375 + $0x70] sm:$0xff]
        %v2391 = vld [vmem:[%s2375 + $0x78] sm:$0xff]
        %2392 = vmatprep.subr.mxu0 0.0
        %2393 = vmatpush1.msra.mxu0 %v2391
        %2394 = vmatprep.subr.mxu0 0.0
        %2395 = vmatpush1.msra.mxu0 %v2390
        %2396 = vmatprep.subr.mxu0 0.0
        %2397 = vmatpush1.msra.mxu0 %v2389
        %2398 = vmatprep.subr.mxu0 0.0
        %2399 = vmatpush1.msra.mxu0 %v2388
        %2400 = vmatprep.subr.mxu0 0.0
        %2401 = vmatpush1.msra.mxu0 %v2387
        %2402 = vmatprep.subr.mxu0 0.0
        %2403 = vmatpush1.msra.mxu0 %v2386
        %2404 = vmatprep.subr.mxu0 0.0
        %2405 = vmatpush1.msra.mxu0 %v2385
        %2406 = vmatprep.subr.mxu0 0.0
        %2407 = vmatpush1.msra.mxu0 %v2384
        %2408 = vmatprep.subr.mxu0 0.0
        %2409 = vmatpush1.msra.mxu0 %v2383
        %2410 = vmatprep.subr.mxu0 0.0
        %2411 = vmatpush1.msra.mxu0 %v2382
        %2412 = vmatprep.subr.mxu0 0.0
        %2413 = vmatpush1.msra.mxu0 %v2381
        %2414 = vmatprep.subr.mxu0 0.0
        %2415 = vmatpush1.msra.mxu0 %v2380
        %2416 = vmatprep.subr.mxu0 0.0
        %2417 = vmatpush1.msra.mxu0 %v2379
        %2418 = vmatprep.subr.mxu0 0.0
        %2419 = vmatpush1.msra.mxu0 %v2378
        %2420 = vmatprep.subr.mxu0 0.0
        %2421 = vmatpush1.msra.mxu0 %v2377
        %2422 = vmatprep.subr.mxu0 0.0
        %2423 = vmatpush1.msra.mxu0 %v2376
        %2424 = vmatprep.subr.mxu0 0.0
        %2425 = vmatpush2.msra.mxu0 0.0
        %2426 = vmatprep.subr.mxu0 0.0
        %2427 = vmatpush2.msra.mxu0 0.0
        %2428 = vmatprep.subr.mxu0 0.0
        %2429 = vmatpush2.msra.mxu0 0.0
        %2430 = vmatprep.subr.mxu0 0.0
        %2431 = vmatpush2.msra.mxu0 0.0
        %2432 = vmatprep.subr.mxu0 0.0
        %2433 = vmatpush2.msra.mxu0 0.0
        %2434 = vmatprep.subr.mxu0 0.0
        %2435 = vmatpush2.msra.mxu0 0.0
        %2436 = vmatprep.subr.mxu0 0.0
        %2437 = vmatpush2.msra.mxu0 0.0
        %2438 = vmatprep.subr.mxu0 0.0
        %2439 = vmatpush2.msra.mxu0 0.0
        %2440 = vmatprep.subr.mxu0 0.0
        %2441 = vmatpush2.msra.mxu0 0.0
        %2442 = vmatprep.subr.mxu0 0.0
        %2443 = vmatpush2.msra.mxu0 0.0
        %2444 = vmatprep.subr.mxu0 0.0
        %2445 = vmatpush2.msra.mxu0 0.0
        %2446 = vmatprep.subr.mxu0 0.0
        %2447 = vmatpush2.msra.mxu0 0.0
        %2448 = vmatprep.subr.mxu0 0.0
        %2449 = vmatpush2.msra.mxu0 0.0
        %2450 = vmatprep.subr.mxu0 0.0
        %2451 = vmatpush2.msra.mxu0 0.0
        %2452 = vmatprep.subr.mxu0 0.0
        %2453 = vmatpush2.msra.mxu0 0.0
        %2454 = vmatprep.subr.mxu0 0.0
        %2455 = vmatpush2.msra.mxu0 0.0
        %2456 = vmatprep.mubr.f32.mxu0 0.0
        %2457 = vmatmul.mubr.f32.gmra.mxu0 %v2372
        %v2458 = vpop.f32.mrf.mxu0
        %v2459 = vadd.f32 0.0, %v2458
        %v2460 = vpop.f32.mrf.mxu0
        %2461 = vmatprep.mubr.f32.mxu0 0.0
        %2462 = vmatmul.mubr.f32.gmra.mxu0 %v2373
        %v2463 = vpop.f32.mrf.mxu0
        %v2464 = vadd.f32 0.0, %v2463
        %v2465 = vpop.f32.mrf.mxu0
        %2466 = vmatprep.mubr.f32.mxu0 0.0
        %2467 = vmatmul.mubr.f32.gmra.mxu0 %v2374
        %v2468 = vpop.f32.mrf.mxu0
        %v2469 = vadd.f32 0.0, %v2468
        %v2470 = vpop.f32.mrf.mxu0
        %2471 = vdwg.mxu0
        %v2472 = vadd.f32 %v2369, %v2459
        %v2473 = vadd.f32 %v2370, %v2464
        %v2474 = vadd.f32 %v2371, %v2469
        %v2475 = vld [vmem:[#allocation3 + $0x2] sm:$0xff]
        %v2476 = vld [vmem:[#allocation3 + $0xa] sm:$0xff]
        %v2477 = vld [vmem:[#allocation3 + $0x12] sm:$0xf]
        %s2478 = scalar_lea.vmem [#allocation12], 256
        %v2479 = vld [vmem:[%s2478] sm:$0xff]
        %v2480 = vld [vmem:[%s2478 + $0x8] sm:$0xff]
        %v2481 = vld [vmem:[%s2478 + $0x10] sm:$0xff]
        %v2482 = vld [vmem:[%s2478 + $0x18] sm:$0xff]
        %v2483 = vld [vmem:[%s2478 + $0x20] sm:$0xff]
        %v2484 = vld [vmem:[%s2478 + $0x28] sm:$0xff]
        %v2485 = vld [vmem:[%s2478 + $0x30] sm:$0xff]
        %v2486 = vld [vmem:[%s2478 + $0x38] sm:$0xff]
        %v2487 = vld [vmem:[%s2478 + $0x40] sm:$0xff]
        %v2488 = vld [vmem:[%s2478 + $0x48] sm:$0xff]
        %v2489 = vld [vmem:[%s2478 + $0x50] sm:$0xff]
        %v2490 = vld [vmem:[%s2478 + $0x58] sm:$0xff]
        %v2491 = vld [vmem:[%s2478 + $0x60] sm:$0xff]
        %v2492 = vld [vmem:[%s2478 + $0x68] sm:$0xff]
        %v2493 = vld [vmem:[%s2478 + $0x70] sm:$0xff]
        %v2494 = vld [vmem:[%s2478 + $0x78] sm:$0xff]
        %2495 = vmatprep.subr.mxu0 0.0
        %2496 = vmatpush1.msra.mxu0 %v2494
        %2497 = vmatprep.subr.mxu0 0.0
        %2498 = vmatpush1.msra.mxu0 %v2493
        %2499 = vmatprep.subr.mxu0 0.0
        %2500 = vmatpush1.msra.mxu0 %v2492
        %2501 = vmatprep.subr.mxu0 0.0
        %2502 = vmatpush1.msra.mxu0 %v2491
        %2503 = vmatprep.subr.mxu0 0.0
        %2504 = vmatpush1.msra.mxu0 %v2490
        %2505 = vmatprep.subr.mxu0 0.0
        %2506 = vmatpush1.msra.mxu0 %v2489
        %2507 = vmatprep.subr.mxu0 0.0
        %2508 = vmatpush1.msra.mxu0 %v2488
        %2509 = vmatprep.subr.mxu0 0.0
        %2510 = vmatpush1.msra.mxu0 %v2487
        %2511 = vmatprep.subr.mxu0 0.0
        %2512 = vmatpush1.msra.mxu0 %v2486
        %2513 = vmatprep.subr.mxu0 0.0
        %2514 = vmatpush1.msra.mxu0 %v2485
        %2515 = vmatprep.subr.mxu0 0.0
        %2516 = vmatpush1.msra.mxu0 %v2484
        %2517 = vmatprep.subr.mxu0 0.0
        %2518 = vmatpush1.msra.mxu0 %v2483
        %2519 = vmatprep.subr.mxu0 0.0
        %2520 = vmatpush1.msra.mxu0 %v2482
        %2521 = vmatprep.subr.mxu0 0.0
        %2522 = vmatpush1.msra.mxu0 %v2481
        %2523 = vmatprep.subr.mxu0 0.0
        %2524 = vmatpush1.msra.mxu0 %v2480
        %2525 = vmatprep.subr.mxu0 0.0
        %2526 = vmatpush1.msra.mxu0 %v2479
        %2527 = vmatprep.subr.mxu0 0.0
        %2528 = vmatpush2.msra.mxu0 0.0
        %2529 = vmatprep.subr.mxu0 0.0
        %2530 = vmatpush2.msra.mxu0 0.0
        %2531 = vmatprep.subr.mxu0 0.0
        %2532 = vmatpush2.msra.mxu0 0.0
        %2533 = vmatprep.subr.mxu0 0.0
        %2534 = vmatpush2.msra.mxu0 0.0
        %2535 = vmatprep.subr.mxu0 0.0
        %2536 = vmatpush2.msra.mxu0 0.0
        %2537 = vmatprep.subr.mxu0 0.0
        %2538 = vmatpush2.msra.mxu0 0.0
        %2539 = vmatprep.subr.mxu0 0.0
        %2540 = vmatpush2.msra.mxu0 0.0
        %2541 = vmatprep.subr.mxu0 0.0
        %2542 = vmatpush2.msra.mxu0 0.0
        %2543 = vmatprep.subr.mxu0 0.0
        %2544 = vmatpush2.msra.mxu0 0.0
        %2545 = vmatprep.subr.mxu0 0.0
        %2546 = vmatpush2.msra.mxu0 0.0
        %2547 = vmatprep.subr.mxu0 0.0
        %2548 = vmatpush2.msra.mxu0 0.0
        %2549 = vmatprep.subr.mxu0 0.0
        %2550 = vmatpush2.msra.mxu0 0.0
        %2551 = vmatprep.subr.mxu0 0.0
        %2552 = vmatpush2.msra.mxu0 0.0
        %2553 = vmatprep.subr.mxu0 0.0
        %2554 = vmatpush2.msra.mxu0 0.0
        %2555 = vmatprep.subr.mxu0 0.0
        %2556 = vmatpush2.msra.mxu0 0.0
        %2557 = vmatprep.subr.mxu0 0.0
        %2558 = vmatpush2.msra.mxu0 0.0
        %2559 = vmatprep.mubr.f32.mxu0 0.0
        %2560 = vmatmul.mubr.f32.gmra.mxu0 %v2475
        %v2561 = vpop.f32.mrf.mxu0
        %v2562 = vadd.f32 0.0, %v2561
        %v2563 = vpop.f32.mrf.mxu0
        %2564 = vmatprep.mubr.f32.mxu0 0.0
        %2565 = vmatmul.mubr.f32.gmra.mxu0 %v2476
        %v2566 = vpop.f32.mrf.mxu0
        %v2567 = vadd.f32 0.0, %v2566
        %v2568 = vpop.f32.mrf.mxu0
        %2569 = vmatprep.mubr.f32.mxu0 0.0
        %2570 = vmatmul.mubr.f32.gmra.mxu0 %v2477
        %v2571 = vpop.f32.mrf.mxu0
        %v2572 = vadd.f32 0.0, %v2571
        %v2573 = vpop.f32.mrf.mxu0
        %2574 = vdwg.mxu0
        %v2575 = vadd.f32 %v2472, %v2562
        %v2576 = vadd.f32 %v2473, %v2567
        %v2577 = vadd.f32 %v2474, %v2572
        %v2578 = vld [vmem:[#allocation3 + $0x3] sm:$0xff]
        %v2579 = vld [vmem:[#allocation3 + $0xb] sm:$0xff]
        %v2580 = vld [vmem:[#allocation3 + $0x13] sm:$0xf]
        %s2581 = scalar_lea.vmem [#allocation12], 384
        %v2582 = vld [vmem:[%s2581] sm:$0xff]
        %v2583 = vld [vmem:[%s2581 + $0x8] sm:$0xff]
        %v2584 = vld [vmem:[%s2581 + $0x10] sm:$0xff]
        %v2585 = vld [vmem:[%s2581 + $0x18] sm:$0xff]
        %v2586 = vld [vmem:[%s2581 + $0x20] sm:$0xff]
        %v2587 = vld [vmem:[%s2581 + $0x28] sm:$0xff]
        %v2588 = vld [vmem:[%s2581 + $0x30] sm:$0xff]
        %v2589 = vld [vmem:[%s2581 + $0x38] sm:$0xff]
        %v2590 = vld [vmem:[%s2581 + $0x40] sm:$0xff]
        %v2591 = vld [vmem:[%s2581 + $0x48] sm:$0xff]
        %v2592 = vld [vmem:[%s2581 + $0x50] sm:$0xff]
        %v2593 = vld [vmem:[%s2581 + $0x58] sm:$0xff]
        %v2594 = vld [vmem:[%s2581 + $0x60] sm:$0xff]
        %v2595 = vld [vmem:[%s2581 + $0x68] sm:$0xff]
        %v2596 = vld [vmem:[%s2581 + $0x70] sm:$0xff]
        %v2597 = vld [vmem:[%s2581 + $0x78] sm:$0xff]
        %2598 = vmatprep.subr.mxu0 0.0
        %2599 = vmatpush1.msra.mxu0 %v2597
        %2600 = vmatprep.subr.mxu0 0.0
        %2601 = vmatpush1.msra.mxu0 %v2596
        %2602 = vmatprep.subr.mxu0 0.0
        %2603 = vmatpush1.msra.mxu0 %v2595
        %2604 = vmatprep.subr.mxu0 0.0
        %2605 = vmatpush1.msra.mxu0 %v2594
        %2606 = vmatprep.subr.mxu0 0.0
        %2607 = vmatpush1.msra.mxu0 %v2593
        %2608 = vmatprep.subr.mxu0 0.0
        %2609 = vmatpush1.msra.mxu0 %v2592
        %2610 = vmatprep.subr.mxu0 0.0
        %2611 = vmatpush1.msra.mxu0 %v2591
        %2612 = vmatprep.subr.mxu0 0.0
        %2613 = vmatpush1.msra.mxu0 %v2590
        %2614 = vmatprep.subr.mxu0 0.0
        %2615 = vmatpush1.msra.mxu0 %v2589
        %2616 = vmatprep.subr.mxu0 0.0
        %2617 = vmatpush1.msra.mxu0 %v2588
        %2618 = vmatprep.subr.mxu0 0.0
        %2619 = vmatpush1.msra.mxu0 %v2587
        %2620 = vmatprep.subr.mxu0 0.0
        %2621 = vmatpush1.msra.mxu0 %v2586
        %2622 = vmatprep.subr.mxu0 0.0
        %2623 = vmatpush1.msra.mxu0 %v2585
        %2624 = vmatprep.subr.mxu0 0.0
        %2625 = vmatpush1.msra.mxu0 %v2584
        %2626 = vmatprep.subr.mxu0 0.0
        %2627 = vmatpush1.msra.mxu0 %v2583
        %2628 = vmatprep.subr.mxu0 0.0
        %2629 = vmatpush1.msra.mxu0 %v2582
        %2630 = vmatprep.subr.mxu0 0.0
        %2631 = vmatpush2.msra.mxu0 0.0
        %2632 = vmatprep.subr.mxu0 0.0
        %2633 = vmatpush2.msra.mxu0 0.0
        %2634 = vmatprep.subr.mxu0 0.0
        %2635 = vmatpush2.msra.mxu0 0.0
        %2636 = vmatprep.subr.mxu0 0.0
        %2637 = vmatpush2.msra.mxu0 0.0
        %2638 = vmatprep.subr.mxu0 0.0
        %2639 = vmatpush2.msra.mxu0 0.0
        %2640 = vmatprep.subr.mxu0 0.0
        %2641 = vmatpush2.msra.mxu0 0.0
        %2642 = vmatprep.subr.mxu0 0.0
        %2643 = vmatpush2.msra.mxu0 0.0
        %2644 = vmatprep.subr.mxu0 0.0
        %2645 = vmatpush2.msra.mxu0 0.0
        %2646 = vmatprep.subr.mxu0 0.0
        %2647 = vmatpush2.msra.mxu0 0.0
        %2648 = vmatprep.subr.mxu0 0.0
        %2649 = vmatpush2.msra.mxu0 0.0
        %2650 = vmatprep.subr.mxu0 0.0
        %2651 = vmatpush2.msra.mxu0 0.0
        %2652 = vmatprep.subr.mxu0 0.0
        %2653 = vmatpush2.msra.mxu0 0.0
        %2654 = vmatprep.subr.mxu0 0.0
        %2655 = vmatpush2.msra.mxu0 0.0
        %2656 = vmatprep.subr.mxu0 0.0
        %2657 = vmatpush2.msra.mxu0 0.0
        %2658 = vmatprep.subr.mxu0 0.0
        %2659 = vmatpush2.msra.mxu0 0.0
        %2660 = vmatprep.subr.mxu0 0.0
        %2661 = vmatpush2.msra.mxu0 0.0
        %2662 = vmatprep.mubr.f32.mxu0 0.0
        %2663 = vmatmul.mubr.f32.gmra.mxu0 %v2578
        %v2664 = vpop.f32.mrf.mxu0
        %v2665 = vadd.f32 0.0, %v2664
        %v2666 = vpop.f32.mrf.mxu0
        %2667 = vmatprep.mubr.f32.mxu0 0.0
        %2668 = vmatmul.mubr.f32.gmra.mxu0 %v2579
        %v2669 = vpop.f32.mrf.mxu0
        %v2670 = vadd.f32 0.0, %v2669
        %v2671 = vpop.f32.mrf.mxu0
        %2672 = vmatprep.mubr.f32.mxu0 0.0
        %2673 = vmatmul.mubr.f32.gmra.mxu0 %v2580
        %v2674 = vpop.f32.mrf.mxu0
        %v2675 = vadd.f32 0.0, %v2674
        %v2676 = vpop.f32.mrf.mxu0
        %2677 = vdwg.mxu0
        %v2678 = vadd.f32 %v2575, %v2665
        %v2679 = vadd.f32 %v2576, %v2670
        %v2680 = vadd.f32 %v2577, %v2675
        %v2681 = vld [vmem:[#allocation3 + $0x4] sm:$0xff]
        %v2682 = vld [vmem:[#allocation3 + $0xc] sm:$0xff]
        %v2683 = vld [vmem:[#allocation3 + $0x14] sm:$0xf]
        %s2684 = scalar_lea.vmem [#allocation12], 512
        %v2685 = vld [vmem:[%s2684] sm:$0xff]
        %v2686 = vld [vmem:[%s2684 + $0x8] sm:$0xff]
        %v2687 = vld [vmem:[%s2684 + $0x10] sm:$0xff]
        %v2688 = vld [vmem:[%s2684 + $0x18] sm:$0xff]
        %v2689 = vld [vmem:[%s2684 + $0x20] sm:$0xff]
        %v2690 = vld [vmem:[%s2684 + $0x28] sm:$0xff]
        %v2691 = vld [vmem:[%s2684 + $0x30] sm:$0xff]
        %v2692 = vld [vmem:[%s2684 + $0x38] sm:$0xff]
        %v2693 = vld [vmem:[%s2684 + $0x40] sm:$0xff]
        %v2694 = vld [vmem:[%s2684 + $0x48] sm:$0xff]
        %v2695 = vld [vmem:[%s2684 + $0x50] sm:$0xff]
        %v2696 = vld [vmem:[%s2684 + $0x58] sm:$0xff]
        %v2697 = vld [vmem:[%s2684 + $0x60] sm:$0xff]
        %v2698 = vld [vmem:[%s2684 + $0x68] sm:$0xff]
        %v2699 = vld [vmem:[%s2684 + $0x70] sm:$0xff]
        %v2700 = vld [vmem:[%s2684 + $0x78] sm:$0xff]
        %2701 = vmatprep.subr.mxu0 0.0
        %2702 = vmatpush1.msra.mxu0 %v2700
        %2703 = vmatprep.subr.mxu0 0.0
        %2704 = vmatpush1.msra.mxu0 %v2699
        %2705 = vmatprep.subr.mxu0 0.0
        %2706 = vmatpush1.msra.mxu0 %v2698
        %2707 = vmatprep.subr.mxu0 0.0
        %2708 = vmatpush1.msra.mxu0 %v2697
        %2709 = vmatprep.subr.mxu0 0.0
        %2710 = vmatpush1.msra.mxu0 %v2696
        %2711 = vmatprep.subr.mxu0 0.0
        %2712 = vmatpush1.msra.mxu0 %v2695
        %2713 = vmatprep.subr.mxu0 0.0
        %2714 = vmatpush1.msra.mxu0 %v2694
        %2715 = vmatprep.subr.mxu0 0.0
        %2716 = vmatpush1.msra.mxu0 %v2693
        %2717 = vmatprep.subr.mxu0 0.0
        %2718 = vmatpush1.msra.mxu0 %v2692
        %2719 = vmatprep.subr.mxu0 0.0
        %2720 = vmatpush1.msra.mxu0 %v2691
        %2721 = vmatprep.subr.mxu0 0.0
        %2722 = vmatpush1.msra.mxu0 %v2690
        %2723 = vmatprep.subr.mxu0 0.0
        %2724 = vmatpush1.msra.mxu0 %v2689
        %2725 = vmatprep.subr.mxu0 0.0
        %2726 = vmatpush1.msra.mxu0 %v2688
        %2727 = vmatprep.subr.mxu0 0.0
        %2728 = vmatpush1.msra.mxu0 %v2687
        %2729 = vmatprep.subr.mxu0 0.0
        %2730 = vmatpush1.msra.mxu0 %v2686
        %2731 = vmatprep.subr.mxu0 0.0
        %2732 = vmatpush1.msra.mxu0 %v2685
        %2733 = vmatprep.subr.mxu0 0.0
        %2734 = vmatpush2.msra.mxu0 0.0
        %2735 = vmatprep.subr.mxu0 0.0
        %2736 = vmatpush2.msra.mxu0 0.0
        %2737 = vmatprep.subr.mxu0 0.0
        %2738 = vmatpush2.msra.mxu0 0.0
        %2739 = vmatprep.subr.mxu0 0.0
        %2740 = vmatpush2.msra.mxu0 0.0
        %2741 = vmatprep.subr.mxu0 0.0
        %2742 = vmatpush2.msra.mxu0 0.0
        %2743 = vmatprep.subr.mxu0 0.0
        %2744 = vmatpush2.msra.mxu0 0.0
        %2745 = vmatprep.subr.mxu0 0.0
        %2746 = vmatpush2.msra.mxu0 0.0
        %2747 = vmatprep.subr.mxu0 0.0
        %2748 = vmatpush2.msra.mxu0 0.0
        %2749 = vmatprep.subr.mxu0 0.0
        %2750 = vmatpush2.msra.mxu0 0.0
        %2751 = vmatprep.subr.mxu0 0.0
        %2752 = vmatpush2.msra.mxu0 0.0
        %2753 = vmatprep.subr.mxu0 0.0
        %2754 = vmatpush2.msra.mxu0 0.0
        %2755 = vmatprep.subr.mxu0 0.0
        %2756 = vmatpush2.msra.mxu0 0.0
        %2757 = vmatprep.subr.mxu0 0.0
        %2758 = vmatpush2.msra.mxu0 0.0
        %2759 = vmatprep.subr.mxu0 0.0
        %2760 = vmatpush2.msra.mxu0 0.0
        %2761 = vmatprep.subr.mxu0 0.0
        %2762 = vmatpush2.msra.mxu0 0.0
        %2763 = vmatprep.subr.mxu0 0.0
        %2764 = vmatpush2.msra.mxu0 0.0
        %2765 = vmatprep.mubr.f32.mxu0 0.0
        %2766 = vmatmul.mubr.f32.gmra.mxu0 %v2681
        %v2767 = vpop.f32.mrf.mxu0
        %v2768 = vadd.f32 0.0, %v2767
        %v2769 = vpop.f32.mrf.mxu0
        %2770 = vmatprep.mubr.f32.mxu0 0.0
        %2771 = vmatmul.mubr.f32.gmra.mxu0 %v2682
        %v2772 = vpop.f32.mrf.mxu0
        %v2773 = vadd.f32 0.0, %v2772
        %v2774 = vpop.f32.mrf.mxu0
        %2775 = vmatprep.mubr.f32.mxu0 0.0
        %2776 = vmatmul.mubr.f32.gmra.mxu0 %v2683
        %v2777 = vpop.f32.mrf.mxu0
        %v2778 = vadd.f32 0.0, %v2777
        %v2779 = vpop.f32.mrf.mxu0
        %2780 = vdwg.mxu0
        %v2781 = vadd.f32 %v2678, %v2768
        %v2782 = vadd.f32 %v2679, %v2773
        %v2783 = vadd.f32 %v2680, %v2778
        %v2784 = vtanh.pop %v2781
        %v2785 = vtanh.pop %v2782
        %v2786 = vtanh.pop %v2783
        %2787 = vst [vmem:[#allocation4] sm:$0xff] %v2784
        %2788 = vst [vmem:[#allocation4 + $0x8] sm:$0xff] %v2785
        %2789 = vst [vmem:[#allocation4 + $0x10] sm:$0xf] %v2786
        %s2790 = sadd.s32 %s427, 4294967294
        // Predicated region
        $region130: #{tpu_custom_call.1} parent=59 // pred_check
          %p2791 = pneg %p500
        $region131: #{tpu_custom_call.1} parent=59 // pred_check_branch
          %2793 = sbr.rel (%p2791) target = $region133
        $region132: #{tpu_custom_call.1} parent=59 // pred_region
          %v2794 = vstv %s2790
          %v2795 = vadd.s32 %v502, %v2794
          %v2796 = vadd.s32 %v503, %v2794
          %v2797 = vadd.s32 %v504, %v2794
          %vm2798 = vcmp.ge.s32.totalorder %v2795, 0
          %vm2799 = vcmp.ge.s32.totalorder %v2796, 0
          %vm2800 = vcmp.ge.s32.totalorder %v2797, 0
          %vm2801 = vcmp.lt.s32.totalorder %v2795, 16
          %vm2802 = vcmp.lt.s32.totalorder %v2796, 16
          %vm2803 = vcmp.lt.s32.totalorder %v2797, 16
          %vm2804 = vmand %vm2798, %vm2801
          %vm2805 = vmand %vm2799, %vm2802
          %vm2806 = vmand %vm2800, %vm2803
          %v2807 = vsel %vm2804, 1, 0
          %v2808 = vsel %vm2805, 1, 0
          %v2809 = vsel %vm2806, 1, 0
          %vm2810 = vcmp.eq.s32.totalorder %v2807, 1
          %vm2811 = vcmp.eq.s32.totalorder %v2808, 1
          %vm2812 = vcmp.eq.s32.totalorder %v2809, 1
          %v2813 = vsel %vm2810, %v2784, 0.0
          %v2814 = vsel %vm2811, %v2785, 0.0
          %v2815 = vsel %vm2812, %v2786, 0.0
          %2816 = vst [vmem:[#allocation4] sm:$0xff] %v2813
          %2817 = vst [vmem:[#allocation4 + $0x8] sm:$0xff] %v2814
          %2818 = vst [vmem:[#allocation4 + $0x10] sm:$0xf] %v2815
        $region133: #{tpu_custom_call.1} parent=59 // pred_fallthru
          _
        %v2819 = vld [vmem:[%s10] sm:$0x1]
        %v2821 = vlaneseq
        %v2822 = vshrl.u32 %v2821, 7
        %v2823 = vsub.s32 0, %v2822
        %v2824 = vrot.slane %v2819, %v2823
        %v2826 = vld [vmem:[#allocation4] sm:$0xff]
        %v2827 = vld [vmem:[#allocation4 + $0x8] sm:$0xff]
        %v2828 = vld [vmem:[#allocation14] sm:$0xff]
        %v2829 = vld [vmem:[#allocation14 + $0x8] sm:$0xff]
        %v2830 = vld [vmem:[#allocation14 + $0x10] sm:$0xff]
        %v2831 = vld [vmem:[#allocation14 + $0x18] sm:$0xff]
        %v2832 = vld [vmem:[#allocation14 + $0x20] sm:$0xff]
        %v2833 = vld [vmem:[#allocation14 + $0x28] sm:$0xff]
        %v2834 = vld [vmem:[#allocation14 + $0x30] sm:$0xff]
        %v2835 = vld [vmem:[#allocation14 + $0x38] sm:$0xff]
        %v2836 = vld [vmem:[#allocation14 + $0x40] sm:$0xff]
        %v2837 = vld [vmem:[#allocation14 + $0x48] sm:$0xff]
        %v2838 = vld [vmem:[#allocation14 + $0x50] sm:$0xff]
        %v2839 = vld [vmem:[#allocation14 + $0x58] sm:$0xff]
        %v2840 = vld [vmem:[#allocation14 + $0x60] sm:$0xff]
        %v2841 = vld [vmem:[#allocation14 + $0x68] sm:$0xff]
        %v2842 = vld [vmem:[#allocation14 + $0x70] sm:$0xff]
        %v2843 = vld [vmem:[#allocation14 + $0x78] sm:$0xff]
        %2844 = vmatprep.subr.mxu0 0.0
        %2845 = vmatpush1.msra.mxu0 %v2843
        %2846 = vmatprep.subr.mxu0 0.0
        %2847 = vmatpush1.msra.mxu0 %v2842
        %2848 = vmatprep.subr.mxu0 0.0
        %2849 = vmatpush1.msra.mxu0 %v2841
        %2850 = vmatprep.subr.mxu0 0.0
        %2851 = vmatpush1.msra.mxu0 %v2840
        %2852 = vmatprep.subr.mxu0 0.0
        %2853 = vmatpush1.msra.mxu0 %v2839
        %2854 = vmatprep.subr.mxu0 0.0
        %2855 = vmatpush1.msra.mxu0 %v2838
        %2856 = vmatprep.subr.mxu0 0.0
        %2857 = vmatpush1.msra.mxu0 %v2837
        %2858 = vmatprep.subr.mxu0 0.0
        %2859 = vmatpush1.msra.mxu0 %v2836
        %2860 = vmatprep.subr.mxu0 0.0
        %2861 = vmatpush1.msra.mxu0 %v2835
        %2862 = vmatprep.subr.mxu0 0.0
        %2863 = vmatpush1.msra.mxu0 %v2834
        %2864 = vmatprep.subr.mxu0 0.0
        %2865 = vmatpush1.msra.mxu0 %v2833
        %2866 = vmatprep.subr.mxu0 0.0
        %2867 = vmatpush1.msra.mxu0 %v2832
        %2868 = vmatprep.subr.mxu0 0.0
        %2869 = vmatpush1.msra.mxu0 %v2831
        %2870 = vmatprep.subr.mxu0 0.0
        %2871 = vmatpush1.msra.mxu0 %v2830
        %2872 = vmatprep.subr.mxu0 0.0
        %2873 = vmatpush1.msra.mxu0 %v2829
        %2874 = vmatprep.subr.mxu0 0.0
        %2875 = vmatpush1.msra.mxu0 %v2828
        %2876 = vmatprep.subr.mxu0 0.0
        %2877 = vmatpush2.msra.mxu0 0.0
        %2878 = vmatprep.subr.mxu0 0.0
        %2879 = vmatpush2.msra.mxu0 0.0
        %2880 = vmatprep.subr.mxu0 0.0
        %2881 = vmatpush2.msra.mxu0 0.0
        %2882 = vmatprep.subr.mxu0 0.0
        %2883 = vmatpush2.msra.mxu0 0.0
        %2884 = vmatprep.subr.mxu0 0.0
        %2885 = vmatpush2.msra.mxu0 0.0
        %2886 = vmatprep.subr.mxu0 0.0
        %2887 = vmatpush2.msra.mxu0 0.0
        %2888 = vmatprep.subr.mxu0 0.0
        %2889 = vmatpush2.msra.mxu0 0.0
        %2890 = vmatprep.subr.mxu0 0.0
        %2891 = vmatpush2.msra.mxu0 0.0
        %2892 = vmatprep.subr.mxu0 0.0
        %2893 = vmatpush2.msra.mxu0 0.0
        %2894 = vmatprep.subr.mxu0 0.0
        %2895 = vmatpush2.msra.mxu0 0.0
        %2896 = vmatprep.subr.mxu0 0.0
        %2897 = vmatpush2.msra.mxu0 0.0
        %2898 = vmatprep.subr.mxu0 0.0
        %2899 = vmatpush2.msra.mxu0 0.0
        %2900 = vmatprep.subr.mxu0 0.0
        %2901 = vmatpush2.msra.mxu0 0.0
        %2902 = vmatprep.subr.mxu0 0.0
        %2903 = vmatpush2.msra.mxu0 0.0
        %2904 = vmatprep.subr.mxu0 0.0
        %2905 = vmatpush2.msra.mxu0 0.0
        %2906 = vmatprep.subr.mxu0 0.0
        %2907 = vmatpush2.msra.mxu0 0.0
        %2908 = vmatprep.mubr.f32.mxu0 0.0
        %2909 = vmatmul.mubr.f32.gmra.mxu0 %v2826
        %v2910 = vpop.f32.mrf.mxu0
        %v2911 = vadd.f32 0.0, %v2910
        %v2912 = vpop.f32.mrf.mxu0
        %2913 = vmatprep.mubr.f32.mxu0 0.0
        %2914 = vmatmul.mubr.f32.gmra.mxu0 %v2827
        %v2915 = vpop.f32.mrf.mxu0
        %v2916 = vadd.f32 0.0, %v2915
        %v2917 = vpop.f32.mrf.mxu0
        %2918 = vdwg.mxu0
        %v2919 = vadd.f32 %v2824, %v2911
        %v2920 = vadd.f32 %v2824, %v2916
        %v2921 = vld [vmem:[#allocation4 + $0x1] sm:$0xff]
        %v2922 = vld [vmem:[#allocation4 + $0x9] sm:$0xff]
        %s2923 = scalar_lea.vmem [#allocation14], 128
        %v2924 = vld [vmem:[%s2923] sm:$0xff]
        %v2925 = vld [vmem:[%s2923 + $0x8] sm:$0xff]
        %v2926 = vld [vmem:[%s2923 + $0x10] sm:$0xff]
        %v2927 = vld [vmem:[%s2923 + $0x18] sm:$0xff]
        %v2928 = vld [vmem:[%s2923 + $0x20] sm:$0xff]
        %v2929 = vld [vmem:[%s2923 + $0x28] sm:$0xff]
        %v2930 = vld [vmem:[%s2923 + $0x30] sm:$0xff]
        %v2931 = vld [vmem:[%s2923 + $0x38] sm:$0xff]
        %v2932 = vld [vmem:[%s2923 + $0x40] sm:$0xff]
        %v2933 = vld [vmem:[%s2923 + $0x48] sm:$0xff]
        %v2934 = vld [vmem:[%s2923 + $0x50] sm:$0xff]
        %v2935 = vld [vmem:[%s2923 + $0x58] sm:$0xff]
        %v2936 = vld [vmem:[%s2923 + $0x60] sm:$0xff]
        %v2937 = vld [vmem:[%s2923 + $0x68] sm:$0xff]
        %v2938 = vld [vmem:[%s2923 + $0x70] sm:$0xff]
        %v2939 = vld [vmem:[%s2923 + $0x78] sm:$0xff]
        %2940 = vmatprep.subr.mxu0 0.0
        %2941 = vmatpush1.msra.mxu0 %v2939
        %2942 = vmatprep.subr.mxu0 0.0
        %2943 = vmatpush1.msra.mxu0 %v2938
        %2944 = vmatprep.subr.mxu0 0.0
        %2945 = vmatpush1.msra.mxu0 %v2937
        %2946 = vmatprep.subr.mxu0 0.0
        %2947 = vmatpush1.msra.mxu0 %v2936
        %2948 = vmatprep.subr.mxu0 0.0
        %2949 = vmatpush1.msra.mxu0 %v2935
        %2950 = vmatprep.subr.mxu0 0.0
        %2951 = vmatpush1.msra.mxu0 %v2934
        %2952 = vmatprep.subr.mxu0 0.0
        %2953 = vmatpush1.msra.mxu0 %v2933
        %2954 = vmatprep.subr.mxu0 0.0
        %2955 = vmatpush1.msra.mxu0 %v2932
        %2956 = vmatprep.subr.mxu0 0.0
        %2957 = vmatpush1.msra.mxu0 %v2931
        %2958 = vmatprep.subr.mxu0 0.0
        %2959 = vmatpush1.msra.mxu0 %v2930
        %2960 = vmatprep.subr.mxu0 0.0
        %2961 = vmatpush1.msra.mxu0 %v2929
        %2962 = vmatprep.subr.mxu0 0.0
        %2963 = vmatpush1.msra.mxu0 %v2928
        %2964 = vmatprep.subr.mxu0 0.0
        %2965 = vmatpush1.msra.mxu0 %v2927
        %2966 = vmatprep.subr.mxu0 0.0
        %2967 = vmatpush1.msra.mxu0 %v2926
        %2968 = vmatprep.subr.mxu0 0.0
        %2969 = vmatpush1.msra.mxu0 %v2925
        %2970 = vmatprep.subr.mxu0 0.0
        %2971 = vmatpush1.msra.mxu0 %v2924
        %2972 = vmatprep.subr.mxu0 0.0
        %2973 = vmatpush2.msra.mxu0 0.0
        %2974 = vmatprep.subr.mxu0 0.0
        %2975 = vmatpush2.msra.mxu0 0.0
        %2976 = vmatprep.subr.mxu0 0.0
        %2977 = vmatpush2.msra.mxu0 0.0
        %2978 = vmatprep.subr.mxu0 0.0
        %2979 = vmatpush2.msra.mxu0 0.0
        %2980 = vmatprep.subr.mxu0 0.0
        %2981 = vmatpush2.msra.mxu0 0.0
        %2982 = vmatprep.subr.mxu0 0.0
        %2983 = vmatpush2.msra.mxu0 0.0
        %2984 = vmatprep.subr.mxu0 0.0
        %2985 = vmatpush2.msra.mxu0 0.0
        %2986 = vmatprep.subr.mxu0 0.0
        %2987 = vmatpush2.msra.mxu0 0.0
        %2988 = vmatprep.subr.mxu0 0.0
        %2989 = vmatpush2.msra.mxu0 0.0
        %2990 = vmatprep.subr.mxu0 0.0
        %2991 = vmatpush2.msra.mxu0 0.0
        %2992 = vmatprep.subr.mxu0 0.0
        %2993 = vmatpush2.msra.mxu0 0.0
        %2994 = vmatprep.subr.mxu0 0.0
        %2995 = vmatpush2.msra.mxu0 0.0
        %2996 = vmatprep.subr.mxu0 0.0
        %2997 = vmatpush2.msra.mxu0 0.0
        %2998 = vmatprep.subr.mxu0 0.0
        %2999 = vmatpush2.msra.mxu0 0.0
        %3000 = vmatprep.subr.mxu0 0.0
        %3001 = vmatpush2.msra.mxu0 0.0
        %3002 = vmatprep.subr.mxu0 0.0
        %3003 = vmatpush2.msra.mxu0 0.0
        %3004 = vmatprep.mubr.f32.mxu0 0.0
        %3005 = vmatmul.mubr.f32.gmra.mxu0 %v2921
        %v3006 = vpop.f32.mrf.mxu0
        %v3007 = vadd.f32 0.0, %v3006
        %v3008 = vpop.f32.mrf.mxu0
        %3009 = vmatprep.mubr.f32.mxu0 0.0
        %3010 = vmatmul.mubr.f32.gmra.mxu0 %v2922
        %v3011 = vpop.f32.mrf.mxu0
        %v3012 = vadd.f32 0.0, %v3011
        %v3013 = vpop.f32.mrf.mxu0
        %3014 = vdwg.mxu0
        %v3015 = vadd.f32 %v2919, %v3007
        %v3016 = vadd.f32 %v2920, %v3012
        %v3017 = vld [vmem:[#allocation4 + $0x2] sm:$0xff]
        %v3018 = vld [vmem:[#allocation4 + $0xa] sm:$0xff]
        %s3019 = scalar_lea.vmem [#allocation14], 256
        %v3020 = vld [vmem:[%s3019] sm:$0xff]
        %v3021 = vld [vmem:[%s3019 + $0x8] sm:$0xff]
        %v3022 = vld [vmem:[%s3019 + $0x10] sm:$0xff]
        %v3023 = vld [vmem:[%s3019 + $0x18] sm:$0xff]
        %v3024 = vld [vmem:[%s3019 + $0x20] sm:$0xff]
        %v3025 = vld [vmem:[%s3019 + $0x28] sm:$0xff]
        %v3026 = vld [vmem:[%s3019 + $0x30] sm:$0xff]
        %v3027 = vld [vmem:[%s3019 + $0x38] sm:$0xff]
        %v3028 = vld [vmem:[%s3019 + $0x40] sm:$0xff]
        %v3029 = vld [vmem:[%s3019 + $0x48] sm:$0xff]
        %v3030 = vld [vmem:[%s3019 + $0x50] sm:$0xff]
        %v3031 = vld [vmem:[%s3019 + $0x58] sm:$0xff]
        %v3032 = vld [vmem:[%s3019 + $0x60] sm:$0xff]
        %v3033 = vld [vmem:[%s3019 + $0x68] sm:$0xff]
        %v3034 = vld [vmem:[%s3019 + $0x70] sm:$0xff]
        %v3035 = vld [vmem:[%s3019 + $0x78] sm:$0xff]
        %3036 = vmatprep.subr.mxu0 0.0
        %3037 = vmatpush1.msra.mxu0 %v3035
        %3038 = vmatprep.subr.mxu0 0.0
        %3039 = vmatpush1.msra.mxu0 %v3034
        %3040 = vmatprep.subr.mxu0 0.0
        %3041 = vmatpush1.msra.mxu0 %v3033
        %3042 = vmatprep.subr.mxu0 0.0
        %3043 = vmatpush1.msra.mxu0 %v3032
        %3044 = vmatprep.subr.mxu0 0.0
        %3045 = vmatpush1.msra.mxu0 %v3031
        %3046 = vmatprep.subr.mxu0 0.0
        %3047 = vmatpush1.msra.mxu0 %v3030
        %3048 = vmatprep.subr.mxu0 0.0
        %3049 = vmatpush1.msra.mxu0 %v3029
        %3050 = vmatprep.subr.mxu0 0.0
        %3051 = vmatpush1.msra.mxu0 %v3028
        %3052 = vmatprep.subr.mxu0 0.0
        %3053 = vmatpush1.msra.mxu0 %v3027
        %3054 = vmatprep.subr.mxu0 0.0
        %3055 = vmatpush1.msra.mxu0 %v3026
        %3056 = vmatprep.subr.mxu0 0.0
        %3057 = vmatpush1.msra.mxu0 %v3025
        %3058 = vmatprep.subr.mxu0 0.0
        %3059 = vmatpush1.msra.mxu0 %v3024
        %3060 = vmatprep.subr.mxu0 0.0
        %3061 = vmatpush1.msra.mxu0 %v3023
        %3062 = vmatprep.subr.mxu0 0.0
        %3063 = vmatpush1.msra.mxu0 %v3022
        %3064 = vmatprep.subr.mxu0 0.0
        %3065 = vmatpush1.msra.mxu0 %v3021
        %3066 = vmatprep.subr.mxu0 0.0
        %3067 = vmatpush1.msra.mxu0 %v3020
        %3068 = vmatprep.subr.mxu0 0.0
        %3069 = vmatpush2.msra.mxu0 0.0
        %3070 = vmatprep.subr.mxu0 0.0
        %3071 = vmatpush2.msra.mxu0 0.0
        %3072 = vmatprep.subr.mxu0 0.0
        %3073 = vmatpush2.msra.mxu0 0.0
        %3074 = vmatprep.subr.mxu0 0.0
        %3075 = vmatpush2.msra.mxu0 0.0
        %3076 = vmatprep.subr.mxu0 0.0
        %3077 = vmatpush2.msra.mxu0 0.0
        %3078 = vmatprep.subr.mxu0 0.0
        %3079 = vmatpush2.msra.mxu0 0.0
        %3080 = vmatprep.subr.mxu0 0.0
        %3081 = vmatpush2.msra.mxu0 0.0
        %3082 = vmatprep.subr.mxu0 0.0
        %3083 = vmatpush2.msra.mxu0 0.0
        %3084 = vmatprep.subr.mxu0 0.0
        %3085 = vmatpush2.msra.mxu0 0.0
        %3086 = vmatprep.subr.mxu0 0.0
        %3087 = vmatpush2.msra.mxu0 0.0
        %3088 = vmatprep.subr.mxu0 0.0
        %3089 = vmatpush2.msra.mxu0 0.0
        %3090 = vmatprep.subr.mxu0 0.0
        %3091 = vmatpush2.msra.mxu0 0.0
        %3092 = vmatprep.subr.mxu0 0.0
        %3093 = vmatpush2.msra.mxu0 0.0
        %3094 = vmatprep.subr.mxu0 0.0
        %3095 = vmatpush2.msra.mxu0 0.0
        %3096 = vmatprep.subr.mxu0 0.0
        %3097 = vmatpush2.msra.mxu0 0.0
        %3098 = vmatprep.subr.mxu0 0.0
        %3099 = vmatpush2.msra.mxu0 0.0
        %3100 = vmatprep.mubr.f32.mxu0 0.0
        %3101 = vmatmul.mubr.f32.gmra.mxu0 %v3017
        %v3102 = vpop.f32.mrf.mxu0
        %v3103 = vadd.f32 0.0, %v3102
        %v3104 = vpop.f32.mrf.mxu0
        %3105 = vmatprep.mubr.f32.mxu0 0.0
        %3106 = vmatmul.mubr.f32.gmra.mxu0 %v3018
        %v3107 = vpop.f32.mrf.mxu0
        %v3108 = vadd.f32 0.0, %v3107
        %v3109 = vpop.f32.mrf.mxu0
        %3110 = vdwg.mxu0
        %v3111 = vadd.f32 %v3015, %v3103
        %v3112 = vadd.f32 %v3016, %v3108
        %v3113 = vld [vmem:[#allocation4 + $0x3] sm:$0xff]
        %v3114 = vld [vmem:[#allocation4 + $0xb] sm:$0xff]
        %s3115 = scalar_lea.vmem [#allocation14], 384
        %v3116 = vld [vmem:[%s3115] sm:$0xff]
        %v3117 = vld [vmem:[%s3115 + $0x8] sm:$0xff]
        %v3118 = vld [vmem:[%s3115 + $0x10] sm:$0xff]
        %v3119 = vld [vmem:[%s3115 + $0x18] sm:$0xff]
        %v3120 = vld [vmem:[%s3115 + $0x20] sm:$0xff]
        %v3121 = vld [vmem:[%s3115 + $0x28] sm:$0xff]
        %v3122 = vld [vmem:[%s3115 + $0x30] sm:$0xff]
        %v3123 = vld [vmem:[%s3115 + $0x38] sm:$0xff]
        %v3124 = vld [vmem:[%s3115 + $0x40] sm:$0xff]
        %v3125 = vld [vmem:[%s3115 + $0x48] sm:$0xff]
        %v3126 = vld [vmem:[%s3115 + $0x50] sm:$0xff]
        %v3127 = vld [vmem:[%s3115 + $0x58] sm:$0xff]
        %v3128 = vld [vmem:[%s3115 + $0x60] sm:$0xff]
        %v3129 = vld [vmem:[%s3115 + $0x68] sm:$0xff]
        %v3130 = vld [vmem:[%s3115 + $0x70] sm:$0xff]
        %v3131 = vld [vmem:[%s3115 + $0x78] sm:$0xff]
        %3132 = vmatprep.subr.mxu0 0.0
        %3133 = vmatpush1.msra.mxu0 %v3131
        %3134 = vmatprep.subr.mxu0 0.0
        %3135 = vmatpush1.msra.mxu0 %v3130
        %3136 = vmatprep.subr.mxu0 0.0
        %3137 = vmatpush1.msra.mxu0 %v3129
        %3138 = vmatprep.subr.mxu0 0.0
        %3139 = vmatpush1.msra.mxu0 %v3128
        %3140 = vmatprep.subr.mxu0 0.0
        %3141 = vmatpush1.msra.mxu0 %v3127
        %3142 = vmatprep.subr.mxu0 0.0
        %3143 = vmatpush1.msra.mxu0 %v3126
        %3144 = vmatprep.subr.mxu0 0.0
        %3145 = vmatpush1.msra.mxu0 %v3125
        %3146 = vmatprep.subr.mxu0 0.0
        %3147 = vmatpush1.msra.mxu0 %v3124
        %3148 = vmatprep.subr.mxu0 0.0
        %3149 = vmatpush1.msra.mxu0 %v3123
        %3150 = vmatprep.subr.mxu0 0.0
        %3151 = vmatpush1.msra.mxu0 %v3122
        %3152 = vmatprep.subr.mxu0 0.0
        %3153 = vmatpush1.msra.mxu0 %v3121
        %3154 = vmatprep.subr.mxu0 0.0
        %3155 = vmatpush1.msra.mxu0 %v3120
        %3156 = vmatprep.subr.mxu0 0.0
        %3157 = vmatpush1.msra.mxu0 %v3119
        %3158 = vmatprep.subr.mxu0 0.0
        %3159 = vmatpush1.msra.mxu0 %v3118
        %3160 = vmatprep.subr.mxu0 0.0
        %3161 = vmatpush1.msra.mxu0 %v3117
        %3162 = vmatprep.subr.mxu0 0.0
        %3163 = vmatpush1.msra.mxu0 %v3116
        %3164 = vmatprep.subr.mxu0 0.0
        %3165 = vmatpush2.msra.mxu0 0.0
        %3166 = vmatprep.subr.mxu0 0.0
        %3167 = vmatpush2.msra.mxu0 0.0
        %3168 = vmatprep.subr.mxu0 0.0
        %3169 = vmatpush2.msra.mxu0 0.0
        %3170 = vmatprep.subr.mxu0 0.0
        %3171 = vmatpush2.msra.mxu0 0.0
        %3172 = vmatprep.subr.mxu0 0.0
        %3173 = vmatpush2.msra.mxu0 0.0
        %3174 = vmatprep.subr.mxu0 0.0
        %3175 = vmatpush2.msra.mxu0 0.0
        %3176 = vmatprep.subr.mxu0 0.0
        %3177 = vmatpush2.msra.mxu0 0.0
        %3178 = vmatprep.subr.mxu0 0.0
        %3179 = vmatpush2.msra.mxu0 0.0
        %3180 = vmatprep.subr.mxu0 0.0
        %3181 = vmatpush2.msra.mxu0 0.0
        %3182 = vmatprep.subr.mxu0 0.0
        %3183 = vmatpush2.msra.mxu0 0.0
        %3184 = vmatprep.subr.mxu0 0.0
        %3185 = vmatpush2.msra.mxu0 0.0
        %3186 = vmatprep.subr.mxu0 0.0
        %3187 = vmatpush2.msra.mxu0 0.0
        %3188 = vmatprep.subr.mxu0 0.0
        %3189 = vmatpush2.msra.mxu0 0.0
        %3190 = vmatprep.subr.mxu0 0.0
        %3191 = vmatpush2.msra.mxu0 0.0
        %3192 = vmatprep.subr.mxu0 0.0
        %3193 = vmatpush2.msra.mxu0 0.0
        %3194 = vmatprep.subr.mxu0 0.0
        %3195 = vmatpush2.msra.mxu0 0.0
        %3196 = vmatprep.mubr.f32.mxu0 0.0
        %3197 = vmatmul.mubr.f32.gmra.mxu0 %v3113
        %v3198 = vpop.f32.mrf.mxu0
        %v3199 = vadd.f32 0.0, %v3198
        %v3200 = vpop.f32.mrf.mxu0
        %3201 = vmatprep.mubr.f32.mxu0 0.0
        %3202 = vmatmul.mubr.f32.gmra.mxu0 %v3114
        %v3203 = vpop.f32.mrf.mxu0
        %v3204 = vadd.f32 0.0, %v3203
        %v3205 = vpop.f32.mrf.mxu0
        %3206 = vdwg.mxu0
        %v3207 = vadd.f32 %v3111, %v3199
        %v3208 = vadd.f32 %v3112, %v3204
        %v3209 = vld [vmem:[#allocation4 + $0x4] sm:$0xff]
        %v3210 = vld [vmem:[#allocation4 + $0xc] sm:$0xff]
        %s3211 = scalar_lea.vmem [#allocation14], 512
        %v3212 = vld [vmem:[%s3211] sm:$0xff]
        %v3213 = vld [vmem:[%s3211 + $0x8] sm:$0xff]
        %v3214 = vld [vmem:[%s3211 + $0x10] sm:$0xff]
        %v3215 = vld [vmem:[%s3211 + $0x18] sm:$0xff]
        %v3216 = vld [vmem:[%s3211 + $0x20] sm:$0xff]
        %v3217 = vld [vmem:[%s3211 + $0x28] sm:$0xff]
        %v3218 = vld [vmem:[%s3211 + $0x30] sm:$0xff]
        %v3219 = vld [vmem:[%s3211 + $0x38] sm:$0xff]
        %v3220 = vld [vmem:[%s3211 + $0x40] sm:$0xff]
        %v3221 = vld [vmem:[%s3211 + $0x48] sm:$0xff]
        %v3222 = vld [vmem:[%s3211 + $0x50] sm:$0xff]
        %v3223 = vld [vmem:[%s3211 + $0x58] sm:$0xff]
        %v3224 = vld [vmem:[%s3211 + $0x60] sm:$0xff]
        %v3225 = vld [vmem:[%s3211 + $0x68] sm:$0xff]
        %v3226 = vld [vmem:[%s3211 + $0x70] sm:$0xff]
        %v3227 = vld [vmem:[%s3211 + $0x78] sm:$0xff]
        %3228 = vmatprep.subr.mxu0 0.0
        %3229 = vmatpush1.msra.mxu0 %v3227
        %3230 = vmatprep.subr.mxu0 0.0
        %3231 = vmatpush1.msra.mxu0 %v3226
        %3232 = vmatprep.subr.mxu0 0.0
        %3233 = vmatpush1.msra.mxu0 %v3225
        %3234 = vmatprep.subr.mxu0 0.0
        %3235 = vmatpush1.msra.mxu0 %v3224
        %3236 = vmatprep.subr.mxu0 0.0
        %3237 = vmatpush1.msra.mxu0 %v3223
        %3238 = vmatprep.subr.mxu0 0.0
        %3239 = vmatpush1.msra.mxu0 %v3222
        %3240 = vmatprep.subr.mxu0 0.0
        %3241 = vmatpush1.msra.mxu0 %v3221
        %3242 = vmatprep.subr.mxu0 0.0
        %3243 = vmatpush1.msra.mxu0 %v3220
        %3244 = vmatprep.subr.mxu0 0.0
        %3245 = vmatpush1.msra.mxu0 %v3219
        %3246 = vmatprep.subr.mxu0 0.0
        %3247 = vmatpush1.msra.mxu0 %v3218
        %3248 = vmatprep.subr.mxu0 0.0
        %3249 = vmatpush1.msra.mxu0 %v3217
        %3250 = vmatprep.subr.mxu0 0.0
        %3251 = vmatpush1.msra.mxu0 %v3216
        %3252 = vmatprep.subr.mxu0 0.0
        %3253 = vmatpush1.msra.mxu0 %v3215
        %3254 = vmatprep.subr.mxu0 0.0
        %3255 = vmatpush1.msra.mxu0 %v3214
        %3256 = vmatprep.subr.mxu0 0.0
        %3257 = vmatpush1.msra.mxu0 %v3213
        %3258 = vmatprep.subr.mxu0 0.0
        %3259 = vmatpush1.msra.mxu0 %v3212
        %3260 = vmatprep.subr.mxu0 0.0
        %3261 = vmatpush2.msra.mxu0 0.0
        %3262 = vmatprep.subr.mxu0 0.0
        %3263 = vmatpush2.msra.mxu0 0.0
        %3264 = vmatprep.subr.mxu0 0.0
        %3265 = vmatpush2.msra.mxu0 0.0
        %3266 = vmatprep.subr.mxu0 0.0
        %3267 = vmatpush2.msra.mxu0 0.0
        %3268 = vmatprep.subr.mxu0 0.0
        %3269 = vmatpush2.msra.mxu0 0.0
        %3270 = vmatprep.subr.mxu0 0.0
        %3271 = vmatpush2.msra.mxu0 0.0
        %3272 = vmatprep.subr.mxu0 0.0
        %3273 = vmatpush2.msra.mxu0 0.0
        %3274 = vmatprep.subr.mxu0 0.0
        %3275 = vmatpush2.msra.mxu0 0.0
        %3276 = vmatprep.subr.mxu0 0.0
        %3277 = vmatpush2.msra.mxu0 0.0
        %3278 = vmatprep.subr.mxu0 0.0
        %3279 = vmatpush2.msra.mxu0 0.0
        %3280 = vmatprep.subr.mxu0 0.0
        %3281 = vmatpush2.msra.mxu0 0.0
        %3282 = vmatprep.subr.mxu0 0.0
        %3283 = vmatpush2.msra.mxu0 0.0
        %3284 = vmatprep.subr.mxu0 0.0
        %3285 = vmatpush2.msra.mxu0 0.0
        %3286 = vmatprep.subr.mxu0 0.0
        %3287 = vmatpush2.msra.mxu0 0.0
        %3288 = vmatprep.subr.mxu0 0.0
        %3289 = vmatpush2.msra.mxu0 0.0
        %3290 = vmatprep.subr.mxu0 0.0
        %3291 = vmatpush2.msra.mxu0 0.0
        %3292 = vmatprep.mubr.f32.mxu0 0.0
        %3293 = vmatmul.mubr.f32.gmra.mxu0 %v3209
        %v3294 = vpop.f32.mrf.mxu0
        %v3295 = vadd.f32 0.0, %v3294
        %v3296 = vpop.f32.mrf.mxu0
        %3297 = vmatprep.mubr.f32.mxu0 0.0
        %3298 = vmatmul.mubr.f32.gmra.mxu0 %v3210
        %v3299 = vpop.f32.mrf.mxu0
        %v3300 = vadd.f32 0.0, %v3299
        %v3301 = vpop.f32.mrf.mxu0
        %3302 = vdwg.mxu0
        %v3303 = vadd.f32 %v3207, %v3295
        %v3304 = vadd.f32 %v3208, %v3300
        %3305 = vst [vmem:[%s425] sm:$0xff] %v3303
        %3306 = vst [vmem:[%s425 + $0x8] sm:$0xff] %v3304
        %s3307 = sand.u32 %s260, 1
        %s3308 = scalar_lea.sflag [#allocation8], %s3307
        %s3309 = sand.u32 %s260, 1
        %s3310 = smul.addr %s3309, 16
        %s3311 = scalar_lea.vmem [#allocation15], %s3310
        // Predicated region
        $region134: #{tpu_custom_call.1} parent=59 // pred_check
          %p3312 = pneg %p270
        $region135: #{tpu_custom_call.1} parent=59 // pred_check_branch
          %3314 = sbr.rel (%p3312) target = $region137
        $region136: #{tpu_custom_call.1} parent=59 // pred_region
          %s3315 = smul.u32 2, %s33
          %s3317 = ssub.s32 256, 256
          %3318 = vsyncadd %s3308, %s3317
          %s3319 = smul.addr %s32, 2
          %s3320 = sadd.s32 %s3315, %s3319
          %s3321 = smul.addr %s3320, 128
          %s3322 = scalar_lea.hbm %s11, %s3321
          %s3323 = sshll.u32 %s3311, 4
          %s3324 = int_to_ptr.vmem [resolvable:$true] %s3323
          %3329 = dma.vmem_to_hbm [thread:$0]  %s3324, 256, %s3322, %s3308, 128, 128, 8
        $region137: #{tpu_custom_call.1} parent=59 // pred_fallthru
          _
      $region60: #{tpu_custom_call.1} parent=5 // pred_fallthru
        _
      %p3330 = scmp.le.s32.totalorder 2, %s23
      // Predicated region
      $region138: #{tpu_custom_call.1} parent=5 // pred_check
        %p3331 = pneg %p3330
      $region139: #{tpu_custom_call.1} parent=5 // pred_check_branch
        %3333 = sbr.rel (%p3331) target = $region141
      $region140: #{tpu_custom_call.1} parent=5 // pred_region
        %s3334 = ssub.s32 %s23, 2
        // Predicated region
        $region142: #{tpu_custom_call.1} parent=140 // pred_check
          %p3335 = pneg %p276
        $region143: #{tpu_custom_call.1} parent=140 // pred_check_branch
          %3337 = sbr.rel (%p3335) target = $region145
        $region144: #{tpu_custom_call.1} parent=140 // pred_region
          %s3338 = sand.u32 %s261, 1
          %s3339 = scalar_lea.sflag [#allocation8], %s3338
          %s3340 = sand.u32 %s261, 1
          %s3341 = smul.addr %s3340, 16
          %s3342 = scalar_lea.vmem [#allocation15], %s3341
          %3343 = dma.done %s3339, 256
        $region145: #{tpu_custom_call.1} parent=140 // pred_fallthru
          _
      $region141: #{tpu_custom_call.1} parent=5 // pred_fallthru
        _
    $region6: #{tpu_custom_call.1} parent=1 // loop_footer
      %s27 = sadd.s32 1, %s23
    $region7: #{tpu_custom_call.1} parent=1 // loop_footer_branch
      %22 = sbr.rel target = $region3
    $region8: #{tpu_custom_call.1} parent=1 // loop_exit
      _
    %3344 = vsyncpa [#allocation7], 1
    %s3345 = scalar_lea.sflag [#allocation7], 1
    %3346 = vsyncpa %s3345, 1
    %3347 = vsyncpa [#allocation10], 1
    %3348 = vsyncpa [#allocation13], 1
    %3349 = vsyncpa [#allocation8], 1
    %s3350 = scalar_lea.sflag [#allocation8], 1
    %3351 = vsyncpa %s3350, 1
  %3352 = vsyncmov [#allocation5]
  %s3353 = vpop.sfrf %3352
  %p3354 = scmp.eq.s32.totalorder %s3353, 0
  %p3355 = pneg %p3354
  %3357 = shalt.err (%p3355)

</llo_original>
